<compile_context>
chip_gen: v6e
topology: v6e:2x2x1
jax: 0.10.0
libtpu: 0.0.40
codegen_flags: <defaults>
</compile_context>

<pallas_src>
import numpy as np
import jax
import jax.numpy as jnp
from jax.experimental import pallas as pl
from jax.experimental.pallas import tpu as pltpu

# -------- small dims consistent with the module's CONFIG --------
B = 2      # batch
D = 32     # CONFIG.dim.D
M1 = 32    # CONFIG.dim.M_1 (encoder LSTM hidden)
M2 = 32    # CONFIG.dim.M_2 (decoder LSTM hidden / context)
E = 32     # CONFIG.dim.E
V = 32     # vocabulary size
A = 3      # CONFIG.dim.max_actions
L = 8      # CONFIG.dim.max_caption_len
B_PAD = 8  # batch padded to one f32 sublane tile
BOS_IDX = 1
EOS_IDX = 2


# ------------------------------------------------------------------
# Kernel (single invocation, everything VMEM-resident, fully unrolled)
# ------------------------------------------------------------------
def captioning_kernel(
    # data (batch padded to bp, rows ordered (action, step, batch))
    feat_ref,      # (A*bp, D)            f32
    capemb_ref,    # (A*L*bp, E)          f32
    lenmask_ref,   # (A*L*bp, M2)         f32, 1 where step == clamp(len-1,0)
    # composed encoder weights (stored (in, out); biases pre-tiled to bp rows)
    w_init_ref, b_init_ref,      # (D, M2+2*M1), (bp, M2+2*M1)   -> [s | h | c]
    wgf_ref, wgs_ref, wgh_ref, bg_ref,   # (D,4M1), (M2,4M1), (M1,4M1), (bp,4M1)
    # composed decoder weights
    wpost_ref, bpost_ref,        # (M1, 10*M2), (bp, 10*M2)  -> [o_contrib | pre0 | hn0 | cn0]
    widt_ref,                    # (E, 4*M2)   teacher-forcing input weights
    whhd_ref,                    # (M2, 4*M2)  decoder recurrence
    wout_ref, bout_ref,          # (M2, V), (1, V)
    # output
    out_ref,                     # (A*L*bp, V)
    # scratch
    pre_scr,                     # (A*L*bp, 4*M2)  teacher-forcing gate inputs
    hid_scr,                     # (A*L*bp, M2)    per-step decoder hiddens
):
    f32 = jnp.float32
    bp = bg_ref.shape[0]
    m1 = wgh_ref.shape[0]
    m2 = whhd_ref.shape[0]
    n_act = feat_ref.shape[0] // bp
    n_steps = hid_scr.shape[0] // (n_act * bp)

    # ---- loop-invariant weight loads (hoisted; single vld each) ----
    feat = feat_ref[...]
    w_init = w_init_ref[...]
    b_init = b_init_ref[...]
    wgs = wgs_ref[...]
    wgh = wgh_ref[...]
    bg = bg_ref[...]
    wpost = wpost_ref[...]
    bpost = bpost_ref[...]
    whhd = whhd_ref[...]

    # Gate-fusion scale: sigmoid(x) = 0.5*(1 + tanh(x/2)) on i/f/o lanes, plain
    # tanh on g lanes -> a SINGLE tanh pass covers all 4 gates.
    def gate_scale(hsz):
        lane = jax.lax.broadcasted_iota(jnp.int32, (bp, 4 * hsz), 1)
        return jnp.where((lane >= 2 * hsz) & (lane < 3 * hsz),
                         jnp.float32(1.0), jnp.float32(0.5))

    scale_e = gate_scale(m1)
    scale_d = scale_e if m2 == m1 else gate_scale(m2)

    def fused_lstm(gates, c_prev, hsz, scale):
        t = jnp.tanh(gates * scale)                 # 1st (and only) gate EUP pass
        i_ = 0.5 + 0.5 * t[:, :hsz]
        f_ = 0.5 + 0.5 * t[:, hsz:2 * hsz]
        g_ = t[:, 2 * hsz:3 * hsz]
        o_ = 0.5 + 0.5 * t[:, 3 * hsz:]
        c_new = f_ * c_prev + i_ * g_
        h_new = o_ * jnp.tanh(c_new)                # 2nd EUP pass
        return h_new, c_new

    # ---- off-chain bulk matmuls (all actions / all steps at once) ----
    # teacher-forcing input contribution: capemb @ w_ih_t
    pre_scr[...] = jnp.dot(capemb_ref[...], widt_ref[...], preferred_element_type=f32)
    # feature contribution to the encoder gates
    fcon = jnp.dot(feat, wgf_ref[...], preferred_element_type=f32)      # (A*bp, 4*m1)

    s = h = c = None
    for a in range(n_act):                          # A static -> fully unrolled
        if a == 0:
            # initialize encoder/decoder-context state from the first feature
            init = jnp.dot(feat[:bp], w_init, preferred_element_type=f32) + b_init
            s = init[:, :m2]
            h = init[:, m2:m2 + m1]
            c = init[:, m2 + m1:]

        # ---------------- EventEncoderCell (linear1 composed away) ----------------
        g_enc = (fcon[a * bp:(a + 1) * bp]
                 + jnp.dot(s, wgs, preferred_element_type=f32)
                 + jnp.dot(h, wgh, preferred_element_type=f32)
                 + bg)
        h, c = fused_lstm(g_enc, c, m1, scale_e)

        # ---------------- CaptionDecoderCell prologue -----------------------------
        # `o = linear2(h)` is never materialized: one wide matmul yields
        #   [ o@wido+bd | o@widt | init_h(o) | init_c(o) ]
        post = jnp.dot(h, wpost, preferred_element_type=f32) + bpost    # (bp, 10*m2)
        o_contrib = post[:, :4 * m2]
        pre0 = post[:, 4 * m2:8 * m2]
        hn = post[:, 8 * m2:9 * m2]
        cn = post[:, 9 * m2:]

        s_acc = jnp.zeros((bp, m2), f32)
        for stp in range(n_steps):                  # L static -> fully unrolled
            row = (a * n_steps + stp) * bp          # sublane-aligned (bp == 8)
            if stp == 0:
                pre_full = pre0 + o_contrib         # step-0 input is o itself
            else:
                pre_full = pre_scr[row - bp:row, :] + o_contrib
            gd = pre_full + jnp.dot(hn, whhd, preferred_element_type=f32)
            hn, cn = fused_lstm(gd, cn, m2, scale_d)
            hid_scr[row:row + bp, :] = hn           # off the serial chain
            # accumulate the "hidden at clamp(caption_len-1,0)" gather in-loop
            s_acc = s_acc + lenmask_ref[row:row + bp, :] * hn
        s = s_acc                                   # context for the next action

    # ---- deferred output projection: one matmul + one bulk store --------------
    out_ref[...] = (jnp.dot(hid_scr[...], wout_ref[...], preferred_element_type=f32)
                    + bout_ref[...])


# ------------------------------------------------------------------
# Glue / wrapper
# ------------------------------------------------------------------
def captioning_forward(params, feature, action_len, caption, caption_len):
    """feature (B,A,D) f32, action_len (B,) i32 (unused, as in PyTorch forward),
    caption (B,A,L) i32, caption_len (B,A) i32  ->  logits (B, V, A, L) f32."""
    del action_len  # unused by the PyTorch forward as well
    f32 = jnp.float32
    hi = jax.lax.Precision.HIGHEST
    Bsz, Aact, Dd = feature.shape
    Ll = caption.shape[-1]
    Ee = params["emb"].shape[1]
    Vv = params["dec_wout"].shape[1]
    Mm1 = params["enc_whh"].shape[0]
    Mm2 = params["dec_whh"].shape[0]
    Bp = max(B_PAD, Bsz)

    # ---- data: pad batch to Bp, flatten rows ordered (action, step, batch) ----
    feat_t = jnp.transpose(feature, (1, 0, 2)).astype(f32)                 # (A, B, D)
    feat_p = jnp.pad(feat_t, ((0, 0), (0, Bp - Bsz), (0, 0)))              # (A, Bp, D)
    feat_flat = feat_p.reshape(Aact * Bp, Dd)

    cap_emb = params["emb"][caption].astype(f32)                           # (B, A, L, E)
    cap_t = jnp.transpose(cap_emb, (1, 2, 0, 3))                           # (A, L, B, E)
    cap_p = jnp.pad(cap_t, ((0, 0), (0, 0), (0, Bp - Bsz), (0, 0)))        # (A, L, Bp, E)
    capemb_flat = cap_p.reshape(Aact * Ll * Bp, Ee)

    # length mask: 1 at (a, l, b) iff l == clamp(caption_len[b,a]-1, 0); 0 on padded rows
    lnm1 = jnp.maximum(caption_len.astype(jnp.int32) - 1, 0)               # (B, A)
    onehot = jax.nn.one_hot(jnp.transpose(lnm1, (1, 0)), Ll, dtype=f32)    # (A, B, L)
    onehot = jnp.transpose(onehot, (0, 2, 1))                              # (A, L, B)
    onehot = jnp.pad(onehot, ((0, 0), (0, 0), (0, Bp - Bsz)))              # (A, L, Bp)
    lenmask = jnp.broadcast_to(onehot.reshape(Aact * Ll * Bp, 1),
                               (Aact * Ll * Bp, Mm2)).astype(f32)

    # ---- composed weights (concatenated along the OUTPUT dim) ----
    w_init = jnp.concatenate([params["enc_ws"], params["enc_wh"], params["enc_wc"]], axis=1)
    b_init = jnp.tile(jnp.concatenate([params["enc_bs"], params["enc_bh"],
                                       params["enc_bc"]], axis=1), (Bp, 1))

    wih_e = params["enc_wih"]
    wgf = jnp.dot(params["enc_w1f"], wih_e, precision=hi)                  # (D, 4*M1)
    wgs = jnp.dot(params["enc_w1s"], wih_e, precision=hi)                  # (M2, 4*M1)
    wgh = params["enc_whh"]                                                # (M1, 4*M1)
    bg = jnp.tile(jnp.dot(params["enc_b1"], wih_e, precision=hi) + params["enc_b"], (Bp, 1))

    # decoder prologue: [ wido | widt | wh0 | wc0 ] pre-multiplied by w2 (o never built)
    w_cat = jnp.concatenate([params["dec_wih_o"], params["dec_wih_t"],
                             params["dec_wh0"], params["dec_wc0"]], axis=1)   # (E, 10*M2)
    b_cat = jnp.concatenate([params["dec_b"], jnp.zeros((1, 4 * Mm2), f32),
                             params["dec_bh0"], params["dec_bc0"]], axis=1)   # (1, 10*M2)
    wpost = jnp.dot(params["enc_w2"], w_cat, precision=hi)                    # (M1, 10*M2)
    bpost = jnp.tile(jnp.dot(params["enc_b2"], w_cat, precision=hi) + b_cat, (Bp, 1))

    out = pl.pallas_call(
        captioning_kernel,
        out_shape=jax.ShapeDtypeStruct((Aact * Ll * Bp, Vv), f32),
        scratch_shapes=[
            pltpu.VMEM((Aact * Ll * Bp, 4 * Mm2), f32),   # pre_scr
            pltpu.VMEM((Aact * Ll * Bp, Mm2), f32),       # hid_scr
        ],
    )(feat_flat, capemb_flat, lenmask,
      w_init, b_init, wgf, wgs, wgh, bg,
      wpost, bpost,
      params["dec_wih_t"], params["dec_whh"],
      params["dec_wout"], params["dec_bout"])

    # (A*L*Bp, V) -> (A, L, Bp, V) -> drop batch padding -> (B, V, A, L)
    out = out.reshape(Aact, Ll, Bp, Vv)[:, :, :Bsz, :]
    return jnp.transpose(out, (2, 3, 0, 1))


# ------------------------------------------------------------------
# Deterministic parameter init (weights stored as (in, out); PyTorch stores (out, in))
# ------------------------------------------------------------------
def init_params(key):
    keys = iter(jax.random.split(key, 32))

    def w(shape):
        return jax.random.normal(next(keys), shape, jnp.float32) / jnp.sqrt(shape[0])

    def b(shape):
        return 0.1 * jax.random.normal(next(keys), shape, jnp.float32)

    return {
        "emb": 0.1 * jax.random.normal(next(keys), (V, E), jnp.float32),
        # EventEncoderCell
        "enc_ws": w((D, M2)), "enc_bs": b((1, M2)),
        "enc_wh": w((D, M1)), "enc_bh": b((1, M1)),
        "enc_wc": w((D, M1)), "enc_bc": b((1, M1)),
        "enc_w1f": w((D, M1)), "enc_w1s": w((M2, M1)), "enc_b1": b((1, M1)),
        "enc_wih": w((M1, 4 * M1)), "enc_whh": w((M1, 4 * M1)), "enc_b": b((1, 4 * M1)),
        "enc_w2": w((M1, E)), "enc_b2": b((1, E)),
        # CaptionDecoderCell
        "dec_wh0": w((E, M2)), "dec_bh0": b((1, M2)),
        "dec_wc0": w((E, M2)), "dec_bc0": b((1, M2)),
        "dec_wih_t": w((E, 4 * M2)), "dec_wih_o": w((E, 4 * M2)),
        "dec_whh": w((M2, 4 * M2)), "dec_b": b((1, 4 * M2)),
        "dec_wout": w((M2, V)), "dec_bout": b((1, V)),
    }


# ------------------------------------------------------------------
# Pure-JAX reference (mirrors the PyTorch forward with ss_prob=0, dropout=0)
# ------------------------------------------------------------------
def reference_forward(params, feature, action_len, caption, caption_len):
    del action_len
    Bsz, Aact, _ = feature.shape
    Ll = caption.shape[-1]

    def lstm(x_contrib, h, c, whh, bias):
        g = x_contrib + h @ whh + bias
        H = h.shape[1]
        i_ = jax.nn.sigmoid(g[:, :H])
        f_ = jax.nn.sigmoid(g[:, H:2 * H])
        g_ = jnp.tanh(g[:, 2 * H:3 * H])
        o_ = jax.nn.sigmoid(g[:, 3 * H:])
        c = f_ * c + i_ * g_
        h = o_ * jnp.tanh(c)
        return h, c

    s = h = c = None
    per_action = []
    for a in range(Aact):
        f = feature[:, a, :]
        if s is None:
            s = f @ params["enc_ws"] + params["enc_bs"]
            h = f @ params["enc_wh"] + params["enc_bh"]
            c = f @ params["enc_wc"] + params["enc_bc"]
        trans_ft = f @ params["enc_w1f"] + s @ params["enc_w1s"] + params["enc_b1"]
        h, c = lstm(trans_ft @ params["enc_wih"], h, c, params["enc_whh"], params["enc_b"])
        o = h @ params["enc_w2"] + params["enc_b2"]

        hn = o @ params["dec_wh0"] + params["dec_bh0"]
        cn = o @ params["dec_wc0"] + params["dec_bc0"]
        cap_emb = params["emb"][caption[:, a, :]]          # (B, L, E)
        tn = o
        step_logits, step_hidden = [], []
        for step in range(Ll):
            hn, cn = lstm(tn @ params["dec_wih_t"] + o @ params["dec_wih_o"],
                          hn, cn, params["dec_whh"], params["dec_b"])
            step_hidden.append(hn)
            step_logits.append(hn @ params["dec_wout"] + params["dec_bout"])
            tn = cap_emb[:, step, :]                        # teacher forcing
        hid = jnp.stack(step_hidden, axis=0)                # (L, B, M2)
        length = jnp.maximum(caption_len[:, a] - 1, 0)      # (B,)
        s = hid[length, jnp.arange(Bsz), :]                 # (B, M2)
        lg = jnp.stack(step_logits, axis=0)                 # (L, B, V)
        per_action.append(jnp.transpose(lg, (1, 2, 0)))     # (B, V, L)
    return jnp.stack(per_action, axis=2)                    # (B, V, A, L)


# ------------------------------------------------------------------
if __name__ == "__main__":
    key = jax.random.PRNGKey(0)
    pkey, fkey, ckey, lkey = jax.random.split(key, 4)
    params = init_params(pkey)

    feature = jax.random.normal(fkey, (B, A, D), jnp.float32)
    action_len = jnp.full((B,), A, dtype=jnp.int32)
    caption = jax.random.randint(ckey, (B, A, L), 0, V, dtype=jnp.int32)
    caption_len = jax.random.randint(lkey, (B, A), 1, L + 1, dtype=jnp.int32)

    logits = captioning_forward(params, feature, action_len, caption, caption_len)
    logits = jax.block_until_ready(logits)
    assert logits.shape == (B, V, A, L), logits.shape

    with jax.default_matmul_precision("highest"):
        ref = reference_forward(params, feature, action_len, caption, caption_len)
    ref = jax.block_until_ready(ref)

    err = float(np.max(np.abs(np.asarray(logits) - np.asarray(ref))))
    assert np.allclose(np.asarray(logits), np.asarray(ref), rtol=2e-2, atol=2e-2), err

    print("KERNEL_OK")
</pallas_src>

<mosaic_0001>
module attributes {stable_mosaic.version = 11 : i64} {
  func.func @captioning_kernel(%arg0: memref<24x32xf32, #tpu.memory_space<vmem>>, %arg1: memref<192x32xf32, #tpu.memory_space<vmem>>, %arg2: memref<192x32xf32, #tpu.memory_space<vmem>>, %arg3: memref<32x96xf32, #tpu.memory_space<vmem>>, %arg4: memref<8x96xf32, #tpu.memory_space<vmem>>, %arg5: memref<32x128xf32, #tpu.memory_space<vmem>>, %arg6: memref<32x128xf32, #tpu.memory_space<vmem>>, %arg7: memref<32x128xf32, #tpu.memory_space<vmem>>, %arg8: memref<8x128xf32, #tpu.memory_space<vmem>>, %arg9: memref<32x320xf32, #tpu.memory_space<vmem>>, %arg10: memref<8x320xf32, #tpu.memory_space<vmem>>, %arg11: memref<32x128xf32, #tpu.memory_space<vmem>>, %arg12: memref<32x128xf32, #tpu.memory_space<vmem>>, %arg13: memref<32x32xf32, #tpu.memory_space<vmem>>, %arg14: memref<1x32xf32, #tpu.memory_space<vmem>>, %arg15: memref<192x32xf32, #tpu.memory_space<vmem>>, %arg16: memref<192x128xf32, #tpu.memory_space<vmem>>, %arg17: memref<192x32xf32, #tpu.memory_space<vmem>>) attributes {dimension_semantics = [], scalar_prefetch = 0 : i64, scratch_operands = 2 : i64, tpu.core_type = #tpu.core_type<tc>} {
    %c0 = arith.constant 0 : index
    %c0_0 = arith.constant 0 : index
    %0 = vector.load %arg0[%c0, %c0_0] : memref<24x32xf32, #tpu.memory_space<vmem>>, vector<24x32xf32>
    %c0_1 = arith.constant 0 : index
    %c0_2 = arith.constant 0 : index
    %1 = vector.load %arg3[%c0_1, %c0_2] : memref<32x96xf32, #tpu.memory_space<vmem>>, vector<32x96xf32>
    %c0_3 = arith.constant 0 : index
    %c0_4 = arith.constant 0 : index
    %2 = vector.load %arg4[%c0_3, %c0_4] : memref<8x96xf32, #tpu.memory_space<vmem>>, vector<8x96xf32>
    %c0_5 = arith.constant 0 : index
    %c0_6 = arith.constant 0 : index
    %3 = vector.load %arg6[%c0_5, %c0_6] : memref<32x128xf32, #tpu.memory_space<vmem>>, vector<32x128xf32>
    %c0_7 = arith.constant 0 : index
    %c0_8 = arith.constant 0 : index
    %4 = vector.load %arg7[%c0_7, %c0_8] : memref<32x128xf32, #tpu.memory_space<vmem>>, vector<32x128xf32>
    %c0_9 = arith.constant 0 : index
    %c0_10 = arith.constant 0 : index
    %5 = vector.load %arg8[%c0_9, %c0_10] : memref<8x128xf32, #tpu.memory_space<vmem>>, vector<8x128xf32>
    %c0_11 = arith.constant 0 : index
    %c0_12 = arith.constant 0 : index
    %6 = vector.load %arg9[%c0_11, %c0_12] : memref<32x320xf32, #tpu.memory_space<vmem>>, vector<32x320xf32>
    %c0_13 = arith.constant 0 : index
    %c0_14 = arith.constant 0 : index
    %7 = vector.load %arg10[%c0_13, %c0_14] : memref<8x320xf32, #tpu.memory_space<vmem>>, vector<8x320xf32>
    %c0_15 = arith.constant 0 : index
    %c0_16 = arith.constant 0 : index
    %8 = vector.load %arg12[%c0_15, %c0_16] : memref<32x128xf32, #tpu.memory_space<vmem>>, vector<32x128xf32>
    %9 = tpu.iota {dimensions = array<i32: 1>} : vector<8x128xi32>
    %c64_i32 = arith.constant 64 : i32
    %10 = vector.broadcast %c64_i32 : i32 to vector<8x128xi32>
    %11 = arith.cmpi sge, %9, %10 : vector<8x128xi32>
    %c96_i32 = arith.constant 96 : i32
    %12 = vector.broadcast %c96_i32 : i32 to vector<8x128xi32>
    %13 = arith.cmpi slt, %9, %12 : vector<8x128xi32>
    %14 = arith.andi %11, %13 : vector<8x128xi1>
    %cst = arith.constant 1.000000e+00 : f32
    %cst_17 = arith.constant 5.000000e-01 : f32
    %15 = vector.broadcast %cst : f32 to vector<8x128xf32>
    %16 = vector.broadcast %cst_17 : f32 to vector<8x128xf32>
    %17 = arith.select %14, %15, %16 : vector<8x128xi1>, vector<8x128xf32>
    %c0_18 = arith.constant 0 : index
    %c0_19 = arith.constant 0 : index
    %18 = vector.load %arg1[%c0_18, %c0_19] : memref<192x32xf32, #tpu.memory_space<vmem>>, vector<192x32xf32>
    %c0_20 = arith.constant 0 : index
    %c0_21 = arith.constant 0 : index
    %19 = vector.load %arg11[%c0_20, %c0_21] : memref<32x128xf32, #tpu.memory_space<vmem>>, vector<32x128xf32>
    %cst_22 = arith.constant dense<0.000000e+00> : vector<192x128xf32>
    %20 = tpu.matmul %18, %19, %cst_22 {dimension_numbers = #tpu.dot_dimension_numbers<[1], [0], [0], [1], [0, 0, 1, 1], [], []>} : vector<192x32xf32>, vector<32x128xf32>, vector<192x128xf32> -> vector<192x128xf32>
    %c0_23 = arith.constant 0 : index
    %c0_24 = arith.constant 0 : index
    %21 = vector.load %arg16[%c0_23, %c0_24] : memref<192x128xf32, #tpu.memory_space<vmem>>, vector<192x128xf32>
    tpu.vector_store %arg16[%c0_23, %c0_24], %20 {strides = array<i32>} : memref<192x128xf32, #tpu.memory_space<vmem>>, vector<192x128xf32>,
    %c0_25 = arith.constant 0 : index
    %c0_26 = arith.constant 0 : index
    %22 = vector.load %arg5[%c0_25, %c0_26] : memref<32x128xf32, #tpu.memory_space<vmem>>, vector<32x128xf32>
    %cst_27 = arith.constant dense<0.000000e+00> : vector<24x128xf32>
    %23 = tpu.matmul %0, %22, %cst_27 {dimension_numbers = #tpu.dot_dimension_numbers<[1], [0], [0], [1], [0, 0, 1, 1], [], []>} : vector<24x32xf32>, vector<32x128xf32>, vector<24x128xf32> -> vector<24x128xf32>
    %24 = vector.extract_strided_slice %0 {offsets = [0, 0], sizes = [8, 32], strides = [1, 1]} : vector<24x32xf32> to vector<8x32xf32>
    %cst_28 = arith.constant dense<0.000000e+00> : vector<8x96xf32>
    %25 = tpu.matmul %24, %1, %cst_28 {dimension_numbers = #tpu.dot_dimension_numbers<[1], [0], [0], [1], [0, 0, 1, 1], [], []>} : vector<8x32xf32>, vector<32x96xf32>, vector<8x96xf32> -> vector<8x96xf32>
    %26 = arith.addf %25, %2 : vector<8x96xf32>
    %27 = vector.extract_strided_slice %26 {offsets = [0, 0], sizes = [8, 32], strides = [1, 1]} : vector<8x96xf32> to vector<8x32xf32>
    %28 = vector.extract_strided_slice %26 {offsets = [0, 32], sizes = [8, 32], strides = [1, 1]} : vector<8x96xf32> to vector<8x32xf32>
    %29 = vector.extract_strided_slice %26 {offsets = [0, 64], sizes = [8, 32], strides = [1, 1]} : vector<8x96xf32> to vector<8x32xf32>
    %30 = vector.extract_strided_slice %23 {offsets = [0, 0], sizes = [8, 128], strides = [1, 1]} : vector<24x128xf32> to vector<8x128xf32>
    %cst_29 = arith.constant dense<0.000000e+00> : vector<8x128xf32>
    %31 = tpu.matmul %27, %3, %cst_29 {dimension_numbers = #tpu.dot_dimension_numbers<[1], [0], [0], [1], [0, 0, 1, 1], [], []>} : vector<8x32xf32>, vector<32x128xf32>, vector<8x128xf32> -> vector<8x128xf32>
    %32 = arith.addf %30, %31 : vector<8x128xf32>
    %cst_30 = arith.constant dense<0.000000e+00> : vector<8x128xf32>
    %33 = tpu.matmul %28, %4, %cst_30 {dimension_numbers = #tpu.dot_dimension_numbers<[1], [0], [0], [1], [0, 0, 1, 1], [], []>} : vector<8x32xf32>, vector<32x128xf32>, vector<8x128xf32> -> vector<8x128xf32>
    %34 = arith.addf %32, %33 : vector<8x128xf32>
    %35 = arith.addf %34, %5 : vector<8x128xf32>
    %36 = arith.mulf %35, %17 : vector<8x128xf32>
    %37 = math.tanh %36 : vector<8x128xf32>
    %38 = vector.extract_strided_slice %37 {offsets = [0, 0], sizes = [8, 32], strides = [1, 1]} : vector<8x128xf32> to vector<8x32xf32>
    %cst_31 = arith.constant 5.000000e-01 : f32
    %39 = vector.broadcast %cst_31 : f32 to vector<8x32xf32>
    %40 = arith.mulf %39, %38 : vector<8x32xf32>
    %cst_32 = arith.constant 5.000000e-01 : f32
    %41 = vector.broadcast %cst_32 : f32 to vector<8x32xf32>
    %42 = arith.addf %41, %40 : vector<8x32xf32>
    %43 = vector.extract_strided_slice %37 {offsets = [0, 32], sizes = [8, 32], strides = [1, 1]} : vector<8x128xf32> to vector<8x32xf32>
    %cst_33 = arith.constant 5.000000e-01 : f32
    %44 = vector.broadcast %cst_33 : f32 to vector<8x32xf32>
    %45 = arith.mulf %44, %43 : vector<8x32xf32>
    %cst_34 = arith.constant 5.000000e-01 : f32
    %46 = vector.broadcast %cst_34 : f32 to vector<8x32xf32>
    %47 = arith.addf %46, %45 : vector<8x32xf32>
    %48 = vector.extract_strided_slice %37 {offsets = [0, 64], sizes = [8, 32], strides = [1, 1]} : vector<8x128xf32> to vector<8x32xf32>
    %49 = vector.extract_strided_slice %37 {offsets = [0, 96], sizes = [8, 32], strides = [1, 1]} : vector<8x128xf32> to vector<8x32xf32>
    %cst_35 = arith.constant 5.000000e-01 : f32
    %50 = vector.broadcast %cst_35 : f32 to vector<8x32xf32>
    %51 = arith.mulf %50, %49 : vector<8x32xf32>
    %cst_36 = arith.constant 5.000000e-01 : f32
    %52 = vector.broadcast %cst_36 : f32 to vector<8x32xf32>
    %53 = arith.addf %52, %51 : vector<8x32xf32>
    %54 = arith.mulf %47, %29 : vector<8x32xf32>
    %55 = arith.mulf %42, %48 : vector<8x32xf32>
    %56 = arith.addf %54, %55 : vector<8x32xf32>
    %57 = math.tanh %56 : vector<8x32xf32>
    %58 = arith.mulf %53, %57 : vector<8x32xf32>
    %cst_37 = arith.constant dense<0.000000e+00> : vector<8x320xf32>
    %59 = tpu.matmul %58, %6, %cst_37 {dimension_numbers = #tpu.dot_dimension_numbers<[1], [0], [0], [1], [0, 0, 1, 1], [], []>} : vector<8x32xf32>, vector<32x320xf32>, vector<8x320xf32> -> vector<8x320xf32>
    %60 = arith.addf %59, %7 : vector<8x320xf32>
    %61 = vector.extract_strided_slice %60 {offsets = [0, 0], sizes = [8, 128], strides = [1, 1]} : vector<8x320xf32> to vector<8x128xf32>
    %62 = vector.extract_strided_slice %60 {offsets = [0, 128], sizes = [8, 128], strides = [1, 1]} : vector<8x320xf32> to vector<8x128xf32>
    %63 = vector.extract_strided_slice %60 {offsets = [0, 256], sizes = [8, 32], strides = [1, 1]} : vector<8x320xf32> to vector<8x32xf32>
    %64 = vector.extract_strided_slice %60 {offsets = [0, 288], sizes = [8, 32], strides = [1, 1]} : vector<8x320xf32> to vector<8x32xf32>
    %cst_38 = arith.constant 0.000000e+00 : f32
    %65 = vector.broadcast %cst_38 : f32 to vector<8x32xf32>
    %66 = arith.addf %62, %61 : vector<8x128xf32>
    %cst_39 = arith.constant dense<0.000000e+00> : vector<8x128xf32>
    %67 = tpu.matmul %63, %8, %cst_39 {dimension_numbers = #tpu.dot_dimension_numbers<[1], [0], [0], [1], [0, 0, 1, 1], [], []>} : vector<8x32xf32>, vector<32x128xf32>, vector<8x128xf32> -> vector<8x128xf32>
    %68 = arith.addf %66, %67 : vector<8x128xf32>
    %69 = arith.mulf %68, %17 : vector<8x128xf32>
    %70 = math.tanh %69 : vector<8x128xf32>
    %71 = vector.extract_strided_slice %70 {offsets = [0, 0], sizes = [8, 32], strides = [1, 1]} : vector<8x128xf32> to vector<8x32xf32>
    %cst_40 = arith.constant 5.000000e-01 : f32
    %72 = vector.broadcast %cst_40 : f32 to vector<8x32xf32>
    %73 = arith.mulf %72, %71 : vector<8x32xf32>
    %cst_41 = arith.constant 5.000000e-01 : f32
    %74 = vector.broadcast %cst_41 : f32 to vector<8x32xf32>
    %75 = arith.addf %74, %73 : vector<8x32xf32>
    %76 = vector.extract_strided_slice %70 {offsets = [0, 32], sizes = [8, 32], strides = [1, 1]} : vector<8x128xf32> to vector<8x32xf32>
    %cst_42 = arith.constant 5.000000e-01 : f32
    %77 = vector.broadcast %cst_42 : f32 to vector<8x32xf32>
    %78 = arith.mulf %77, %76 : vector<8x32xf32>
    %cst_43 = arith.constant 5.000000e-01 : f32
    %79 = vector.broadcast %cst_43 : f32 to vector<8x32xf32>
    %80 = arith.addf %79, %78 : vector<8x32xf32>
    %81 = vector.extract_strided_slice %70 {offsets = [0, 64], sizes = [8, 32], strides = [1, 1]} : vector<8x128xf32> to vector<8x32xf32>
    %82 = vector.extract_strided_slice %70 {offsets = [0, 96], sizes = [8, 32], strides = [1, 1]} : vector<8x128xf32> to vector<8x32xf32>
    %cst_44 = arith.constant 5.000000e-01 : f32
    %83 = vector.broadcast %cst_44 : f32 to vector<8x32xf32>
    %84 = arith.mulf %83, %82 : vector<8x32xf32>
    %cst_45 = arith.constant 5.000000e-01 : f32
    %85 = vector.broadcast %cst_45 : f32 to vector<8x32xf32>
    %86 = arith.addf %85, %84 : vector<8x32xf32>
    %87 = arith.mulf %80, %64 : vector<8x32xf32>
    %88 = arith.mulf %75, %81 : vector<8x32xf32>
    %89 = arith.addf %87, %88 : vector<8x32xf32>
    %90 = math.tanh %89 : vector<8x32xf32>
    %91 = arith.mulf %86, %90 : vector<8x32xf32>
    %c0_46 = arith.constant 0 : index
    %c0_47 = arith.constant 0 : index
    %92 = vector.load %arg17[%c0_46, %c0_47] : memref<192x32xf32, #tpu.memory_space<vmem>>, vector<8x32xf32>
    tpu.vector_store %arg17[%c0_46, %c0_47], %91 {strides = array<i32>} : memref<192x32xf32, #tpu.memory_space<vmem>>, vector<8x32xf32>,
    %c0_48 = arith.constant 0 : index
    %c0_49 = arith.constant 0 : index
    %93 = vector.load %arg2[%c0_48, %c0_49] : memref<192x32xf32, #tpu.memory_space<vmem>>, vector<8x32xf32>
    %94 = arith.mulf %93, %91 : vector<8x32xf32>
    %95 = arith.addf %65, %94 : vector<8x32xf32>
    %c0_50 = arith.constant 0 : index
    %c0_51 = arith.constant 0 : index
    %96 = vector.load %arg16[%c0_50, %c0_51] : memref<192x128xf32, #tpu.memory_space<vmem>>, vector<8x128xf32>
    %97 = arith.addf %96, %61 : vector<8x128xf32>
    %cst_52 = arith.constant dense<0.000000e+00> : vector<8x128xf32>
    %98 = tpu.matmul %91, %8, %cst_52 {dimension_numbers = #tpu.dot_dimension_numbers<[1], [0], [0], [1], [0, 0, 1, 1], [], []>} : vector<8x32xf32>, vector<32x128xf32>, vector<8x128xf32> -> vector<8x128xf32>
    %99 = arith.addf %97, %98 : vector<8x128xf32>
    %100 = arith.mulf %99, %17 : vector<8x128xf32>
    %101 = math.tanh %100 : vector<8x128xf32>
    %102 = vector.extract_strided_slice %101 {offsets = [0, 0], sizes = [8, 32], strides = [1, 1]} : vector<8x128xf32> to vector<8x32xf32>
    %cst_53 = arith.constant 5.000000e-01 : f32
    %103 = vector.broadcast %cst_53 : f32 to vector<8x32xf32>
    %104 = arith.mulf %103, %102 : vector<8x32xf32>
    %cst_54 = arith.constant 5.000000e-01 : f32
    %105 = vector.broadcast %cst_54 : f32 to vector<8x32xf32>
    %106 = arith.addf %105, %104 : vector<8x32xf32>
    %107 = vector.extract_strided_slice %101 {offsets = [0, 32], sizes = [8, 32], strides = [1, 1]} : vector<8x128xf32> to vector<8x32xf32>
    %cst_55 = arith.constant 5.000000e-01 : f32
    %108 = vector.broadcast %cst_55 : f32 to vector<8x32xf32>
    %109 = arith.mulf %108, %107 : vector<8x32xf32>
    %cst_56 = arith.constant 5.000000e-01 : f32
    %110 = vector.broadcast %cst_56 : f32 to vector<8x32xf32>
    %111 = arith.addf %110, %109 : vector<8x32xf32>
    %112 = vector.extract_strided_slice %101 {offsets = [0, 64], sizes = [8, 32], strides = [1, 1]} : vector<8x128xf32> to vector<8x32xf32>
    %113 = vector.extract_strided_slice %101 {offsets = [0, 96], sizes = [8, 32], strides = [1, 1]} : vector<8x128xf32> to vector<8x32xf32>
    %cst_57 = arith.constant 5.000000e-01 : f32
    %114 = vector.broadcast %cst_57 : f32 to vector<8x32xf32>
    %115 = arith.mulf %114, %113 : vector<8x32xf32>
    %cst_58 = arith.constant 5.000000e-01 : f32
    %116 = vector.broadcast %cst_58 : f32 to vector<8x32xf32>
    %117 = arith.addf %116, %115 : vector<8x32xf32>
    %118 = arith.mulf %111, %89 : vector<8x32xf32>
    %119 = arith.mulf %106, %112 : vector<8x32xf32>
    %120 = arith.addf %118, %119 : vector<8x32xf32>
    %121 = math.tanh %120 : vector<8x32xf32>
    %122 = arith.mulf %117, %121 : vector<8x32xf32>
    %c8 = arith.constant 8 : index
    %c0_59 = arith.constant 0 : index
    %123 = vector.load %arg17[%c8, %c0_59] : memref<192x32xf32, #tpu.memory_space<vmem>>, vector<8x32xf32>
    tpu.vector_store %arg17[%c8, %c0_59], %122 {strides = array<i32>} : memref<192x32xf32, #tpu.memory_space<vmem>>, vector<8x32xf32>,
    %c8_60 = arith.constant 8 : index
    %c0_61 = arith.constant 0 : index
    %124 = vector.load %arg2[%c8_60, %c0_61] : memref<192x32xf32, #tpu.memory_space<vmem>>, vector<8x32xf32>
    %125 = arith.mulf %124, %122 : vector<8x32xf32>
    %126 = arith.addf %95, %125 : vector<8x32xf32>
    %c8_62 = arith.constant 8 : index
    %c0_63 = arith.constant 0 : index
    %127 = vector.load %arg16[%c8_62, %c0_63] : memref<192x128xf32, #tpu.memory_space<vmem>>, vector<8x128xf32>
    %128 = arith.addf %127, %61 : vector<8x128xf32>
    %cst_64 = arith.constant dense<0.000000e+00> : vector<8x128xf32>
    %129 = tpu.matmul %122, %8, %cst_64 {dimension_numbers = #tpu.dot_dimension_numbers<[1], [0], [0], [1], [0, 0, 1, 1], [], []>} : vector<8x32xf32>, vector<32x128xf32>, vector<8x128xf32> -> vector<8x128xf32>
    %130 = arith.addf %128, %129 : vector<8x128xf32>
    %131 = arith.mulf %130, %17 : vector<8x128xf32>
    %132 = math.tanh %131 : vector<8x128xf32>
    %133 = vector.extract_strided_slice %132 {offsets = [0, 0], sizes = [8, 32], strides = [1, 1]} : vector<8x128xf32> to vector<8x32xf32>
    %cst_65 = arith.constant 5.000000e-01 : f32
    %134 = vector.broadcast %cst_65 : f32 to vector<8x32xf32>
    %135 = arith.mulf %134, %133 : vector<8x32xf32>
    %cst_66 = arith.constant 5.000000e-01 : f32
    %136 = vector.broadcast %cst_66 : f32 to vector<8x32xf32>
    %137 = arith.addf %136, %135 : vector<8x32xf32>
    %138 = vector.extract_strided_slice %132 {offsets = [0, 32], sizes = [8, 32], strides = [1, 1]} : vector<8x128xf32> to vector<8x32xf32>
    %cst_67 = arith.constant 5.000000e-01 : f32
    %139 = vector.broadcast %cst_67 : f32 to vector<8x32xf32>
    %140 = arith.mulf %139, %138 : vector<8x32xf32>
    %cst_68 = arith.constant 5.000000e-01 : f32
    %141 = vector.broadcast %cst_68 : f32 to vector<8x32xf32>
    %142 = arith.addf %141, %140 : vector<8x32xf32>
    %143 = vector.extract_strided_slice %132 {offsets = [0, 64], sizes = [8, 32], strides = [1, 1]} : vector<8x128xf32> to vector<8x32xf32>
    %144 = vector.extract_strided_slice %132 {offsets = [0, 96], sizes = [8, 32], strides = [1, 1]} : vector<8x128xf32> to vector<8x32xf32>
    %cst_69 = arith.constant 5.000000e-01 : f32
    %145 = vector.broadcast %cst_69 : f32 to vector<8x32xf32>
    %146 = arith.mulf %145, %144 : vector<8x32xf32>
    %cst_70 = arith.constant 5.000000e-01 : f32
    %147 = vector.broadcast %cst_70 : f32 to vector<8x32xf32>
    %148 = arith.addf %147, %146 : vector<8x32xf32>
    %149 = arith.mulf %142, %120 : vector<8x32xf32>
    %150 = arith.mulf %137, %143 : vector<8x32xf32>
    %151 = arith.addf %149, %150 : vector<8x32xf32>
    %152 = math.tanh %151 : vector<8x32xf32>
    %153 = arith.mulf %148, %152 : vector<8x32xf32>
    %c16 = arith.constant 16 : index
    %c0_71 = arith.constant 0 : index
    %154 = vector.load %arg17[%c16, %c0_71] : memref<192x32xf32, #tpu.memory_space<vmem>>, vector<8x32xf32>
    tpu.vector_store %arg17[%c16, %c0_71], %153 {strides = array<i32>} : memref<192x32xf32, #tpu.memory_space<vmem>>, vector<8x32xf32>,
    %c16_72 = arith.constant 16 : index
    %c0_73 = arith.constant 0 : index
    %155 = vector.load %arg2[%c16_72, %c0_73] : memref<192x32xf32, #tpu.memory_space<vmem>>, vector<8x32xf32>
    %156 = arith.mulf %155, %153 : vector<8x32xf32>
    %157 = arith.addf %126, %156 : vector<8x32xf32>
    %c16_74 = arith.constant 16 : index
    %c0_75 = arith.constant 0 : index
    %158 = vector.load %arg16[%c16_74, %c0_75] : memref<192x128xf32, #tpu.memory_space<vmem>>, vector<8x128xf32>
    %159 = arith.addf %158, %61 : vector<8x128xf32>
    %cst_76 = arith.constant dense<0.000000e+00> : vector<8x128xf32>
    %160 = tpu.matmul %153, %8, %cst_76 {dimension_numbers = #tpu.dot_dimension_numbers<[1], [0], [0], [1], [0, 0, 1, 1], [], []>} : vector<8x32xf32>, vector<32x128xf32>, vector<8x128xf32> -> vector<8x128xf32>
    %161 = arith.addf %159, %160 : vector<8x128xf32>
    %162 = arith.mulf %161, %17 : vector<8x128xf32>
    %163 = math.tanh %162 : vector<8x128xf32>
    %164 = vector.extract_strided_slice %163 {offsets = [0, 0], sizes = [8, 32], strides = [1, 1]} : vector<8x128xf32> to vector<8x32xf32>
    %cst_77 = arith.constant 5.000000e-01 : f32
    %165 = vector.broadcast %cst_77 : f32 to vector<8x32xf32>
    %166 = arith.mulf %165, %164 : vector<8x32xf32>
    %cst_78 = arith.constant 5.000000e-01 : f32
    %167 = vector.broadcast %cst_78 : f32 to vector<8x32xf32>
    %168 = arith.addf %167, %166 : vector<8x32xf32>
    %169 = vector.extract_strided_slice %163 {offsets = [0, 32], sizes = [8, 32], strides = [1, 1]} : vector<8x128xf32> to vector<8x32xf32>
    %cst_79 = arith.constant 5.000000e-01 : f32
    %170 = vector.broadcast %cst_79 : f32 to vector<8x32xf32>
    %171 = arith.mulf %170, %169 : vector<8x32xf32>
    %cst_80 = arith.constant 5.000000e-01 : f32
    %172 = vector.broadcast %cst_80 : f32 to vector<8x32xf32>
    %173 = arith.addf %172, %171 : vector<8x32xf32>
    %174 = vector.extract_strided_slice %163 {offsets = [0, 64], sizes = [8, 32], strides = [1, 1]} : vector<8x128xf32> to vector<8x32xf32>
    %175 = vector.extract_strided_slice %163 {offsets = [0, 96], sizes = [8, 32], strides = [1, 1]} : vector<8x128xf32> to vector<8x32xf32>
    %cst_81 = arith.constant 5.000000e-01 : f32
    %176 = vector.broadcast %cst_81 : f32 to vector<8x32xf32>
    %177 = arith.mulf %176, %175 : vector<8x32xf32>
    %cst_82 = arith.constant 5.000000e-01 : f32
    %178 = vector.broadcast %cst_82 : f32 to vector<8x32xf32>
    %179 = arith.addf %178, %177 : vector<8x32xf32>
    %180 = arith.mulf %173, %151 : vector<8x32xf32>
    %181 = arith.mulf %168, %174 : vector<8x32xf32>
    %182 = arith.addf %180, %181 : vector<8x32xf32>
    %183 = math.tanh %182 : vector<8x32xf32>
    %184 = arith.mulf %179, %183 : vector<8x32xf32>
    %c24 = arith.constant 24 : index
    %c0_83 = arith.constant 0 : index
    %185 = vector.load %arg17[%c24, %c0_83] : memref<192x32xf32, #tpu.memory_space<vmem>>, vector<8x32xf32>
    tpu.vector_store %arg17[%c24, %c0_83], %184 {strides = array<i32>} : memref<192x32xf32, #tpu.memory_space<vmem>>, vector<8x32xf32>,
    %c24_84 = arith.constant 24 : index
    %c0_85 = arith.constant 0 : index
    %186 = vector.load %arg2[%c24_84, %c0_85] : memref<192x32xf32, #tpu.memory_space<vmem>>, vector<8x32xf32>
    %187 = arith.mulf %186, %184 : vector<8x32xf32>
    %188 = arith.addf %157, %187 : vector<8x32xf32>
    %c24_86 = arith.constant 24 : index
    %c0_87 = arith.constant 0 : index
    %189 = vector.load %arg16[%c24_86, %c0_87] : memref<192x128xf32, #tpu.memory_space<vmem>>, vector<8x128xf32>
    %190 = arith.addf %189, %61 : vector<8x128xf32>
    %cst_88 = arith.constant dense<0.000000e+00> : vector<8x128xf32>
    %191 = tpu.matmul %184, %8, %cst_88 {dimension_numbers = #tpu.dot_dimension_numbers<[1], [0], [0], [1], [0, 0, 1, 1], [], []>} : vector<8x32xf32>, vector<32x128xf32>, vector<8x128xf32> -> vector<8x128xf32>
    %192 = arith.addf %190, %191 : vector<8x128xf32>
    %193 = arith.mulf %192, %17 : vector<8x128xf32>
    %194 = math.tanh %193 : vector<8x128xf32>
    %195 = vector.extract_strided_slice %194 {offsets = [0, 0], sizes = [8, 32], strides = [1, 1]} : vector<8x128xf32> to vector<8x32xf32>
    %cst_89 = arith.constant 5.000000e-01 : f32
    %196 = vector.broadcast %cst_89 : f32 to vector<8x32xf32>
    %197 = arith.mulf %196, %195 : vector<8x32xf32>
    %cst_90 = arith.constant 5.000000e-01 : f32
    %198 = vector.broadcast %cst_90 : f32 to vector<8x32xf32>
    %199 = arith.addf %198, %197 : vector<8x32xf32>
    %200 = vector.extract_strided_slice %194 {offsets = [0, 32], sizes = [8, 32], strides = [1, 1]} : vector<8x128xf32> to vector<8x32xf32>
    %cst_91 = arith.constant 5.000000e-01 : f32
    %201 = vector.broadcast %cst_91 : f32 to vector<8x32xf32>
    %202 = arith.mulf %201, %200 : vector<8x32xf32>
    %cst_92 = arith.constant 5.000000e-01 : f32
    %203 = vector.broadcast %cst_92 : f32 to vector<8x32xf32>
    %204 = arith.addf %203, %202 : vector<8x32xf32>
    %205 = vector.extract_strided_slice %194 {offsets = [0, 64], sizes = [8, 32], strides = [1, 1]} : vector<8x128xf32> to vector<8x32xf32>
    %206 = vector.extract_strided_slice %194 {offsets = [0, 96], sizes = [8, 32], strides = [1, 1]} : vector<8x128xf32> to vector<8x32xf32>
    %cst_93 = arith.constant 5.000000e-01 : f32
    %207 = vector.broadcast %cst_93 : f32 to vector<8x32xf32>
    %208 = arith.mulf %207, %206 : vector<8x32xf32>
    %cst_94 = arith.constant 5.000000e-01 : f32
    %209 = vector.broadcast %cst_94 : f32 to vector<8x32xf32>
    %210 = arith.addf %209, %208 : vector<8x32xf32>
    %211 = arith.mulf %204, %182 : vector<8x32xf32>
    %212 = arith.mulf %199, %205 : vector<8x32xf32>
    %213 = arith.addf %211, %212 : vector<8x32xf32>
    %214 = math.tanh %213 : vector<8x32xf32>
    %215 = arith.mulf %210, %214 : vector<8x32xf32>
    %c32 = arith.constant 32 : index
    %c0_95 = arith.constant 0 : index
    %216 = vector.load %arg17[%c32, %c0_95] : memref<192x32xf32, #tpu.memory_space<vmem>>, vector<8x32xf32>
    tpu.vector_store %arg17[%c32, %c0_95], %215 {strides = array<i32>} : memref<192x32xf32, #tpu.memory_space<vmem>>, vector<8x32xf32>,
    %c32_96 = arith.constant 32 : index
    %c0_97 = arith.constant 0 : index
    %217 = vector.load %arg2[%c32_96, %c0_97] : memref<192x32xf32, #tpu.memory_space<vmem>>, vector<8x32xf32>
    %218 = arith.mulf %217, %215 : vector<8x32xf32>
    %219 = arith.addf %188, %218 : vector<8x32xf32>
    %c32_98 = arith.constant 32 : index
    %c0_99 = arith.constant 0 : index
    %220 = vector.load %arg16[%c32_98, %c0_99] : memref<192x128xf32, #tpu.memory_space<vmem>>, vector<8x128xf32>
    %221 = arith.addf %220, %61 : vector<8x128xf32>
    %cst_100 = arith.constant dense<0.000000e+00> : vector<8x128xf32>
    %222 = tpu.matmul %215, %8, %cst_100 {dimension_numbers = #tpu.dot_dimension_numbers<[1], [0], [0], [1], [0, 0, 1, 1], [], []>} : vector<8x32xf32>, vector<32x128xf32>, vector<8x128xf32> -> vector<8x128xf32>
    %223 = arith.addf %221, %222 : vector<8x128xf32>
    %224 = arith.mulf %223, %17 : vector<8x128xf32>
    %225 = math.tanh %224 : vector<8x128xf32>
    %226 = vector.extract_strided_slice %225 {offsets = [0, 0], sizes = [8, 32], strides = [1, 1]} : vector<8x128xf32> to vector<8x32xf32>
    %cst_101 = arith.constant 5.000000e-01 : f32
    %227 = vector.broadcast %cst_101 : f32 to vector<8x32xf32>
    %228 = arith.mulf %227, %226 : vector<8x32xf32>
    %cst_102 = arith.constant 5.000000e-01 : f32
    %229 = vector.broadcast %cst_102 : f32 to vector<8x32xf32>
    %230 = arith.addf %229, %228 : vector<8x32xf32>
    %231 = vector.extract_strided_slice %225 {offsets = [0, 32], sizes = [8, 32], strides = [1, 1]} : vector<8x128xf32> to vector<8x32xf32>
    %cst_103 = arith.constant 5.000000e-01 : f32
    %232 = vector.broadcast %cst_103 : f32 to vector<8x32xf32>
    %233 = arith.mulf %232, %231 : vector<8x32xf32>
    %cst_104 = arith.constant 5.000000e-01 : f32
    %234 = vector.broadcast %cst_104 : f32 to vector<8x32xf32>
    %235 = arith.addf %234, %233 : vector<8x32xf32>
    %236 = vector.extract_strided_slice %225 {offsets = [0, 64], sizes = [8, 32], strides = [1, 1]} : vector<8x128xf32> to vector<8x32xf32>
    %237 = vector.extract_strided_slice %225 {offsets = [0, 96], sizes = [8, 32], strides = [1, 1]} : vector<8x128xf32> to vector<8x32xf32>
    %cst_105 = arith.constant 5.000000e-01 : f32
    %238 = vector.broadcast %cst_105 : f32 to vector<8x32xf32>
    %239 = arith.mulf %238, %237 : vector<8x32xf32>
    %cst_106 = arith.constant 5.000000e-01 : f32
    %240 = vector.broadcast %cst_106 : f32 to vector<8x32xf32>
    %241 = arith.addf %240, %239 : vector<8x32xf32>
    %242 = arith.mulf %235, %213 : vector<8x32xf32>
    %243 = arith.mulf %230, %236 : vector<8x32xf32>
    %244 = arith.addf %242, %243 : vector<8x32xf32>
    %245 = math.tanh %244 : vector<8x32xf32>
    %246 = arith.mulf %241, %245 : vector<8x32xf32>
    %c40 = arith.constant 40 : index
    %c0_107 = arith.constant 0 : index
    %247 = vector.load %arg17[%c40, %c0_107] : memref<192x32xf32, #tpu.memory_space<vmem>>, vector<8x32xf32>
    tpu.vector_store %arg17[%c40, %c0_107], %246 {strides = array<i32>} : memref<192x32xf32, #tpu.memory_space<vmem>>, vector<8x32xf32>,
    %c40_108 = arith.constant 40 : index
    %c0_109 = arith.constant 0 : index
    %248 = vector.load %arg2[%c40_108, %c0_109] : memref<192x32xf32, #tpu.memory_space<vmem>>, vector<8x32xf32>
    %249 = arith.mulf %248, %246 : vector<8x32xf32>
    %250 = arith.addf %219, %249 : vector<8x32xf32>
    %c40_110 = arith.constant 40 : index
    %c0_111 = arith.constant 0 : index
    %251 = vector.load %arg16[%c40_110, %c0_111] : memref<192x128xf32, #tpu.memory_space<vmem>>, vector<8x128xf32>
    %252 = arith.addf %251, %61 : vector<8x128xf32>
    %cst_112 = arith.constant dense<0.000000e+00> : vector<8x128xf32>
    %253 = tpu.matmul %246, %8, %cst_112 {dimension_numbers = #tpu.dot_dimension_numbers<[1], [0], [0], [1], [0, 0, 1, 1], [], []>} : vector<8x32xf32>, vector<32x128xf32>, vector<8x128xf32> -> vector<8x128xf32>
    %254 = arith.addf %252, %253 : vector<8x128xf32>
    %255 = arith.mulf %254, %17 : vector<8x128xf32>
    %256 = math.tanh %255 : vector<8x128xf32>
    %257 = vector.extract_strided_slice %256 {offsets = [0, 0], sizes = [8, 32], strides = [1, 1]} : vector<8x128xf32> to vector<8x32xf32>
    %cst_113 = arith.constant 5.000000e-01 : f32
    %258 = vector.broadcast %cst_113 : f32 to vector<8x32xf32>
    %259 = arith.mulf %258, %257 : vector<8x32xf32>
    %cst_114 = arith.constant 5.000000e-01 : f32
    %260 = vector.broadcast %cst_114 : f32 to vector<8x32xf32>
    %261 = arith.addf %260, %259 : vector<8x32xf32>
    %262 = vector.extract_strided_slice %256 {offsets = [0, 32], sizes = [8, 32], strides = [1, 1]} : vector<8x128xf32> to vector<8x32xf32>
    %cst_115 = arith.constant 5.000000e-01 : f32
    %263 = vector.broadcast %cst_115 : f32 to vector<8x32xf32>
    %264 = arith.mulf %263, %262 : vector<8x32xf32>
    %cst_116 = arith.constant 5.000000e-01 : f32
    %265 = vector.broadcast %cst_116 : f32 to vector<8x32xf32>
    %266 = arith.addf %265, %264 : vector<8x32xf32>
    %267 = vector.extract_strided_slice %256 {offsets = [0, 64], sizes = [8, 32], strides = [1, 1]} : vector<8x128xf32> to vector<8x32xf32>
    %268 = vector.extract_strided_slice %256 {offsets = [0, 96], sizes = [8, 32], strides = [1, 1]} : vector<8x128xf32> to vector<8x32xf32>
    %cst_117 = arith.constant 5.000000e-01 : f32
    %269 = vector.broadcast %cst_117 : f32 to vector<8x32xf32>
    %270 = arith.mulf %269, %268 : vector<8x32xf32>
    %cst_118 = arith.constant 5.000000e-01 : f32
    %271 = vector.broadcast %cst_118 : f32 to vector<8x32xf32>
    %272 = arith.addf %271, %270 : vector<8x32xf32>
    %273 = arith.mulf %266, %244 : vector<8x32xf32>
    %274 = arith.mulf %261, %267 : vector<8x32xf32>
    %275 = arith.addf %273, %274 : vector<8x32xf32>
    %276 = math.tanh %275 : vector<8x32xf32>
    %277 = arith.mulf %272, %276 : vector<8x32xf32>
    %c48 = arith.constant 48 : index
    %c0_119 = arith.constant 0 : index
    %278 = vector.load %arg17[%c48, %c0_119] : memref<192x32xf32, #tpu.memory_space<vmem>>, vector<8x32xf32>
    tpu.vector_store %arg17[%c48, %c0_119], %277 {strides = array<i32>} : memref<192x32xf32, #tpu.memory_space<vmem>>, vector<8x32xf32>,
    %c48_120 = arith.constant 48 : index
    %c0_121 = arith.constant 0 : index
    %279 = vector.load %arg2[%c48_120, %c0_121] : memref<192x32xf32, #tpu.memory_space<vmem>>, vector<8x32xf32>
    %280 = arith.mulf %279, %277 : vector<8x32xf32>
    %281 = arith.addf %250, %280 : vector<8x32xf32>
    %c48_122 = arith.constant 48 : index
    %c0_123 = arith.constant 0 : index
    %282 = vector.load %arg16[%c48_122, %c0_123] : memref<192x128xf32, #tpu.memory_space<vmem>>, vector<8x128xf32>
    %283 = arith.addf %282, %61 : vector<8x128xf32>
    %cst_124 = arith.constant dense<0.000000e+00> : vector<8x128xf32>
    %284 = tpu.matmul %277, %8, %cst_124 {dimension_numbers = #tpu.dot_dimension_numbers<[1], [0], [0], [1], [0, 0, 1, 1], [], []>} : vector<8x32xf32>, vector<32x128xf32>, vector<8x128xf32> -> vector<8x128xf32>
    %285 = arith.addf %283, %284 : vector<8x128xf32>
    %286 = arith.mulf %285, %17 : vector<8x128xf32>
    %287 = math.tanh %286 : vector<8x128xf32>
    %288 = vector.extract_strided_slice %287 {offsets = [0, 0], sizes = [8, 32], strides = [1, 1]} : vector<8x128xf32> to vector<8x32xf32>
    %cst_125 = arith.constant 5.000000e-01 : f32
    %289 = vector.broadcast %cst_125 : f32 to vector<8x32xf32>
    %290 = arith.mulf %289, %288 : vector<8x32xf32>
    %cst_126 = arith.constant 5.000000e-01 : f32
    %291 = vector.broadcast %cst_126 : f32 to vector<8x32xf32>
    %292 = arith.addf %291, %290 : vector<8x32xf32>
    %293 = vector.extract_strided_slice %287 {offsets = [0, 32], sizes = [8, 32], strides = [1, 1]} : vector<8x128xf32> to vector<8x32xf32>
    %cst_127 = arith.constant 5.000000e-01 : f32
    %294 = vector.broadcast %cst_127 : f32 to vector<8x32xf32>
    %295 = arith.mulf %294, %293 : vector<8x32xf32>
    %cst_128 = arith.constant 5.000000e-01 : f32
    %296 = vector.broadcast %cst_128 : f32 to vector<8x32xf32>
    %297 = arith.addf %296, %295 : vector<8x32xf32>
    %298 = vector.extract_strided_slice %287 {offsets = [0, 64], sizes = [8, 32], strides = [1, 1]} : vector<8x128xf32> to vector<8x32xf32>
    %299 = vector.extract_strided_slice %287 {offsets = [0, 96], sizes = [8, 32], strides = [1, 1]} : vector<8x128xf32> to vector<8x32xf32>
    %cst_129 = arith.constant 5.000000e-01 : f32
    %300 = vector.broadcast %cst_129 : f32 to vector<8x32xf32>
    %301 = arith.mulf %300, %299 : vector<8x32xf32>
    %cst_130 = arith.constant 5.000000e-01 : f32
    %302 = vector.broadcast %cst_130 : f32 to vector<8x32xf32>
    %303 = arith.addf %302, %301 : vector<8x32xf32>
    %304 = arith.mulf %297, %275 : vector<8x32xf32>
    %305 = arith.mulf %292, %298 : vector<8x32xf32>
    %306 = arith.addf %304, %305 : vector<8x32xf32>
    %307 = math.tanh %306 : vector<8x32xf32>
    %308 = arith.mulf %303, %307 : vector<8x32xf32>
    %c56 = arith.constant 56 : index
    %c0_131 = arith.constant 0 : index
    %309 = vector.load %arg17[%c56, %c0_131] : memref<192x32xf32, #tpu.memory_space<vmem>>, vector<8x32xf32>
    tpu.vector_store %arg17[%c56, %c0_131], %308 {strides = array<i32>} : memref<192x32xf32, #tpu.memory_space<vmem>>, vector<8x32xf32>,
    %c56_132 = arith.constant 56 : index
    %c0_133 = arith.constant 0 : index
    %310 = vector.load %arg2[%c56_132, %c0_133] : memref<192x32xf32, #tpu.memory_space<vmem>>, vector<8x32xf32>
    %311 = arith.mulf %310, %308 : vector<8x32xf32>
    %312 = arith.addf %281, %311 : vector<8x32xf32>
    %313 = vector.extract_strided_slice %23 {offsets = [8, 0], sizes = [8, 128], strides = [1, 1]} : vector<24x128xf32> to vector<8x128xf32>
    %cst_134 = arith.constant dense<0.000000e+00> : vector<8x128xf32>
    %314 = tpu.matmul %312, %3, %cst_134 {dimension_numbers = #tpu.dot_dimension_numbers<[1], [0], [0], [1], [0, 0, 1, 1], [], []>} : vector<8x32xf32>, vector<32x128xf32>, vector<8x128xf32> -> vector<8x128xf32>
    %315 = arith.addf %313, %314 : vector<8x128xf32>
    %cst_135 = arith.constant dense<0.000000e+00> : vector<8x128xf32>
    %316 = tpu.matmul %58, %4, %cst_135 {dimension_numbers = #tpu.dot_dimension_numbers<[1], [0], [0], [1], [0, 0, 1, 1], [], []>} : vector<8x32xf32>, vector<32x128xf32>, vector<8x128xf32> -> vector<8x128xf32>
    %317 = arith.addf %315, %316 : vector<8x128xf32>
    %318 = arith.addf %317, %5 : vector<8x128xf32>
    %319 = arith.mulf %318, %17 : vector<8x128xf32>
    %320 = math.tanh %319 : vector<8x128xf32>
    %321 = vector.extract_strided_slice %320 {offsets = [0, 0], sizes = [8, 32], strides = [1, 1]} : vector<8x128xf32> to vector<8x32xf32>
    %cst_136 = arith.constant 5.000000e-01 : f32
    %322 = vector.broadcast %cst_136 : f32 to vector<8x32xf32>
    %323 = arith.mulf %322, %321 : vector<8x32xf32>
    %cst_137 = arith.constant 5.000000e-01 : f32
    %324 = vector.broadcast %cst_137 : f32 to vector<8x32xf32>
    %325 = arith.addf %324, %323 : vector<8x32xf32>
    %326 = vector.extract_strided_slice %320 {offsets = [0, 32], sizes = [8, 32], strides = [1, 1]} : vector<8x128xf32> to vector<8x32xf32>
    %cst_138 = arith.constant 5.000000e-01 : f32
    %327 = vector.broadcast %cst_138 : f32 to vector<8x32xf32>
    %328 = arith.mulf %327, %326 : vector<8x32xf32>
    %cst_139 = arith.constant 5.000000e-01 : f32
    %329 = vector.broadcast %cst_139 : f32 to vector<8x32xf32>
    %330 = arith.addf %329, %328 : vector<8x32xf32>
    %331 = vector.extract_strided_slice %320 {offsets = [0, 64], sizes = [8, 32], strides = [1, 1]} : vector<8x128xf32> to vector<8x32xf32>
    %332 = vector.extract_strided_slice %320 {offsets = [0, 96], sizes = [8, 32], strides = [1, 1]} : vector<8x128xf32> to vector<8x32xf32>
    %cst_140 = arith.constant 5.000000e-01 : f32
    %333 = vector.broadcast %cst_140 : f32 to vector<8x32xf32>
    %334 = arith.mulf %333, %332 : vector<8x32xf32>
    %cst_141 = arith.constant 5.000000e-01 : f32
    %335 = vector.broadcast %cst_141 : f32 to vector<8x32xf32>
    %336 = arith.addf %335, %334 : vector<8x32xf32>
    %337 = arith.mulf %330, %56 : vector<8x32xf32>
    %338 = arith.mulf %325, %331 : vector<8x32xf32>
    %339 = arith.addf %337, %338 : vector<8x32xf32>
    %340 = math.tanh %339 : vector<8x32xf32>
    %341 = arith.mulf %336, %340 : vector<8x32xf32>
    %cst_142 = arith.constant dense<0.000000e+00> : vector<8x320xf32>
    %342 = tpu.matmul %341, %6, %cst_142 {dimension_numbers = #tpu.dot_dimension_numbers<[1], [0], [0], [1], [0, 0, 1, 1], [], []>} : vector<8x32xf32>, vector<32x320xf32>, vector<8x320xf32> -> vector<8x320xf32>
    %343 = arith.addf %342, %7 : vector<8x320xf32>
    %344 = vector.extract_strided_slice %343 {offsets = [0, 0], sizes = [8, 128], strides = [1, 1]} : vector<8x320xf32> to vector<8x128xf32>
    %345 = vector.extract_strided_slice %343 {offsets = [0, 128], sizes = [8, 128], strides = [1, 1]} : vector<8x320xf32> to vector<8x128xf32>
    %346 = vector.extract_strided_slice %343 {offsets = [0, 256], sizes = [8, 32], strides = [1, 1]} : vector<8x320xf32> to vector<8x32xf32>
    %347 = vector.extract_strided_slice %343 {offsets = [0, 288], sizes = [8, 32], strides = [1, 1]} : vector<8x320xf32> to vector<8x32xf32>
    %cst_143 = arith.constant 0.000000e+00 : f32
    %348 = vector.broadcast %cst_143 : f32 to vector<8x32xf32>
    %349 = arith.addf %345, %344 : vector<8x128xf32>
    %cst_144 = arith.constant dense<0.000000e+00> : vector<8x128xf32>
    %350 = tpu.matmul %346, %8, %cst_144 {dimension_numbers = #tpu.dot_dimension_numbers<[1], [0], [0], [1], [0, 0, 1, 1], [], []>} : vector<8x32xf32>, vector<32x128xf32>, vector<8x128xf32> -> vector<8x128xf32>
    %351 = arith.addf %349, %350 : vector<8x128xf32>
    %352 = arith.mulf %351, %17 : vector<8x128xf32>
    %353 = math.tanh %352 : vector<8x128xf32>
    %354 = vector.extract_strided_slice %353 {offsets = [0, 0], sizes = [8, 32], strides = [1, 1]} : vector<8x128xf32> to vector<8x32xf32>
    %cst_145 = arith.constant 5.000000e-01 : f32
    %355 = vector.broadcast %cst_145 : f32 to vector<8x32xf32>
    %356 = arith.mulf %355, %354 : vector<8x32xf32>
    %cst_146 = arith.constant 5.000000e-01 : f32
    %357 = vector.broadcast %cst_146 : f32 to vector<8x32xf32>
    %358 = arith.addf %357, %356 : vector<8x32xf32>
    %359 = vector.extract_strided_slice %353 {offsets = [0, 32], sizes = [8, 32], strides = [1, 1]} : vector<8x128xf32> to vector<8x32xf32>
    %cst_147 = arith.constant 5.000000e-01 : f32
    %360 = vector.broadcast %cst_147 : f32 to vector<8x32xf32>
    %361 = arith.mulf %360, %359 : vector<8x32xf32>
    %cst_148 = arith.constant 5.000000e-01 : f32
    %362 = vector.broadcast %cst_148 : f32 to vector<8x32xf32>
    %363 = arith.addf %362, %361 : vector<8x32xf32>
    %364 = vector.extract_strided_slice %353 {offsets = [0, 64], sizes = [8, 32], strides = [1, 1]} : vector<8x128xf32> to vector<8x32xf32>
    %365 = vector.extract_strided_slice %353 {offsets = [0, 96], sizes = [8, 32], strides = [1, 1]} : vector<8x128xf32> to vector<8x32xf32>
    %cst_149 = arith.constant 5.000000e-01 : f32
    %366 = vector.broadcast %cst_149 : f32 to vector<8x32xf32>
    %367 = arith.mulf %366, %365 : vector<8x32xf32>
    %cst_150 = arith.constant 5.000000e-01 : f32
    %368 = vector.broadcast %cst_150 : f32 to vector<8x32xf32>
    %369 = arith.addf %368, %367 : vector<8x32xf32>
    %370 = arith.mulf %363, %347 : vector<8x32xf32>
    %371 = arith.mulf %358, %364 : vector<8x32xf32>
    %372 = arith.addf %370, %371 : vector<8x32xf32>
    %373 = math.tanh %372 : vector<8x32xf32>
    %374 = arith.mulf %369, %373 : vector<8x32xf32>
    %c64 = arith.constant 64 : index
    %c0_151 = arith.constant 0 : index
    %375 = vector.load %arg17[%c64, %c0_151] : memref<192x32xf32, #tpu.memory_space<vmem>>, vector<8x32xf32>
    tpu.vector_store %arg17[%c64, %c0_151], %374 {strides = array<i32>} : memref<192x32xf32, #tpu.memory_space<vmem>>, vector<8x32xf32>,
    %c64_152 = arith.constant 64 : index
    %c0_153 = arith.constant 0 : index
    %376 = vector.load %arg2[%c64_152, %c0_153] : memref<192x32xf32, #tpu.memory_space<vmem>>, vector<8x32xf32>
    %377 = arith.mulf %376, %374 : vector<8x32xf32>
    %378 = arith.addf %348, %377 : vector<8x32xf32>
    %c64_154 = arith.constant 64 : index
    %c0_155 = arith.constant 0 : index
    %379 = vector.load %arg16[%c64_154, %c0_155] : memref<192x128xf32, #tpu.memory_space<vmem>>, vector<8x128xf32>
    %380 = arith.addf %379, %344 : vector<8x128xf32>
    %cst_156 = arith.constant dense<0.000000e+00> : vector<8x128xf32>
    %381 = tpu.matmul %374, %8, %cst_156 {dimension_numbers = #tpu.dot_dimension_numbers<[1], [0], [0], [1], [0, 0, 1, 1], [], []>} : vector<8x32xf32>, vector<32x128xf32>, vector<8x128xf32> -> vector<8x128xf32>
    %382 = arith.addf %380, %381 : vector<8x128xf32>
    %383 = arith.mulf %382, %17 : vector<8x128xf32>
    %384 = math.tanh %383 : vector<8x128xf32>
    %385 = vector.extract_strided_slice %384 {offsets = [0, 0], sizes = [8, 32], strides = [1, 1]} : vector<8x128xf32> to vector<8x32xf32>
    %cst_157 = arith.constant 5.000000e-01 : f32
    %386 = vector.broadcast %cst_157 : f32 to vector<8x32xf32>
    %387 = arith.mulf %386, %385 : vector<8x32xf32>
    %cst_158 = arith.constant 5.000000e-01 : f32
    %388 = vector.broadcast %cst_158 : f32 to vector<8x32xf32>
    %389 = arith.addf %388, %387 : vector<8x32xf32>
    %390 = vector.extract_strided_slice %384 {offsets = [0, 32], sizes = [8, 32], strides = [1, 1]} : vector<8x128xf32> to vector<8x32xf32>
    %cst_159 = arith.constant 5.000000e-01 : f32
    %391 = vector.broadcast %cst_159 : f32 to vector<8x32xf32>
    %392 = arith.mulf %391, %390 : vector<8x32xf32>
    %cst_160 = arith.constant 5.000000e-01 : f32
    %393 = vector.broadcast %cst_160 : f32 to vector<8x32xf32>
    %394 = arith.addf %393, %392 : vector<8x32xf32>
    %395 = vector.extract_strided_slice %384 {offsets = [0, 64], sizes = [8, 32], strides = [1, 1]} : vector<8x128xf32> to vector<8x32xf32>
    %396 = vector.extract_strided_slice %384 {offsets = [0, 96], sizes = [8, 32], strides = [1, 1]} : vector<8x128xf32> to vector<8x32xf32>
    %cst_161 = arith.constant 5.000000e-01 : f32
    %397 = vector.broadcast %cst_161 : f32 to vector<8x32xf32>
    %398 = arith.mulf %397, %396 : vector<8x32xf32>
    %cst_162 = arith.constant 5.000000e-01 : f32
    %399 = vector.broadcast %cst_162 : f32 to vector<8x32xf32>
    %400 = arith.addf %399, %398 : vector<8x32xf32>
    %401 = arith.mulf %394, %372 : vector<8x32xf32>
    %402 = arith.mulf %389, %395 : vector<8x32xf32>
    %403 = arith.addf %401, %402 : vector<8x32xf32>
    %404 = math.tanh %403 : vector<8x32xf32>
    %405 = arith.mulf %400, %404 : vector<8x32xf32>
    %c72 = arith.constant 72 : index
    %c0_163 = arith.constant 0 : index
    %406 = vector.load %arg17[%c72, %c0_163] : memref<192x32xf32, #tpu.memory_space<vmem>>, vector<8x32xf32>
    tpu.vector_store %arg17[%c72, %c0_163], %405 {strides = array<i32>} : memref<192x32xf32, #tpu.memory_space<vmem>>, vector<8x32xf32>,
    %c72_164 = arith.constant 72 : index
    %c0_165 = arith.constant 0 : index
    %407 = vector.load %arg2[%c72_164, %c0_165] : memref<192x32xf32, #tpu.memory_space<vmem>>, vector<8x32xf32>
    %408 = arith.mulf %407, %405 : vector<8x32xf32>
    %409 = arith.addf %378, %408 : vector<8x32xf32>
    %c72_166 = arith.constant 72 : index
    %c0_167 = arith.constant 0 : index
    %410 = vector.load %arg16[%c72_166, %c0_167] : memref<192x128xf32, #tpu.memory_space<vmem>>, vector<8x128xf32>
    %411 = arith.addf %410, %344 : vector<8x128xf32>
    %cst_168 = arith.constant dense<0.000000e+00> : vector<8x128xf32>
    %412 = tpu.matmul %405, %8, %cst_168 {dimension_numbers = #tpu.dot_dimension_numbers<[1], [0], [0], [1], [0, 0, 1, 1], [], []>} : vector<8x32xf32>, vector<32x128xf32>, vector<8x128xf32> -> vector<8x128xf32>
    %413 = arith.addf %411, %412 : vector<8x128xf32>
    %414 = arith.mulf %413, %17 : vector<8x128xf32>
    %415 = math.tanh %414 : vector<8x128xf32>
    %416 = vector.extract_strided_slice %415 {offsets = [0, 0], sizes = [8, 32], strides = [1, 1]} : vector<8x128xf32> to vector<8x32xf32>
    %cst_169 = arith.constant 5.000000e-01 : f32
    %417 = vector.broadcast %cst_169 : f32 to vector<8x32xf32>
    %418 = arith.mulf %417, %416 : vector<8x32xf32>
    %cst_170 = arith.constant 5.000000e-01 : f32
    %419 = vector.broadcast %cst_170 : f32 to vector<8x32xf32>
    %420 = arith.addf %419, %418 : vector<8x32xf32>
    %421 = vector.extract_strided_slice %415 {offsets = [0, 32], sizes = [8, 32], strides = [1, 1]} : vector<8x128xf32> to vector<8x32xf32>
    %cst_171 = arith.constant 5.000000e-01 : f32
    %422 = vector.broadcast %cst_171 : f32 to vector<8x32xf32>
    %423 = arith.mulf %422, %421 : vector<8x32xf32>
    %cst_172 = arith.constant 5.000000e-01 : f32
    %424 = vector.broadcast %cst_172 : f32 to vector<8x32xf32>
    %425 = arith.addf %424, %423 : vector<8x32xf32>
    %426 = vector.extract_strided_slice %415 {offsets = [0, 64], sizes = [8, 32], strides = [1, 1]} : vector<8x128xf32> to vector<8x32xf32>
    %427 = vector.extract_strided_slice %415 {offsets = [0, 96], sizes = [8, 32], strides = [1, 1]} : vector<8x128xf32> to vector<8x32xf32>
    %cst_173 = arith.constant 5.000000e-01 : f32
    %428 = vector.broadcast %cst_173 : f32 to vector<8x32xf32>
    %429 = arith.mulf %428, %427 : vector<8x32xf32>
    %cst_174 = arith.constant 5.000000e-01 : f32
    %430 = vector.broadcast %cst_174 : f32 to vector<8x32xf32>
    %431 = arith.addf %430, %429 : vector<8x32xf32>
    %432 = arith.mulf %425, %403 : vector<8x32xf32>
    %433 = arith.mulf %420, %426 : vector<8x32xf32>
    %434 = arith.addf %432, %433 : vector<8x32xf32>
    %435 = math.tanh %434 : vector<8x32xf32>
    %436 = arith.mulf %431, %435 : vector<8x32xf32>
    %c80 = arith.constant 80 : index
    %c0_175 = arith.constant 0 : index
    %437 = vector.load %arg17[%c80, %c0_175] : memref<192x32xf32, #tpu.memory_space<vmem>>, vector<8x32xf32>
    tpu.vector_store %arg17[%c80, %c0_175], %436 {strides = array<i32>} : memref<192x32xf32, #tpu.memory_space<vmem>>, vector<8x32xf32>,
    %c80_176 = arith.constant 80 : index
    %c0_177 = arith.constant 0 : index
    %438 = vector.load %arg2[%c80_176, %c0_177] : memref<192x32xf32, #tpu.memory_space<vmem>>, vector<8x32xf32>
    %439 = arith.mulf %438, %436 : vector<8x32xf32>
    %440 = arith.addf %409, %439 : vector<8x32xf32>
    %c80_178 = arith.constant 80 : index
    %c0_179 = arith.constant 0 : index
    %441 = vector.load %arg16[%c80_178, %c0_179] : memref<192x128xf32, #tpu.memory_space<vmem>>, vector<8x128xf32>
    %442 = arith.addf %441, %344 : vector<8x128xf32>
    %cst_180 = arith.constant dense<0.000000e+00> : vector<8x128xf32>
    %443 = tpu.matmul %436, %8, %cst_180 {dimension_numbers = #tpu.dot_dimension_numbers<[1], [0], [0], [1], [0, 0, 1, 1], [], []>} : vector<8x32xf32>, vector<32x128xf32>, vector<8x128xf32> -> vector<8x128xf32>
    %444 = arith.addf %442, %443 : vector<8x128xf32>
    %445 = arith.mulf %444, %17 : vector<8x128xf32>
    %446 = math.tanh %445 : vector<8x128xf32>
    %447 = vector.extract_strided_slice %446 {offsets = [0, 0], sizes = [8, 32], strides = [1, 1]} : vector<8x128xf32> to vector<8x32xf32>
    %cst_181 = arith.constant 5.000000e-01 : f32
    %448 = vector.broadcast %cst_181 : f32 to vector<8x32xf32>
    %449 = arith.mulf %448, %447 : vector<8x32xf32>
    %cst_182 = arith.constant 5.000000e-01 : f32
    %450 = vector.broadcast %cst_182 : f32 to vector<8x32xf32>
    %451 = arith.addf %450, %449 : vector<8x32xf32>
    %452 = vector.extract_strided_slice %446 {offsets = [0, 32], sizes = [8, 32], strides = [1, 1]} : vector<8x128xf32> to vector<8x32xf32>
    %cst_183 = arith.constant 5.000000e-01 : f32
    %453 = vector.broadcast %cst_183 : f32 to vector<8x32xf32>
    %454 = arith.mulf %453, %452 : vector<8x32xf32>
    %cst_184 = arith.constant 5.000000e-01 : f32
    %455 = vector.broadcast %cst_184 : f32 to vector<8x32xf32>
    %456 = arith.addf %455, %454 : vector<8x32xf32>
    %457 = vector.extract_strided_slice %446 {offsets = [0, 64], sizes = [8, 32], strides = [1, 1]} : vector<8x128xf32> to vector<8x32xf32>
    %458 = vector.extract_strided_slice %446 {offsets = [0, 96], sizes = [8, 32], strides = [1, 1]} : vector<8x128xf32> to vector<8x32xf32>
    %cst_185 = arith.constant 5.000000e-01 : f32
    %459 = vector.broadcast %cst_185 : f32 to vector<8x32xf32>
    %460 = arith.mulf %459, %458 : vector<8x32xf32>
    %cst_186 = arith.constant 5.000000e-01 : f32
    %461 = vector.broadcast %cst_186 : f32 to vector<8x32xf32>
    %462 = arith.addf %461, %460 : vector<8x32xf32>
    %463 = arith.mulf %456, %434 : vector<8x32xf32>
    %464 = arith.mulf %451, %457 : vector<8x32xf32>
    %465 = arith.addf %463, %464 : vector<8x32xf32>
    %466 = math.tanh %465 : vector<8x32xf32>
    %467 = arith.mulf %462, %466 : vector<8x32xf32>
    %c88 = arith.constant 88 : index
    %c0_187 = arith.constant 0 : index
    %468 = vector.load %arg17[%c88, %c0_187] : memref<192x32xf32, #tpu.memory_space<vmem>>, vector<8x32xf32>
    tpu.vector_store %arg17[%c88, %c0_187], %467 {strides = array<i32>} : memref<192x32xf32, #tpu.memory_space<vmem>>, vector<8x32xf32>,
    %c88_188 = arith.constant 88 : index
    %c0_189 = arith.constant 0 : index
    %469 = vector.load %arg2[%c88_188, %c0_189] : memref<192x32xf32, #tpu.memory_space<vmem>>, vector<8x32xf32>
    %470 = arith.mulf %469, %467 : vector<8x32xf32>
    %471 = arith.addf %440, %470 : vector<8x32xf32>
    %c88_190 = arith.constant 88 : index
    %c0_191 = arith.constant 0 : index
    %472 = vector.load %arg16[%c88_190, %c0_191] : memref<192x128xf32, #tpu.memory_space<vmem>>, vector<8x128xf32>
    %473 = arith.addf %472, %344 : vector<8x128xf32>
    %cst_192 = arith.constant dense<0.000000e+00> : vector<8x128xf32>
    %474 = tpu.matmul %467, %8, %cst_192 {dimension_numbers = #tpu.dot_dimension_numbers<[1], [0], [0], [1], [0, 0, 1, 1], [], []>} : vector<8x32xf32>, vector<32x128xf32>, vector<8x128xf32> -> vector<8x128xf32>
    %475 = arith.addf %473, %474 : vector<8x128xf32>
    %476 = arith.mulf %475, %17 : vector<8x128xf32>
    %477 = math.tanh %476 : vector<8x128xf32>
    %478 = vector.extract_strided_slice %477 {offsets = [0, 0], sizes = [8, 32], strides = [1, 1]} : vector<8x128xf32> to vector<8x32xf32>
    %cst_193 = arith.constant 5.000000e-01 : f32
    %479 = vector.broadcast %cst_193 : f32 to vector<8x32xf32>
    %480 = arith.mulf %479, %478 : vector<8x32xf32>
    %cst_194 = arith.constant 5.000000e-01 : f32
    %481 = vector.broadcast %cst_194 : f32 to vector<8x32xf32>
    %482 = arith.addf %481, %480 : vector<8x32xf32>
    %483 = vector.extract_strided_slice %477 {offsets = [0, 32], sizes = [8, 32], strides = [1, 1]} : vector<8x128xf32> to vector<8x32xf32>
    %cst_195 = arith.constant 5.000000e-01 : f32
    %484 = vector.broadcast %cst_195 : f32 to vector<8x32xf32>
    %485 = arith.mulf %484, %483 : vector<8x32xf32>
    %cst_196 = arith.constant 5.000000e-01 : f32
    %486 = vector.broadcast %cst_196 : f32 to vector<8x32xf32>
    %487 = arith.addf %486, %485 : vector<8x32xf32>
    %488 = vector.extract_strided_slice %477 {offsets = [0, 64], sizes = [8, 32], strides = [1, 1]} : vector<8x128xf32> to vector<8x32xf32>
    %489 = vector.extract_strided_slice %477 {offsets = [0, 96], sizes = [8, 32], strides = [1, 1]} : vector<8x128xf32> to vector<8x32xf32>
    %cst_197 = arith.constant 5.000000e-01 : f32
    %490 = vector.broadcast %cst_197 : f32 to vector<8x32xf32>
    %491 = arith.mulf %490, %489 : vector<8x32xf32>
    %cst_198 = arith.constant 5.000000e-01 : f32
    %492 = vector.broadcast %cst_198 : f32 to vector<8x32xf32>
    %493 = arith.addf %492, %491 : vector<8x32xf32>
    %494 = arith.mulf %487, %465 : vector<8x32xf32>
    %495 = arith.mulf %482, %488 : vector<8x32xf32>
    %496 = arith.addf %494, %495 : vector<8x32xf32>
    %497 = math.tanh %496 : vector<8x32xf32>
    %498 = arith.mulf %493, %497 : vector<8x32xf32>
    %c96 = arith.constant 96 : index
    %c0_199 = arith.constant 0 : index
    %499 = vector.load %arg17[%c96, %c0_199] : memref<192x32xf32, #tpu.memory_space<vmem>>, vector<8x32xf32>
    tpu.vector_store %arg17[%c96, %c0_199], %498 {strides = array<i32>} : memref<192x32xf32, #tpu.memory_space<vmem>>, vector<8x32xf32>,
    %c96_200 = arith.constant 96 : index
    %c0_201 = arith.constant 0 : index
    %500 = vector.load %arg2[%c96_200, %c0_201] : memref<192x32xf32, #tpu.memory_space<vmem>>, vector<8x32xf32>
    %501 = arith.mulf %500, %498 : vector<8x32xf32>
    %502 = arith.addf %471, %501 : vector<8x32xf32>
    %c96_202 = arith.constant 96 : index
    %c0_203 = arith.constant 0 : index
    %503 = vector.load %arg16[%c96_202, %c0_203] : memref<192x128xf32, #tpu.memory_space<vmem>>, vector<8x128xf32>
    %504 = arith.addf %503, %344 : vector<8x128xf32>
    %cst_204 = arith.constant dense<0.000000e+00> : vector<8x128xf32>
    %505 = tpu.matmul %498, %8, %cst_204 {dimension_numbers = #tpu.dot_dimension_numbers<[1], [0], [0], [1], [0, 0, 1, 1], [], []>} : vector<8x32xf32>, vector<32x128xf32>, vector<8x128xf32> -> vector<8x128xf32>
    %506 = arith.addf %504, %505 : vector<8x128xf32>
    %507 = arith.mulf %506, %17 : vector<8x128xf32>
    %508 = math.tanh %507 : vector<8x128xf32>
    %509 = vector.extract_strided_slice %508 {offsets = [0, 0], sizes = [8, 32], strides = [1, 1]} : vector<8x128xf32> to vector<8x32xf32>
    %cst_205 = arith.constant 5.000000e-01 : f32
    %510 = vector.broadcast %cst_205 : f32 to vector<8x32xf32>
    %511 = arith.mulf %510, %509 : vector<8x32xf32>
    %cst_206 = arith.constant 5.000000e-01 : f32
    %512 = vector.broadcast %cst_206 : f32 to vector<8x32xf32>
    %513 = arith.addf %512, %511 : vector<8x32xf32>
    %514 = vector.extract_strided_slice %508 {offsets = [0, 32], sizes = [8, 32], strides = [1, 1]} : vector<8x128xf32> to vector<8x32xf32>
    %cst_207 = arith.constant 5.000000e-01 : f32
    %515 = vector.broadcast %cst_207 : f32 to vector<8x32xf32>
    %516 = arith.mulf %515, %514 : vector<8x32xf32>
    %cst_208 = arith.constant 5.000000e-01 : f32
    %517 = vector.broadcast %cst_208 : f32 to vector<8x32xf32>
    %518 = arith.addf %517, %516 : vector<8x32xf32>
    %519 = vector.extract_strided_slice %508 {offsets = [0, 64], sizes = [8, 32], strides = [1, 1]} : vector<8x128xf32> to vector<8x32xf32>
    %520 = vector.extract_strided_slice %508 {offsets = [0, 96], sizes = [8, 32], strides = [1, 1]} : vector<8x128xf32> to vector<8x32xf32>
    %cst_209 = arith.constant 5.000000e-01 : f32
    %521 = vector.broadcast %cst_209 : f32 to vector<8x32xf32>
    %522 = arith.mulf %521, %520 : vector<8x32xf32>
    %cst_210 = arith.constant 5.000000e-01 : f32
    %523 = vector.broadcast %cst_210 : f32 to vector<8x32xf32>
    %524 = arith.addf %523, %522 : vector<8x32xf32>
    %525 = arith.mulf %518, %496 : vector<8x32xf32>
    %526 = arith.mulf %513, %519 : vector<8x32xf32>
    %527 = arith.addf %525, %526 : vector<8x32xf32>
    %528 = math.tanh %527 : vector<8x32xf32>
    %529 = arith.mulf %524, %528 : vector<8x32xf32>
    %c104 = arith.constant 104 : index
    %c0_211 = arith.constant 0 : index
    %530 = vector.load %arg17[%c104, %c0_211] : memref<192x32xf32, #tpu.memory_space<vmem>>, vector<8x32xf32>
    tpu.vector_store %arg17[%c104, %c0_211], %529 {strides = array<i32>} : memref<192x32xf32, #tpu.memory_space<vmem>>, vector<8x32xf32>,
    %c104_212 = arith.constant 104 : index
    %c0_213 = arith.constant 0 : index
    %531 = vector.load %arg2[%c104_212, %c0_213] : memref<192x32xf32, #tpu.memory_space<vmem>>, vector<8x32xf32>
    %532 = arith.mulf %531, %529 : vector<8x32xf32>
    %533 = arith.addf %502, %532 : vector<8x32xf32>
    %c104_214 = arith.constant 104 : index
    %c0_215 = arith.constant 0 : index
    %534 = vector.load %arg16[%c104_214, %c0_215] : memref<192x128xf32, #tpu.memory_space<vmem>>, vector<8x128xf32>
    %535 = arith.addf %534, %344 : vector<8x128xf32>
    %cst_216 = arith.constant dense<0.000000e+00> : vector<8x128xf32>
    %536 = tpu.matmul %529, %8, %cst_216 {dimension_numbers = #tpu.dot_dimension_numbers<[1], [0], [0], [1], [0, 0, 1, 1], [], []>} : vector<8x32xf32>, vector<32x128xf32>, vector<8x128xf32> -> vector<8x128xf32>
    %537 = arith.addf %535, %536 : vector<8x128xf32>
    %538 = arith.mulf %537, %17 : vector<8x128xf32>
    %539 = math.tanh %538 : vector<8x128xf32>
    %540 = vector.extract_strided_slice %539 {offsets = [0, 0], sizes = [8, 32], strides = [1, 1]} : vector<8x128xf32> to vector<8x32xf32>
    %cst_217 = arith.constant 5.000000e-01 : f32
    %541 = vector.broadcast %cst_217 : f32 to vector<8x32xf32>
    %542 = arith.mulf %541, %540 : vector<8x32xf32>
    %cst_218 = arith.constant 5.000000e-01 : f32
    %543 = vector.broadcast %cst_218 : f32 to vector<8x32xf32>
    %544 = arith.addf %543, %542 : vector<8x32xf32>
    %545 = vector.extract_strided_slice %539 {offsets = [0, 32], sizes = [8, 32], strides = [1, 1]} : vector<8x128xf32> to vector<8x32xf32>
    %cst_219 = arith.constant 5.000000e-01 : f32
    %546 = vector.broadcast %cst_219 : f32 to vector<8x32xf32>
    %547 = arith.mulf %546, %545 : vector<8x32xf32>
    %cst_220 = arith.constant 5.000000e-01 : f32
    %548 = vector.broadcast %cst_220 : f32 to vector<8x32xf32>
    %549 = arith.addf %548, %547 : vector<8x32xf32>
    %550 = vector.extract_strided_slice %539 {offsets = [0, 64], sizes = [8, 32], strides = [1, 1]} : vector<8x128xf32> to vector<8x32xf32>
    %551 = vector.extract_strided_slice %539 {offsets = [0, 96], sizes = [8, 32], strides = [1, 1]} : vector<8x128xf32> to vector<8x32xf32>
    %cst_221 = arith.constant 5.000000e-01 : f32
    %552 = vector.broadcast %cst_221 : f32 to vector<8x32xf32>
    %553 = arith.mulf %552, %551 : vector<8x32xf32>
    %cst_222 = arith.constant 5.000000e-01 : f32
    %554 = vector.broadcast %cst_222 : f32 to vector<8x32xf32>
    %555 = arith.addf %554, %553 : vector<8x32xf32>
    %556 = arith.mulf %549, %527 : vector<8x32xf32>
    %557 = arith.mulf %544, %550 : vector<8x32xf32>
    %558 = arith.addf %556, %557 : vector<8x32xf32>
    %559 = math.tanh %558 : vector<8x32xf32>
    %560 = arith.mulf %555, %559 : vector<8x32xf32>
    %c112 = arith.constant 112 : index
    %c0_223 = arith.constant 0 : index
    %561 = vector.load %arg17[%c112, %c0_223] : memref<192x32xf32, #tpu.memory_space<vmem>>, vector<8x32xf32>
    tpu.vector_store %arg17[%c112, %c0_223], %560 {strides = array<i32>} : memref<192x32xf32, #tpu.memory_space<vmem>>, vector<8x32xf32>,
    %c112_224 = arith.constant 112 : index
    %c0_225 = arith.constant 0 : index
    %562 = vector.load %arg2[%c112_224, %c0_225] : memref<192x32xf32, #tpu.memory_space<vmem>>, vector<8x32xf32>
    %563 = arith.mulf %562, %560 : vector<8x32xf32>
    %564 = arith.addf %533, %563 : vector<8x32xf32>
    %c112_226 = arith.constant 112 : index
    %c0_227 = arith.constant 0 : index
    %565 = vector.load %arg16[%c112_226, %c0_227] : memref<192x128xf32, #tpu.memory_space<vmem>>, vector<8x128xf32>
    %566 = arith.addf %565, %344 : vector<8x128xf32>
    %cst_228 = arith.constant dense<0.000000e+00> : vector<8x128xf32>
    %567 = tpu.matmul %560, %8, %cst_228 {dimension_numbers = #tpu.dot_dimension_numbers<[1], [0], [0], [1], [0, 0, 1, 1], [], []>} : vector<8x32xf32>, vector<32x128xf32>, vector<8x128xf32> -> vector<8x128xf32>
    %568 = arith.addf %566, %567 : vector<8x128xf32>
    %569 = arith.mulf %568, %17 : vector<8x128xf32>
    %570 = math.tanh %569 : vector<8x128xf32>
    %571 = vector.extract_strided_slice %570 {offsets = [0, 0], sizes = [8, 32], strides = [1, 1]} : vector<8x128xf32> to vector<8x32xf32>
    %cst_229 = arith.constant 5.000000e-01 : f32
    %572 = vector.broadcast %cst_229 : f32 to vector<8x32xf32>
    %573 = arith.mulf %572, %571 : vector<8x32xf32>
    %cst_230 = arith.constant 5.000000e-01 : f32
    %574 = vector.broadcast %cst_230 : f32 to vector<8x32xf32>
    %575 = arith.addf %574, %573 : vector<8x32xf32>
    %576 = vector.extract_strided_slice %570 {offsets = [0, 32], sizes = [8, 32], strides = [1, 1]} : vector<8x128xf32> to vector<8x32xf32>
    %cst_231 = arith.constant 5.000000e-01 : f32
    %577 = vector.broadcast %cst_231 : f32 to vector<8x32xf32>
    %578 = arith.mulf %577, %576 : vector<8x32xf32>
    %cst_232 = arith.constant 5.000000e-01 : f32
    %579 = vector.broadcast %cst_232 : f32 to vector<8x32xf32>
    %580 = arith.addf %579, %578 : vector<8x32xf32>
    %581 = vector.extract_strided_slice %570 {offsets = [0, 64], sizes = [8, 32], strides = [1, 1]} : vector<8x128xf32> to vector<8x32xf32>
    %582 = vector.extract_strided_slice %570 {offsets = [0, 96], sizes = [8, 32], strides = [1, 1]} : vector<8x128xf32> to vector<8x32xf32>
    %cst_233 = arith.constant 5.000000e-01 : f32
    %583 = vector.broadcast %cst_233 : f32 to vector<8x32xf32>
    %584 = arith.mulf %583, %582 : vector<8x32xf32>
    %cst_234 = arith.constant 5.000000e-01 : f32
    %585 = vector.broadcast %cst_234 : f32 to vector<8x32xf32>
    %586 = arith.addf %585, %584 : vector<8x32xf32>
    %587 = arith.mulf %580, %558 : vector<8x32xf32>
    %588 = arith.mulf %575, %581 : vector<8x32xf32>
    %589 = arith.addf %587, %588 : vector<8x32xf32>
    %590 = math.tanh %589 : vector<8x32xf32>
    %591 = arith.mulf %586, %590 : vector<8x32xf32>
    %c120 = arith.constant 120 : index
    %c0_235 = arith.constant 0 : index
    %592 = vector.load %arg17[%c120, %c0_235] : memref<192x32xf32, #tpu.memory_space<vmem>>, vector<8x32xf32>
    tpu.vector_store %arg17[%c120, %c0_235], %591 {strides = array<i32>} : memref<192x32xf32, #tpu.memory_space<vmem>>, vector<8x32xf32>,
    %c120_236 = arith.constant 120 : index
    %c0_237 = arith.constant 0 : index
    %593 = vector.load %arg2[%c120_236, %c0_237] : memref<192x32xf32, #tpu.memory_space<vmem>>, vector<8x32xf32>
    %594 = arith.mulf %593, %591 : vector<8x32xf32>
    %595 = arith.addf %564, %594 : vector<8x32xf32>
    %596 = vector.extract_strided_slice %23 {offsets = [16, 0], sizes = [8, 128], strides = [1, 1]} : vector<24x128xf32> to vector<8x128xf32>
    %cst_238 = arith.constant dense<0.000000e+00> : vector<8x128xf32>
    %597 = tpu.matmul %595, %3, %cst_238 {dimension_numbers = #tpu.dot_dimension_numbers<[1], [0], [0], [1], [0, 0, 1, 1], [], []>} : vector<8x32xf32>, vector<32x128xf32>, vector<8x128xf32> -> vector<8x128xf32>
    %598 = arith.addf %596, %597 : vector<8x128xf32>
    %cst_239 = arith.constant dense<0.000000e+00> : vector<8x128xf32>
    %599 = tpu.matmul %341, %4, %cst_239 {dimension_numbers = #tpu.dot_dimension_numbers<[1], [0], [0], [1], [0, 0, 1, 1], [], []>} : vector<8x32xf32>, vector<32x128xf32>, vector<8x128xf32> -> vector<8x128xf32>
    %600 = arith.addf %598, %599 : vector<8x128xf32>
    %601 = arith.addf %600, %5 : vector<8x128xf32>
    %602 = arith.mulf %601, %17 : vector<8x128xf32>
    %603 = math.tanh %602 : vector<8x128xf32>
    %604 = vector.extract_strided_slice %603 {offsets = [0, 0], sizes = [8, 32], strides = [1, 1]} : vector<8x128xf32> to vector<8x32xf32>
    %cst_240 = arith.constant 5.000000e-01 : f32
    %605 = vector.broadcast %cst_240 : f32 to vector<8x32xf32>
    %606 = arith.mulf %605, %604 : vector<8x32xf32>
    %cst_241 = arith.constant 5.000000e-01 : f32
    %607 = vector.broadcast %cst_241 : f32 to vector<8x32xf32>
    %608 = arith.addf %607, %606 : vector<8x32xf32>
    %609 = vector.extract_strided_slice %603 {offsets = [0, 32], sizes = [8, 32], strides = [1, 1]} : vector<8x128xf32> to vector<8x32xf32>
    %cst_242 = arith.constant 5.000000e-01 : f32
    %610 = vector.broadcast %cst_242 : f32 to vector<8x32xf32>
    %611 = arith.mulf %610, %609 : vector<8x32xf32>
    %cst_243 = arith.constant 5.000000e-01 : f32
    %612 = vector.broadcast %cst_243 : f32 to vector<8x32xf32>
    %613 = arith.addf %612, %611 : vector<8x32xf32>
    %614 = vector.extract_strided_slice %603 {offsets = [0, 64], sizes = [8, 32], strides = [1, 1]} : vector<8x128xf32> to vector<8x32xf32>
    %615 = vector.extract_strided_slice %603 {offsets = [0, 96], sizes = [8, 32], strides = [1, 1]} : vector<8x128xf32> to vector<8x32xf32>
    %cst_244 = arith.constant 5.000000e-01 : f32
    %616 = vector.broadcast %cst_244 : f32 to vector<8x32xf32>
    %617 = arith.mulf %616, %615 : vector<8x32xf32>
    %cst_245 = arith.constant 5.000000e-01 : f32
    %618 = vector.broadcast %cst_245 : f32 to vector<8x32xf32>
    %619 = arith.addf %618, %617 : vector<8x32xf32>
    %620 = arith.mulf %613, %339 : vector<8x32xf32>
    %621 = arith.mulf %608, %614 : vector<8x32xf32>
    %622 = arith.addf %620, %621 : vector<8x32xf32>
    %623 = math.tanh %622 : vector<8x32xf32>
    %624 = arith.mulf %619, %623 : vector<8x32xf32>
    %cst_246 = arith.constant dense<0.000000e+00> : vector<8x320xf32>
    %625 = tpu.matmul %624, %6, %cst_246 {dimension_numbers = #tpu.dot_dimension_numbers<[1], [0], [0], [1], [0, 0, 1, 1], [], []>} : vector<8x32xf32>, vector<32x320xf32>, vector<8x320xf32> -> vector<8x320xf32>
    %626 = arith.addf %625, %7 : vector<8x320xf32>
    %627 = vector.extract_strided_slice %626 {offsets = [0, 0], sizes = [8, 128], strides = [1, 1]} : vector<8x320xf32> to vector<8x128xf32>
    %628 = vector.extract_strided_slice %626 {offsets = [0, 128], sizes = [8, 128], strides = [1, 1]} : vector<8x320xf32> to vector<8x128xf32>
    %629 = vector.extract_strided_slice %626 {offsets = [0, 256], sizes = [8, 32], strides = [1, 1]} : vector<8x320xf32> to vector<8x32xf32>
    %630 = vector.extract_strided_slice %626 {offsets = [0, 288], sizes = [8, 32], strides = [1, 1]} : vector<8x320xf32> to vector<8x32xf32>
    %631 = arith.addf %628, %627 : vector<8x128xf32>
    %cst_247 = arith.constant dense<0.000000e+00> : vector<8x128xf32>
    %632 = tpu.matmul %629, %8, %cst_247 {dimension_numbers = #tpu.dot_dimension_numbers<[1], [0], [0], [1], [0, 0, 1, 1], [], []>} : vector<8x32xf32>, vector<32x128xf32>, vector<8x128xf32> -> vector<8x128xf32>
    %633 = arith.addf %631, %632 : vector<8x128xf32>
    %634 = arith.mulf %633, %17 : vector<8x128xf32>
    %635 = math.tanh %634 : vector<8x128xf32>
    %636 = vector.extract_strided_slice %635 {offsets = [0, 0], sizes = [8, 32], strides = [1, 1]} : vector<8x128xf32> to vector<8x32xf32>
    %cst_248 = arith.constant 5.000000e-01 : f32
    %637 = vector.broadcast %cst_248 : f32 to vector<8x32xf32>
    %638 = arith.mulf %637, %636 : vector<8x32xf32>
    %cst_249 = arith.constant 5.000000e-01 : f32
    %639 = vector.broadcast %cst_249 : f32 to vector<8x32xf32>
    %640 = arith.addf %639, %638 : vector<8x32xf32>
    %641 = vector.extract_strided_slice %635 {offsets = [0, 32], sizes = [8, 32], strides = [1, 1]} : vector<8x128xf32> to vector<8x32xf32>
    %cst_250 = arith.constant 5.000000e-01 : f32
    %642 = vector.broadcast %cst_250 : f32 to vector<8x32xf32>
    %643 = arith.mulf %642, %641 : vector<8x32xf32>
    %cst_251 = arith.constant 5.000000e-01 : f32
    %644 = vector.broadcast %cst_251 : f32 to vector<8x32xf32>
    %645 = arith.addf %644, %643 : vector<8x32xf32>
    %646 = vector.extract_strided_slice %635 {offsets = [0, 64], sizes = [8, 32], strides = [1, 1]} : vector<8x128xf32> to vector<8x32xf32>
    %647 = vector.extract_strided_slice %635 {offsets = [0, 96], sizes = [8, 32], strides = [1, 1]} : vector<8x128xf32> to vector<8x32xf32>
    %cst_252 = arith.constant 5.000000e-01 : f32
    %648 = vector.broadcast %cst_252 : f32 to vector<8x32xf32>
    %649 = arith.mulf %648, %647 : vector<8x32xf32>
    %cst_253 = arith.constant 5.000000e-01 : f32
    %650 = vector.broadcast %cst_253 : f32 to vector<8x32xf32>
    %651 = arith.addf %650, %649 : vector<8x32xf32>
    %652 = arith.mulf %645, %630 : vector<8x32xf32>
    %653 = arith.mulf %640, %646 : vector<8x32xf32>
    %654 = arith.addf %652, %653 : vector<8x32xf32>
    %655 = math.tanh %654 : vector<8x32xf32>
    %656 = arith.mulf %651, %655 : vector<8x32xf32>
    %c128 = arith.constant 128 : index
    %c0_254 = arith.constant 0 : index
    %657 = vector.load %arg17[%c128, %c0_254] : memref<192x32xf32, #tpu.memory_space<vmem>>, vector<8x32xf32>
    tpu.vector_store %arg17[%c128, %c0_254], %656 {strides = array<i32>} : memref<192x32xf32, #tpu.memory_space<vmem>>, vector<8x32xf32>,
    %c128_255 = arith.constant 128 : index
    %c0_256 = arith.constant 0 : index
    %658 = vector.load %arg16[%c128_255, %c0_256] : memref<192x128xf32, #tpu.memory_space<vmem>>, vector<8x128xf32>
    %659 = arith.addf %658, %627 : vector<8x128xf32>
    %cst_257 = arith.constant dense<0.000000e+00> : vector<8x128xf32>
    %660 = tpu.matmul %656, %8, %cst_257 {dimension_numbers = #tpu.dot_dimension_numbers<[1], [0], [0], [1], [0, 0, 1, 1], [], []>} : vector<8x32xf32>, vector<32x128xf32>, vector<8x128xf32> -> vector<8x128xf32>
    %661 = arith.addf %659, %660 : vector<8x128xf32>
    %662 = arith.mulf %661, %17 : vector<8x128xf32>
    %663 = math.tanh %662 : vector<8x128xf32>
    %664 = vector.extract_strided_slice %663 {offsets = [0, 0], sizes = [8, 32], strides = [1, 1]} : vector<8x128xf32> to vector<8x32xf32>
    %cst_258 = arith.constant 5.000000e-01 : f32
    %665 = vector.broadcast %cst_258 : f32 to vector<8x32xf32>
    %666 = arith.mulf %665, %664 : vector<8x32xf32>
    %cst_259 = arith.constant 5.000000e-01 : f32
    %667 = vector.broadcast %cst_259 : f32 to vector<8x32xf32>
    %668 = arith.addf %667, %666 : vector<8x32xf32>
    %669 = vector.extract_strided_slice %663 {offsets = [0, 32], sizes = [8, 32], strides = [1, 1]} : vector<8x128xf32> to vector<8x32xf32>
    %cst_260 = arith.constant 5.000000e-01 : f32
    %670 = vector.broadcast %cst_260 : f32 to vector<8x32xf32>
    %671 = arith.mulf %670, %669 : vector<8x32xf32>
    %cst_261 = arith.constant 5.000000e-01 : f32
    %672 = vector.broadcast %cst_261 : f32 to vector<8x32xf32>
    %673 = arith.addf %672, %671 : vector<8x32xf32>
    %674 = vector.extract_strided_slice %663 {offsets = [0, 64], sizes = [8, 32], strides = [1, 1]} : vector<8x128xf32> to vector<8x32xf32>
    %675 = vector.extract_strided_slice %663 {offsets = [0, 96], sizes = [8, 32], strides = [1, 1]} : vector<8x128xf32> to vector<8x32xf32>
    %cst_262 = arith.constant 5.000000e-01 : f32
    %676 = vector.broadcast %cst_262 : f32 to vector<8x32xf32>
    %677 = arith.mulf %676, %675 : vector<8x32xf32>
    %cst_263 = arith.constant 5.000000e-01 : f32
    %678 = vector.broadcast %cst_263 : f32 to vector<8x32xf32>
    %679 = arith.addf %678, %677 : vector<8x32xf32>
    %680 = arith.mulf %673, %654 : vector<8x32xf32>
    %681 = arith.mulf %668, %674 : vector<8x32xf32>
    %682 = arith.addf %680, %681 : vector<8x32xf32>
    %683 = math.tanh %682 : vector<8x32xf32>
    %684 = arith.mulf %679, %683 : vector<8x32xf32>
    %c136 = arith.constant 136 : index
    %c0_264 = arith.constant 0 : index
    %685 = vector.load %arg17[%c136, %c0_264] : memref<192x32xf32, #tpu.memory_space<vmem>>, vector<8x32xf32>
    tpu.vector_store %arg17[%c136, %c0_264], %684 {strides = array<i32>} : memref<192x32xf32, #tpu.memory_space<vmem>>, vector<8x32xf32>,
    %c136_265 = arith.constant 136 : index
    %c0_266 = arith.constant 0 : index
    %686 = vector.load %arg16[%c136_265, %c0_266] : memref<192x128xf32, #tpu.memory_space<vmem>>, vector<8x128xf32>
    %687 = arith.addf %686, %627 : vector<8x128xf32>
    %cst_267 = arith.constant dense<0.000000e+00> : vector<8x128xf32>
    %688 = tpu.matmul %684, %8, %cst_267 {dimension_numbers = #tpu.dot_dimension_numbers<[1], [0], [0], [1], [0, 0, 1, 1], [], []>} : vector<8x32xf32>, vector<32x128xf32>, vector<8x128xf32> -> vector<8x128xf32>
    %689 = arith.addf %687, %688 : vector<8x128xf32>
    %690 = arith.mulf %689, %17 : vector<8x128xf32>
    %691 = math.tanh %690 : vector<8x128xf32>
    %692 = vector.extract_strided_slice %691 {offsets = [0, 0], sizes = [8, 32], strides = [1, 1]} : vector<8x128xf32> to vector<8x32xf32>
    %cst_268 = arith.constant 5.000000e-01 : f32
    %693 = vector.broadcast %cst_268 : f32 to vector<8x32xf32>
    %694 = arith.mulf %693, %692 : vector<8x32xf32>
    %cst_269 = arith.constant 5.000000e-01 : f32
    %695 = vector.broadcast %cst_269 : f32 to vector<8x32xf32>
    %696 = arith.addf %695, %694 : vector<8x32xf32>
    %697 = vector.extract_strided_slice %691 {offsets = [0, 32], sizes = [8, 32], strides = [1, 1]} : vector<8x128xf32> to vector<8x32xf32>
    %cst_270 = arith.constant 5.000000e-01 : f32
    %698 = vector.broadcast %cst_270 : f32 to vector<8x32xf32>
    %699 = arith.mulf %698, %697 : vector<8x32xf32>
    %cst_271 = arith.constant 5.000000e-01 : f32
    %700 = vector.broadcast %cst_271 : f32 to vector<8x32xf32>
    %701 = arith.addf %700, %699 : vector<8x32xf32>
    %702 = vector.extract_strided_slice %691 {offsets = [0, 64], sizes = [8, 32], strides = [1, 1]} : vector<8x128xf32> to vector<8x32xf32>
    %703 = vector.extract_strided_slice %691 {offsets = [0, 96], sizes = [8, 32], strides = [1, 1]} : vector<8x128xf32> to vector<8x32xf32>
    %cst_272 = arith.constant 5.000000e-01 : f32
    %704 = vector.broadcast %cst_272 : f32 to vector<8x32xf32>
    %705 = arith.mulf %704, %703 : vector<8x32xf32>
    %cst_273 = arith.constant 5.000000e-01 : f32
    %706 = vector.broadcast %cst_273 : f32 to vector<8x32xf32>
    %707 = arith.addf %706, %705 : vector<8x32xf32>
    %708 = arith.mulf %701, %682 : vector<8x32xf32>
    %709 = arith.mulf %696, %702 : vector<8x32xf32>
    %710 = arith.addf %708, %709 : vector<8x32xf32>
    %711 = math.tanh %710 : vector<8x32xf32>
    %712 = arith.mulf %707, %711 : vector<8x32xf32>
    %c144 = arith.constant 144 : index
    %c0_274 = arith.constant 0 : index
    %713 = vector.load %arg17[%c144, %c0_274] : memref<192x32xf32, #tpu.memory_space<vmem>>, vector<8x32xf32>
    tpu.vector_store %arg17[%c144, %c0_274], %712 {strides = array<i32>} : memref<192x32xf32, #tpu.memory_space<vmem>>, vector<8x32xf32>,
    %c144_275 = arith.constant 144 : index
    %c0_276 = arith.constant 0 : index
    %714 = vector.load %arg16[%c144_275, %c0_276] : memref<192x128xf32, #tpu.memory_space<vmem>>, vector<8x128xf32>
    %715 = arith.addf %714, %627 : vector<8x128xf32>
    %cst_277 = arith.constant dense<0.000000e+00> : vector<8x128xf32>
    %716 = tpu.matmul %712, %8, %cst_277 {dimension_numbers = #tpu.dot_dimension_numbers<[1], [0], [0], [1], [0, 0, 1, 1], [], []>} : vector<8x32xf32>, vector<32x128xf32>, vector<8x128xf32> -> vector<8x128xf32>
    %717 = arith.addf %715, %716 : vector<8x128xf32>
    %718 = arith.mulf %717, %17 : vector<8x128xf32>
    %719 = math.tanh %718 : vector<8x128xf32>
    %720 = vector.extract_strided_slice %719 {offsets = [0, 0], sizes = [8, 32], strides = [1, 1]} : vector<8x128xf32> to vector<8x32xf32>
    %cst_278 = arith.constant 5.000000e-01 : f32
    %721 = vector.broadcast %cst_278 : f32 to vector<8x32xf32>
    %722 = arith.mulf %721, %720 : vector<8x32xf32>
    %cst_279 = arith.constant 5.000000e-01 : f32
    %723 = vector.broadcast %cst_279 : f32 to vector<8x32xf32>
    %724 = arith.addf %723, %722 : vector<8x32xf32>
    %725 = vector.extract_strided_slice %719 {offsets = [0, 32], sizes = [8, 32], strides = [1, 1]} : vector<8x128xf32> to vector<8x32xf32>
    %cst_280 = arith.constant 5.000000e-01 : f32
    %726 = vector.broadcast %cst_280 : f32 to vector<8x32xf32>
    %727 = arith.mulf %726, %725 : vector<8x32xf32>
    %cst_281 = arith.constant 5.000000e-01 : f32
    %728 = vector.broadcast %cst_281 : f32 to vector<8x32xf32>
    %729 = arith.addf %728, %727 : vector<8x32xf32>
    %730 = vector.extract_strided_slice %719 {offsets = [0, 64], sizes = [8, 32], strides = [1, 1]} : vector<8x128xf32> to vector<8x32xf32>
    %731 = vector.extract_strided_slice %719 {offsets = [0, 96], sizes = [8, 32], strides = [1, 1]} : vector<8x128xf32> to vector<8x32xf32>
    %cst_282 = arith.constant 5.000000e-01 : f32
    %732 = vector.broadcast %cst_282 : f32 to vector<8x32xf32>
    %733 = arith.mulf %732, %731 : vector<8x32xf32>
    %cst_283 = arith.constant 5.000000e-01 : f32
    %734 = vector.broadcast %cst_283 : f32 to vector<8x32xf32>
    %735 = arith.addf %734, %733 : vector<8x32xf32>
    %736 = arith.mulf %729, %710 : vector<8x32xf32>
    %737 = arith.mulf %724, %730 : vector<8x32xf32>
    %738 = arith.addf %736, %737 : vector<8x32xf32>
    %739 = math.tanh %738 : vector<8x32xf32>
    %740 = arith.mulf %735, %739 : vector<8x32xf32>
    %c152 = arith.constant 152 : index
    %c0_284 = arith.constant 0 : index
    %741 = vector.load %arg17[%c152, %c0_284] : memref<192x32xf32, #tpu.memory_space<vmem>>, vector<8x32xf32>
    tpu.vector_store %arg17[%c152, %c0_284], %740 {strides = array<i32>} : memref<192x32xf32, #tpu.memory_space<vmem>>, vector<8x32xf32>,
    %c152_285 = arith.constant 152 : index
    %c0_286 = arith.constant 0 : index
    %742 = vector.load %arg16[%c152_285, %c0_286] : memref<192x128xf32, #tpu.memory_space<vmem>>, vector<8x128xf32>
    %743 = arith.addf %742, %627 : vector<8x128xf32>
    %cst_287 = arith.constant dense<0.000000e+00> : vector<8x128xf32>
    %744 = tpu.matmul %740, %8, %cst_287 {dimension_numbers = #tpu.dot_dimension_numbers<[1], [0], [0], [1], [0, 0, 1, 1], [], []>} : vector<8x32xf32>, vector<32x128xf32>, vector<8x128xf32> -> vector<8x128xf32>
    %745 = arith.addf %743, %744 : vector<8x128xf32>
    %746 = arith.mulf %745, %17 : vector<8x128xf32>
    %747 = math.tanh %746 : vector<8x128xf32>
    %748 = vector.extract_strided_slice %747 {offsets = [0, 0], sizes = [8, 32], strides = [1, 1]} : vector<8x128xf32> to vector<8x32xf32>
    %cst_288 = arith.constant 5.000000e-01 : f32
    %749 = vector.broadcast %cst_288 : f32 to vector<8x32xf32>
    %750 = arith.mulf %749, %748 : vector<8x32xf32>
    %cst_289 = arith.constant 5.000000e-01 : f32
    %751 = vector.broadcast %cst_289 : f32 to vector<8x32xf32>
    %752 = arith.addf %751, %750 : vector<8x32xf32>
    %753 = vector.extract_strided_slice %747 {offsets = [0, 32], sizes = [8, 32], strides = [1, 1]} : vector<8x128xf32> to vector<8x32xf32>
    %cst_290 = arith.constant 5.000000e-01 : f32
    %754 = vector.broadcast %cst_290 : f32 to vector<8x32xf32>
    %755 = arith.mulf %754, %753 : vector<8x32xf32>
    %cst_291 = arith.constant 5.000000e-01 : f32
    %756 = vector.broadcast %cst_291 : f32 to vector<8x32xf32>
    %757 = arith.addf %756, %755 : vector<8x32xf32>
    %758 = vector.extract_strided_slice %747 {offsets = [0, 64], sizes = [8, 32], strides = [1, 1]} : vector<8x128xf32> to vector<8x32xf32>
    %759 = vector.extract_strided_slice %747 {offsets = [0, 96], sizes = [8, 32], strides = [1, 1]} : vector<8x128xf32> to vector<8x32xf32>
    %cst_292 = arith.constant 5.000000e-01 : f32
    %760 = vector.broadcast %cst_292 : f32 to vector<8x32xf32>
    %761 = arith.mulf %760, %759 : vector<8x32xf32>
    %cst_293 = arith.constant 5.000000e-01 : f32
    %762 = vector.broadcast %cst_293 : f32 to vector<8x32xf32>
    %763 = arith.addf %762, %761 : vector<8x32xf32>
    %764 = arith.mulf %757, %738 : vector<8x32xf32>
    %765 = arith.mulf %752, %758 : vector<8x32xf32>
    %766 = arith.addf %764, %765 : vector<8x32xf32>
    %767 = math.tanh %766 : vector<8x32xf32>
    %768 = arith.mulf %763, %767 : vector<8x32xf32>
    %c160 = arith.constant 160 : index
    %c0_294 = arith.constant 0 : index
    %769 = vector.load %arg17[%c160, %c0_294] : memref<192x32xf32, #tpu.memory_space<vmem>>, vector<8x32xf32>
    tpu.vector_store %arg17[%c160, %c0_294], %768 {strides = array<i32>} : memref<192x32xf32, #tpu.memory_space<vmem>>, vector<8x32xf32>,
    %c160_295 = arith.constant 160 : index
    %c0_296 = arith.constant 0 : index
    %770 = vector.load %arg16[%c160_295, %c0_296] : memref<192x128xf32, #tpu.memory_space<vmem>>, vector<8x128xf32>
    %771 = arith.addf %770, %627 : vector<8x128xf32>
    %cst_297 = arith.constant dense<0.000000e+00> : vector<8x128xf32>
    %772 = tpu.matmul %768, %8, %cst_297 {dimension_numbers = #tpu.dot_dimension_numbers<[1], [0], [0], [1], [0, 0, 1, 1], [], []>} : vector<8x32xf32>, vector<32x128xf32>, vector<8x128xf32> -> vector<8x128xf32>
    %773 = arith.addf %771, %772 : vector<8x128xf32>
    %774 = arith.mulf %773, %17 : vector<8x128xf32>
    %775 = math.tanh %774 : vector<8x128xf32>
    %776 = vector.extract_strided_slice %775 {offsets = [0, 0], sizes = [8, 32], strides = [1, 1]} : vector<8x128xf32> to vector<8x32xf32>
    %cst_298 = arith.constant 5.000000e-01 : f32
    %777 = vector.broadcast %cst_298 : f32 to vector<8x32xf32>
    %778 = arith.mulf %777, %776 : vector<8x32xf32>
    %cst_299 = arith.constant 5.000000e-01 : f32
    %779 = vector.broadcast %cst_299 : f32 to vector<8x32xf32>
    %780 = arith.addf %779, %778 : vector<8x32xf32>
    %781 = vector.extract_strided_slice %775 {offsets = [0, 32], sizes = [8, 32], strides = [1, 1]} : vector<8x128xf32> to vector<8x32xf32>
    %cst_300 = arith.constant 5.000000e-01 : f32
    %782 = vector.broadcast %cst_300 : f32 to vector<8x32xf32>
    %783 = arith.mulf %782, %781 : vector<8x32xf32>
    %cst_301 = arith.constant 5.000000e-01 : f32
    %784 = vector.broadcast %cst_301 : f32 to vector<8x32xf32>
    %785 = arith.addf %784, %783 : vector<8x32xf32>
    %786 = vector.extract_strided_slice %775 {offsets = [0, 64], sizes = [8, 32], strides = [1, 1]} : vector<8x128xf32> to vector<8x32xf32>
    %787 = vector.extract_strided_slice %775 {offsets = [0, 96], sizes = [8, 32], strides = [1, 1]} : vector<8x128xf32> to vector<8x32xf32>
    %cst_302 = arith.constant 5.000000e-01 : f32
    %788 = vector.broadcast %cst_302 : f32 to vector<8x32xf32>
    %789 = arith.mulf %788, %787 : vector<8x32xf32>
    %cst_303 = arith.constant 5.000000e-01 : f32
    %790 = vector.broadcast %cst_303 : f32 to vector<8x32xf32>
    %791 = arith.addf %790, %789 : vector<8x32xf32>
    %792 = arith.mulf %785, %766 : vector<8x32xf32>
    %793 = arith.mulf %780, %786 : vector<8x32xf32>
    %794 = arith.addf %792, %793 : vector<8x32xf32>
    %795 = math.tanh %794 : vector<8x32xf32>
    %796 = arith.mulf %791, %795 : vector<8x32xf32>
    %c168 = arith.constant 168 : index
    %c0_304 = arith.constant 0 : index
    %797 = vector.load %arg17[%c168, %c0_304] : memref<192x32xf32, #tpu.memory_space<vmem>>, vector<8x32xf32>
    tpu.vector_store %arg17[%c168, %c0_304], %796 {strides = array<i32>} : memref<192x32xf32, #tpu.memory_space<vmem>>, vector<8x32xf32>,
    %c168_305 = arith.constant 168 : index
    %c0_306 = arith.constant 0 : index
    %798 = vector.load %arg16[%c168_305, %c0_306] : memref<192x128xf32, #tpu.memory_space<vmem>>, vector<8x128xf32>
    %799 = arith.addf %798, %627 : vector<8x128xf32>
    %cst_307 = arith.constant dense<0.000000e+00> : vector<8x128xf32>
    %800 = tpu.matmul %796, %8, %cst_307 {dimension_numbers = #tpu.dot_dimension_numbers<[1], [0], [0], [1], [0, 0, 1, 1], [], []>} : vector<8x32xf32>, vector<32x128xf32>, vector<8x128xf32> -> vector<8x128xf32>
    %801 = arith.addf %799, %800 : vector<8x128xf32>
    %802 = arith.mulf %801, %17 : vector<8x128xf32>
    %803 = math.tanh %802 : vector<8x128xf32>
    %804 = vector.extract_strided_slice %803 {offsets = [0, 0], sizes = [8, 32], strides = [1, 1]} : vector<8x128xf32> to vector<8x32xf32>
    %cst_308 = arith.constant 5.000000e-01 : f32
    %805 = vector.broadcast %cst_308 : f32 to vector<8x32xf32>
    %806 = arith.mulf %805, %804 : vector<8x32xf32>
    %cst_309 = arith.constant 5.000000e-01 : f32
    %807 = vector.broadcast %cst_309 : f32 to vector<8x32xf32>
    %808 = arith.addf %807, %806 : vector<8x32xf32>
    %809 = vector.extract_strided_slice %803 {offsets = [0, 32], sizes = [8, 32], strides = [1, 1]} : vector<8x128xf32> to vector<8x32xf32>
    %cst_310 = arith.constant 5.000000e-01 : f32
    %810 = vector.broadcast %cst_310 : f32 to vector<8x32xf32>
    %811 = arith.mulf %810, %809 : vector<8x32xf32>
    %cst_311 = arith.constant 5.000000e-01 : f32
    %812 = vector.broadcast %cst_311 : f32 to vector<8x32xf32>
    %813 = arith.addf %812, %811 : vector<8x32xf32>
    %814 = vector.extract_strided_slice %803 {offsets = [0, 64], sizes = [8, 32], strides = [1, 1]} : vector<8x128xf32> to vector<8x32xf32>
    %815 = vector.extract_strided_slice %803 {offsets = [0, 96], sizes = [8, 32], strides = [1, 1]} : vector<8x128xf32> to vector<8x32xf32>
    %cst_312 = arith.constant 5.000000e-01 : f32
    %816 = vector.broadcast %cst_312 : f32 to vector<8x32xf32>
    %817 = arith.mulf %816, %815 : vector<8x32xf32>
    %cst_313 = arith.constant 5.000000e-01 : f32
    %818 = vector.broadcast %cst_313 : f32 to vector<8x32xf32>
    %819 = arith.addf %818, %817 : vector<8x32xf32>
    %820 = arith.mulf %813, %794 : vector<8x32xf32>
    %821 = arith.mulf %808, %814 : vector<8x32xf32>
    %822 = arith.addf %820, %821 : vector<8x32xf32>
    %823 = math.tanh %822 : vector<8x32xf32>
    %824 = arith.mulf %819, %823 : vector<8x32xf32>
    %c176 = arith.constant 176 : index
    %c0_314 = arith.constant 0 : index
    %825 = vector.load %arg17[%c176, %c0_314] : memref<192x32xf32, #tpu.memory_space<vmem>>, vector<8x32xf32>
    tpu.vector_store %arg17[%c176, %c0_314], %824 {strides = array<i32>} : memref<192x32xf32, #tpu.memory_space<vmem>>, vector<8x32xf32>,
    %c176_315 = arith.constant 176 : index
    %c0_316 = arith.constant 0 : index
    %826 = vector.load %arg16[%c176_315, %c0_316] : memref<192x128xf32, #tpu.memory_space<vmem>>, vector<8x128xf32>
    %827 = arith.addf %826, %627 : vector<8x128xf32>
    %cst_317 = arith.constant dense<0.000000e+00> : vector<8x128xf32>
    %828 = tpu.matmul %824, %8, %cst_317 {dimension_numbers = #tpu.dot_dimension_numbers<[1], [0], [0], [1], [0, 0, 1, 1], [], []>} : vector<8x32xf32>, vector<32x128xf32>, vector<8x128xf32> -> vector<8x128xf32>
    %829 = arith.addf %827, %828 : vector<8x128xf32>
    %830 = arith.mulf %829, %17 : vector<8x128xf32>
    %831 = math.tanh %830 : vector<8x128xf32>
    %832 = vector.extract_strided_slice %831 {offsets = [0, 0], sizes = [8, 32], strides = [1, 1]} : vector<8x128xf32> to vector<8x32xf32>
    %cst_318 = arith.constant 5.000000e-01 : f32
    %833 = vector.broadcast %cst_318 : f32 to vector<8x32xf32>
    %834 = arith.mulf %833, %832 : vector<8x32xf32>
    %cst_319 = arith.constant 5.000000e-01 : f32
    %835 = vector.broadcast %cst_319 : f32 to vector<8x32xf32>
    %836 = arith.addf %835, %834 : vector<8x32xf32>
    %837 = vector.extract_strided_slice %831 {offsets = [0, 32], sizes = [8, 32], strides = [1, 1]} : vector<8x128xf32> to vector<8x32xf32>
    %cst_320 = arith.constant 5.000000e-01 : f32
    %838 = vector.broadcast %cst_320 : f32 to vector<8x32xf32>
    %839 = arith.mulf %838, %837 : vector<8x32xf32>
    %cst_321 = arith.constant 5.000000e-01 : f32
    %840 = vector.broadcast %cst_321 : f32 to vector<8x32xf32>
    %841 = arith.addf %840, %839 : vector<8x32xf32>
    %842 = vector.extract_strided_slice %831 {offsets = [0, 64], sizes = [8, 32], strides = [1, 1]} : vector<8x128xf32> to vector<8x32xf32>
    %843 = vector.extract_strided_slice %831 {offsets = [0, 96], sizes = [8, 32], strides = [1, 1]} : vector<8x128xf32> to vector<8x32xf32>
    %cst_322 = arith.constant 5.000000e-01 : f32
    %844 = vector.broadcast %cst_322 : f32 to vector<8x32xf32>
    %845 = arith.mulf %844, %843 : vector<8x32xf32>
    %cst_323 = arith.constant 5.000000e-01 : f32
    %846 = vector.broadcast %cst_323 : f32 to vector<8x32xf32>
    %847 = arith.addf %846, %845 : vector<8x32xf32>
    %848 = arith.mulf %841, %822 : vector<8x32xf32>
    %849 = arith.mulf %836, %842 : vector<8x32xf32>
    %850 = arith.addf %848, %849 : vector<8x32xf32>
    %851 = math.tanh %850 : vector<8x32xf32>
    %852 = arith.mulf %847, %851 : vector<8x32xf32>
    %c184 = arith.constant 184 : index
    %c0_324 = arith.constant 0 : index
    %853 = vector.load %arg17[%c184, %c0_324] : memref<192x32xf32, #tpu.memory_space<vmem>>, vector<8x32xf32>
    tpu.vector_store %arg17[%c184, %c0_324], %852 {strides = array<i32>} : memref<192x32xf32, #tpu.memory_space<vmem>>, vector<8x32xf32>,
    %c0_325 = arith.constant 0 : index
    %c0_326 = arith.constant 0 : index
    %854 = vector.load %arg17[%c0_325, %c0_326] : memref<192x32xf32, #tpu.memory_space<vmem>>, vector<192x32xf32>
    %c0_327 = arith.constant 0 : index
    %c0_328 = arith.constant 0 : index
    %855 = vector.load %arg13[%c0_327, %c0_328] : memref<32x32xf32, #tpu.memory_space<vmem>>, vector<32x32xf32>
    %cst_329 = arith.constant dense<0.000000e+00> : vector<192x32xf32>
    %856 = tpu.matmul %854, %855, %cst_329 {dimension_numbers = #tpu.dot_dimension_numbers<[1], [0], [0], [1], [0, 0, 1, 1], [], []>} : vector<192x32xf32>, vector<32x32xf32>, vector<192x32xf32> -> vector<192x32xf32>
    %c0_330 = arith.constant 0 : index
    %c0_331 = arith.constant 0 : index
    %857 = vector.load %arg14[%c0_330, %c0_331] : memref<1x32xf32, #tpu.memory_space<vmem>>, vector<1x32xf32>
    %858 = vector.broadcast %857 : vector<1x32xf32> to vector<192x32xf32>
    %859 = arith.addf %856, %858 : vector<192x32xf32>
    %c0_332 = arith.constant 0 : index
    %c0_333 = arith.constant 0 : index
    %860 = vector.load %arg15[%c0_332, %c0_333] : memref<192x32xf32, #tpu.memory_space<vmem>>, vector<192x32xf32>
    tpu.vector_store %arg15[%c0_332, %c0_333], %859 {strides = array<i32>} : memref<192x32xf32, #tpu.memory_space<vmem>>, vector<192x32xf32>,
    return
  }
}

</mosaic_0001>

<llo_original>
// kernel: tpu_custom_call.1
$region0: #{tpu_custom_call.1}
  #allocation0 [shape = 'u32[]', space=smem, size = 0x4, offset = 0x4, fixed_abs, tag = 'smem constant byte address 0x4 - core index']
  #allocation1 [shape = 'u32[144,128]{1,0:T(1,128)}', space=vmem, size = 0x12000, scoped, tag = 'internal scratch']
  #allocation2 [shape = 'f32[192,128]{1,0:T(8,128)}', space=vmem, size = 0x18000, scoped, tag = 'scratch operand']
  #allocation3 [shape = 'f32[192,32]{1,0:T(8,128)}', space=vmem, size = 0x18000, scoped, tag = 'scratch operand']
  %s0 = inlined_call_operand.vmem [shape: f32[24,32], index: 0, kind: input, shape index: {}]
  %s1 = inlined_call_operand.vmem [shape: f32[192,32], index: 1, kind: input, shape index: {}]
  %s2 = inlined_call_operand.vmem [shape: f32[192,32], index: 2, kind: input, shape index: {}]
  %s3 = inlined_call_operand.vmem [shape: f32[32,96], index: 3, kind: input, shape index: {}]
  %s4 = inlined_call_operand.vmem [shape: f32[8,96], index: 4, kind: input, shape index: {}]
  %s5 = inlined_call_operand.vmem [shape: f32[32,128], index: 5, kind: input, shape index: {}]
  %s6 = inlined_call_operand.vmem [shape: f32[32,128], index: 6, kind: input, shape index: {}]
  %s7 = inlined_call_operand.vmem [shape: f32[32,128], index: 7, kind: input, shape index: {}]
  %s8 = inlined_call_operand.vmem [shape: f32[8,128], index: 8, kind: input, shape index: {}]
  %s9 = inlined_call_operand.vmem [shape: f32[32,320], index: 9, kind: input, shape index: {}]
  %s10 = inlined_call_operand.vmem [shape: f32[8,320], index: 10, kind: input, shape index: {}]
  %s11 = inlined_call_operand.vmem [shape: f32[32,128], index: 11, kind: input, shape index: {}]
  %s12 = inlined_call_operand.vmem [shape: f32[32,128], index: 12, kind: input, shape index: {}]
  %s13 = inlined_call_operand.vmem [shape: f32[32,32], index: 13, kind: input, shape index: {}]
  %s14 = inlined_call_operand.vmem [shape: f32[1,32], index: 14, kind: input, shape index: {}]
  %s15 = inlined_call_operand.vmem [shape: f32[192,32], index: 15, kind: output, shape index: {}]
  %s16 = sld [smem:[#allocation0]]
  $region70: #{tpu_custom_call.1} parent=0
    _
  %s18 = ssub.s32 1, %s16
  %s19 = scalar_select 0, %s18, %s16
  // Predicated region
  $region2: #{tpu_custom_call.1} parent=0 // pred_check
    _
  $region3: #{tpu_custom_call.1} parent=0 // pred_check_branch
    %21 = sbr.rel (0) target = $region5
  $region4: #{tpu_custom_call.1} parent=0 // pred_region
    _
  $region5: #{tpu_custom_call.1} parent=0 // pred_fallthru
    _
  // Predicated region
  $region6: #{tpu_custom_call.1} parent=0 // pred_check
    _
  $region7: #{tpu_custom_call.1} parent=0 // pred_check_branch
    %23 = sbr.rel (0) target = $region9
  $region8: #{tpu_custom_call.1} parent=0 // pred_region
    _
  $region9: #{tpu_custom_call.1} parent=0 // pred_fallthru
    _
  // Predicated region
  $region10: #{tpu_custom_call.1} parent=0 // pred_check
    _
  $region11: #{tpu_custom_call.1} parent=0 // pred_check_branch
    %25 = sbr.rel (0) target = $region13
  $region12: #{tpu_custom_call.1} parent=0 // pred_region
    _
  $region13: #{tpu_custom_call.1} parent=0 // pred_fallthru
    _
  // Predicated region
  $region14: #{tpu_custom_call.1} parent=0 // pred_check
    _
  $region15: #{tpu_custom_call.1} parent=0 // pred_check_branch
    %27 = sbr.rel (0) target = $region17
  $region16: #{tpu_custom_call.1} parent=0 // pred_region
    _
  $region17: #{tpu_custom_call.1} parent=0 // pred_fallthru
    _
  // Predicated region
  $region18: #{tpu_custom_call.1} parent=0 // pred_check
    _
  $region19: #{tpu_custom_call.1} parent=0 // pred_check_branch
    %29 = sbr.rel (0) target = $region21
  $region20: #{tpu_custom_call.1} parent=0 // pred_region
    _
  $region21: #{tpu_custom_call.1} parent=0 // pred_fallthru
    _
  // Predicated region
  $region22: #{tpu_custom_call.1} parent=0 // pred_check
    _
  $region23: #{tpu_custom_call.1} parent=0 // pred_check_branch
    %31 = sbr.rel (0) target = $region25
  $region24: #{tpu_custom_call.1} parent=0 // pred_region
    _
  $region25: #{tpu_custom_call.1} parent=0 // pred_fallthru
    _
  // Predicated region
  $region26: #{tpu_custom_call.1} parent=0 // pred_check
    _
  $region27: #{tpu_custom_call.1} parent=0 // pred_check_branch
    %33 = sbr.rel (0) target = $region29
  $region28: #{tpu_custom_call.1} parent=0 // pred_region
    _
  $region29: #{tpu_custom_call.1} parent=0 // pred_fallthru
    _
  // Predicated region
  $region30: #{tpu_custom_call.1} parent=0 // pred_check
    _
  $region31: #{tpu_custom_call.1} parent=0 // pred_check_branch
    %35 = sbr.rel (0) target = $region33
  $region32: #{tpu_custom_call.1} parent=0 // pred_region
    _
  $region33: #{tpu_custom_call.1} parent=0 // pred_fallthru
    _
  // Predicated region
  $region34: #{tpu_custom_call.1} parent=0 // pred_check
    _
  $region35: #{tpu_custom_call.1} parent=0 // pred_check_branch
    %37 = sbr.rel (0) target = $region37
  $region36: #{tpu_custom_call.1} parent=0 // pred_region
    _
  $region37: #{tpu_custom_call.1} parent=0 // pred_fallthru
    _
  // Predicated region
  $region38: #{tpu_custom_call.1} parent=0 // pred_check
    _
  $region39: #{tpu_custom_call.1} parent=0 // pred_check_branch
    %39 = sbr.rel (0) target = $region41
  $region40: #{tpu_custom_call.1} parent=0 // pred_region
    _
  $region41: #{tpu_custom_call.1} parent=0 // pred_fallthru
    _
  // Predicated region
  $region42: #{tpu_custom_call.1} parent=0 // pred_check
    _
  $region43: #{tpu_custom_call.1} parent=0 // pred_check_branch
    %41 = sbr.rel (0) target = $region45
  $region44: #{tpu_custom_call.1} parent=0 // pred_region
    _
  $region45: #{tpu_custom_call.1} parent=0 // pred_fallthru
    _
  // Predicated region
  $region46: #{tpu_custom_call.1} parent=0 // pred_check
    _
  $region47: #{tpu_custom_call.1} parent=0 // pred_check_branch
    %43 = sbr.rel (0) target = $region49
  $region48: #{tpu_custom_call.1} parent=0 // pred_region
    _
  $region49: #{tpu_custom_call.1} parent=0 // pred_fallthru
    _
  // Predicated region
  $region50: #{tpu_custom_call.1} parent=0 // pred_check
    _
  $region51: #{tpu_custom_call.1} parent=0 // pred_check_branch
    %45 = sbr.rel (0) target = $region53
  $region52: #{tpu_custom_call.1} parent=0 // pred_region
    _
  $region53: #{tpu_custom_call.1} parent=0 // pred_fallthru
    _
  // Predicated region
  $region54: #{tpu_custom_call.1} parent=0 // pred_check
    _
  $region55: #{tpu_custom_call.1} parent=0 // pred_check_branch
    %47 = sbr.rel (0) target = $region57
  $region56: #{tpu_custom_call.1} parent=0 // pred_region
    _
  $region57: #{tpu_custom_call.1} parent=0 // pred_fallthru
    _
  // Predicated region
  $region58: #{tpu_custom_call.1} parent=0 // pred_check
    _
  $region59: #{tpu_custom_call.1} parent=0 // pred_check_branch
    %49 = sbr.rel (0) target = $region61
  $region60: #{tpu_custom_call.1} parent=0 // pred_region
    _
  $region61: #{tpu_custom_call.1} parent=0 // pred_fallthru
    _
  %v50 = vld [vmem:[%s0] sm:$0xff]
  %v51 = vld [vmem:[%s0 + $0x8] sm:$0xff]
  %v52 = vld [vmem:[%s0 + $0x10] sm:$0xff]
  %v53 = vld [vmem:[%s3] sm:$0xff]
  %v54 = vld [vmem:[%s3 + $0x8] sm:$0xff]
  %v55 = vld [vmem:[%s3 + $0x10] sm:$0xff]
  %v56 = vld [vmem:[%s3 + $0x18] sm:$0xff]
  %v57 = vld [vmem:[%s4] sm:$0xff]
  %v58 = vld [vmem:[%s6] sm:$0xff]
  %v59 = vld [vmem:[%s6 + $0x8] sm:$0xff]
  %v60 = vld [vmem:[%s6 + $0x10] sm:$0xff]
  %v61 = vld [vmem:[%s6 + $0x18] sm:$0xff]
  %v62 = vld [vmem:[%s7] sm:$0xff]
  %v63 = vld [vmem:[%s7 + $0x8] sm:$0xff]
  %v64 = vld [vmem:[%s7 + $0x10] sm:$0xff]
  %v65 = vld [vmem:[%s7 + $0x18] sm:$0xff]
  %v66 = vld [vmem:[%s8] sm:$0xff]
  %v67 = vld [vmem:[%s9] sm:$0xff]
  %v68 = vld [vmem:[%s9 + $0x8] sm:$0xff]
  %v69 = vld [vmem:[%s9 + $0x10] sm:$0xff]
  %v70 = vld [vmem:[%s9 + $0x18] sm:$0xff]
  %v71 = vld [vmem:[%s9 + $0x20] sm:$0xff]
  %v72 = vld [vmem:[%s9 + $0x28] sm:$0xff]
  %v73 = vld [vmem:[%s9 + $0x30] sm:$0xff]
  %v74 = vld [vmem:[%s9 + $0x38] sm:$0xff]
  %v75 = vld [vmem:[%s9 + $0x40] sm:$0xff]
  %v76 = vld [vmem:[%s9 + $0x48] sm:$0xff]
  %v77 = vld [vmem:[%s9 + $0x50] sm:$0xff]
  %v78 = vld [vmem:[%s9 + $0x58] sm:$0xff]
  %v79 = vld [vmem:[%s10] sm:$0xff]
  %v80 = vld [vmem:[%s10 + $0x8] sm:$0xff]
  %v81 = vld [vmem:[%s10 + $0x10] sm:$0xff]
  %v82 = vld [vmem:[%s12] sm:$0xff]
  %v83 = vld [vmem:[%s12 + $0x8] sm:$0xff]
  %v84 = vld [vmem:[%s12 + $0x10] sm:$0xff]
  %v85 = vld [vmem:[%s12 + $0x18] sm:$0xff]
  %v86 = vlaneseq
  %v87 = vand.u32 %v86, 127
  %vm88 = vcmp.ge.s32.totalorder %v87, 64
  %vm89 = vcmp.lt.s32.totalorder %v87, 96
  %vm90 = vmand %vm88, %vm89
  %v91 = vsel %vm90, 1.0, 0.5
  %v92 = vld [vmem:[%s1] sm:$0xff]
  %v93 = vld [vmem:[%s1 + $0x8] sm:$0xff]
  %v94 = vld [vmem:[%s1 + $0x10] sm:$0xff]
  %v95 = vld [vmem:[%s1 + $0x18] sm:$0xff]
  %v96 = vld [vmem:[%s1 + $0x20] sm:$0xff]
  %v97 = vld [vmem:[%s1 + $0x28] sm:$0xff]
  %v98 = vld [vmem:[%s1 + $0x30] sm:$0xff]
  %v99 = vld [vmem:[%s1 + $0x38] sm:$0xff]
  %v100 = vld [vmem:[%s1 + $0x40] sm:$0xff]
  %v101 = vld [vmem:[%s1 + $0x48] sm:$0xff]
  %v102 = vld [vmem:[%s1 + $0x50] sm:$0xff]
  %v103 = vld [vmem:[%s1 + $0x58] sm:$0xff]
  %v104 = vld [vmem:[%s1 + $0x60] sm:$0xff]
  %v105 = vld [vmem:[%s1 + $0x68] sm:$0xff]
  %v106 = vld [vmem:[%s1 + $0x70] sm:$0xff]
  %v107 = vld [vmem:[%s1 + $0x78] sm:$0xff]
  %v108 = vld [vmem:[%s1 + $0x80] sm:$0xff]
  %v109 = vld [vmem:[%s1 + $0x88] sm:$0xff]
  %v110 = vld [vmem:[%s1 + $0x90] sm:$0xff]
  %v111 = vld [vmem:[%s1 + $0x98] sm:$0xff]
  %v112 = vld [vmem:[%s1 + $0xa0] sm:$0xff]
  %v113 = vld [vmem:[%s1 + $0xa8] sm:$0xff]
  %v114 = vld [vmem:[%s1 + $0xb0] sm:$0xff]
  %v115 = vld [vmem:[%s1 + $0xb8] sm:$0xff]
  %v116 = vld [vmem:[%s11] sm:$0xff]
  %v117 = vld [vmem:[%s11 + $0x8] sm:$0xff]
  %v118 = vld [vmem:[%s11 + $0x10] sm:$0xff]
  %v119 = vld [vmem:[%s11 + $0x18] sm:$0xff]
  %vm120 = vcmask 261120
  %v122 = vsel %vm120, %v92, 0
  %v125 = vsel %vm120, %v93, 0
  %v128 = vsel %vm120, %v94, 0
  %v131 = vsel %vm120, %v95, 0
  %v134 = vsel %vm120, %v96, 0
  %v137 = vsel %vm120, %v97, 0
  %v140 = vsel %vm120, %v98, 0
  %v143 = vsel %vm120, %v99, 0
  %v146 = vsel %vm120, %v100, 0
  %v149 = vsel %vm120, %v101, 0
  %v152 = vsel %vm120, %v102, 0
  %v155 = vsel %vm120, %v103, 0
  %v158 = vsel %vm120, %v104, 0
  %v161 = vsel %vm120, %v105, 0
  %v164 = vsel %vm120, %v106, 0
  %v167 = vsel %vm120, %v107, 0
  %v170 = vsel %vm120, %v108, 0
  %v173 = vsel %vm120, %v109, 0
  %v176 = vsel %vm120, %v110, 0
  %v179 = vsel %vm120, %v111, 0
  %v182 = vsel %vm120, %v112, 0
  %v185 = vsel %vm120, %v113, 0
  %v188 = vsel %vm120, %v114, 0
  %v191 = vsel %vm120, %v115, 0
  %193 = vmatprep.subr.mxu0 0.0
  %194 = vmatpush1.msra.mxu0 0.0
  %195 = vmatprep.subr.mxu0 0.0
  %196 = vmatpush1.msra.mxu0 0.0
  %197 = vmatprep.subr.mxu0 0.0
  %198 = vmatpush1.msra.mxu0 0.0
  %199 = vmatprep.subr.mxu0 0.0
  %200 = vmatpush1.msra.mxu0 0.0
  %201 = vmatprep.subr.mxu0 0.0
  %202 = vmatpush1.msra.mxu0 0.0
  %203 = vmatprep.subr.mxu0 0.0
  %204 = vmatpush1.msra.mxu0 0.0
  %205 = vmatprep.subr.mxu0 0.0
  %206 = vmatpush1.msra.mxu0 0.0
  %207 = vmatprep.subr.mxu0 0.0
  %208 = vmatpush1.msra.mxu0 0.0
  %209 = vmatprep.subr.mxu0 0.0
  %210 = vmatpush1.msra.mxu0 0.0
  %211 = vmatprep.subr.mxu0 0.0
  %212 = vmatpush1.msra.mxu0 0.0
  %213 = vmatprep.subr.mxu0 0.0
  %214 = vmatpush1.msra.mxu0 0.0
  %215 = vmatprep.subr.mxu0 0.0
  %216 = vmatpush1.msra.mxu0 0.0
  %217 = vmatprep.subr.mxu0 0.0
  %218 = vmatpush1.msra.mxu0 %v119
  %219 = vmatprep.subr.mxu0 0.0
  %220 = vmatpush1.msra.mxu0 %v118
  %221 = vmatprep.subr.mxu0 0.0
  %222 = vmatpush1.msra.mxu0 %v117
  %223 = vmatprep.subr.mxu0 0.0
  %224 = vmatpush1.msra.mxu0 %v116
  %225 = vmatprep.subr.mxu0 0.0
  %226 = vmatpush2.msra.mxu0 0.0
  %227 = vmatprep.subr.mxu0 0.0
  %228 = vmatpush2.msra.mxu0 0.0
  %229 = vmatprep.subr.mxu0 0.0
  %230 = vmatpush2.msra.mxu0 0.0
  %231 = vmatprep.subr.mxu0 0.0
  %232 = vmatpush2.msra.mxu0 0.0
  %233 = vmatprep.subr.mxu0 0.0
  %234 = vmatpush2.msra.mxu0 0.0
  %235 = vmatprep.subr.mxu0 0.0
  %236 = vmatpush2.msra.mxu0 0.0
  %237 = vmatprep.subr.mxu0 0.0
  %238 = vmatpush2.msra.mxu0 0.0
  %239 = vmatprep.subr.mxu0 0.0
  %240 = vmatpush2.msra.mxu0 0.0
  %241 = vmatprep.subr.mxu0 0.0
  %242 = vmatpush2.msra.mxu0 0.0
  %243 = vmatprep.subr.mxu0 0.0
  %244 = vmatpush2.msra.mxu0 0.0
  %245 = vmatprep.subr.mxu0 0.0
  %246 = vmatpush2.msra.mxu0 0.0
  %247 = vmatprep.subr.mxu0 0.0
  %248 = vmatpush2.msra.mxu0 0.0
  %249 = vmatprep.subr.mxu0 0.0
  %250 = vmatpush2.msra.mxu0 0.0
  %251 = vmatprep.subr.mxu0 0.0
  %252 = vmatpush2.msra.mxu0 0.0
  %253 = vmatprep.subr.mxu0 0.0
  %254 = vmatpush2.msra.mxu0 0.0
  %255 = vmatprep.subr.mxu0 0.0
  %256 = vmatpush2.msra.mxu0 0.0
  %257 = vmatprep.mubr.f32.mxu0 0.0
  %258 = vmatmul.mubr.f32.gmra.mxu0 %v122
  %v259 = vpop.f32.mrf.mxu0
  %v260 = vadd.f32 0.0, %v259
  %v261 = vpop.f32.mrf.mxu0
  %262 = vmatprep.mubr.f32.mxu0 0.0
  %263 = vmatmul.mubr.f32.gmra.mxu0 %v125
  %v264 = vpop.f32.mrf.mxu0
  %v265 = vadd.f32 0.0, %v264
  %v266 = vpop.f32.mrf.mxu0
  %267 = vmatprep.mubr.f32.mxu0 0.0
  %268 = vmatmul.mubr.f32.gmra.mxu0 %v128
  %v269 = vpop.f32.mrf.mxu0
  %v270 = vadd.f32 0.0, %v269
  %v271 = vpop.f32.mrf.mxu0
  %272 = vmatprep.mubr.f32.mxu0 0.0
  %273 = vmatmul.mubr.f32.gmra.mxu0 %v131
  %v274 = vpop.f32.mrf.mxu0
  %v275 = vadd.f32 0.0, %v274
  %v276 = vpop.f32.mrf.mxu0
  %277 = vmatprep.mubr.f32.mxu0 0.0
  %278 = vmatmul.mubr.f32.gmra.mxu0 %v134
  %v279 = vpop.f32.mrf.mxu0
  %v280 = vadd.f32 0.0, %v279
  %v281 = vpop.f32.mrf.mxu0
  %282 = vmatprep.mubr.f32.mxu0 0.0
  %283 = vmatmul.mubr.f32.gmra.mxu0 %v137
  %v284 = vpop.f32.mrf.mxu0
  %v285 = vadd.f32 0.0, %v284
  %v286 = vpop.f32.mrf.mxu0
  %287 = vmatprep.mubr.f32.mxu0 0.0
  %288 = vmatmul.mubr.f32.gmra.mxu0 %v140
  %v289 = vpop.f32.mrf.mxu0
  %v290 = vadd.f32 0.0, %v289
  %v291 = vpop.f32.mrf.mxu0
  %292 = vmatprep.mubr.f32.mxu0 0.0
  %293 = vmatmul.mubr.f32.gmra.mxu0 %v143
  %v294 = vpop.f32.mrf.mxu0
  %v295 = vadd.f32 0.0, %v294
  %v296 = vpop.f32.mrf.mxu0
  %297 = vmatprep.mubr.f32.mxu0 0.0
  %298 = vmatmul.mubr.f32.gmra.mxu0 %v146
  %v299 = vpop.f32.mrf.mxu0
  %v300 = vadd.f32 0.0, %v299
  %v301 = vpop.f32.mrf.mxu0
  %302 = vmatprep.mubr.f32.mxu0 0.0
  %303 = vmatmul.mubr.f32.gmra.mxu0 %v149
  %v304 = vpop.f32.mrf.mxu0
  %v305 = vadd.f32 0.0, %v304
  %v306 = vpop.f32.mrf.mxu0
  %307 = vmatprep.mubr.f32.mxu0 0.0
  %308 = vmatmul.mubr.f32.gmra.mxu0 %v152
  %v309 = vpop.f32.mrf.mxu0
  %v310 = vadd.f32 0.0, %v309
  %v311 = vpop.f32.mrf.mxu0
  %312 = vmatprep.mubr.f32.mxu0 0.0
  %313 = vmatmul.mubr.f32.gmra.mxu0 %v155
  %v314 = vpop.f32.mrf.mxu0
  %v315 = vadd.f32 0.0, %v314
  %v316 = vpop.f32.mrf.mxu0
  %317 = vmatprep.mubr.f32.mxu0 0.0
  %318 = vmatmul.mubr.f32.gmra.mxu0 %v158
  %v319 = vpop.f32.mrf.mxu0
  %v320 = vadd.f32 0.0, %v319
  %v321 = vpop.f32.mrf.mxu0
  %322 = vmatprep.mubr.f32.mxu0 0.0
  %323 = vmatmul.mubr.f32.gmra.mxu0 %v161
  %v324 = vpop.f32.mrf.mxu0
  %v325 = vadd.f32 0.0, %v324
  %v326 = vpop.f32.mrf.mxu0
  %327 = vmatprep.mubr.f32.mxu0 0.0
  %328 = vmatmul.mubr.f32.gmra.mxu0 %v164
  %v329 = vpop.f32.mrf.mxu0
  %v330 = vadd.f32 0.0, %v329
  %v331 = vpop.f32.mrf.mxu0
  %332 = vmatprep.mubr.f32.mxu0 0.0
  %333 = vmatmul.mubr.f32.gmra.mxu0 %v167
  %v334 = vpop.f32.mrf.mxu0
  %v335 = vadd.f32 0.0, %v334
  %v336 = vpop.f32.mrf.mxu0
  %337 = vmatprep.mubr.f32.mxu0 0.0
  %338 = vmatmul.mubr.f32.gmra.mxu0 %v170
  %v339 = vpop.f32.mrf.mxu0
  %v340 = vadd.f32 0.0, %v339
  %v341 = vpop.f32.mrf.mxu0
  %342 = vmatprep.mubr.f32.mxu0 0.0
  %343 = vmatmul.mubr.f32.gmra.mxu0 %v173
  %v344 = vpop.f32.mrf.mxu0
  %v345 = vadd.f32 0.0, %v344
  %v346 = vpop.f32.mrf.mxu0
  %347 = vmatprep.mubr.f32.mxu0 0.0
  %348 = vmatmul.mubr.f32.gmra.mxu0 %v176
  %v349 = vpop.f32.mrf.mxu0
  %v350 = vadd.f32 0.0, %v349
  %v351 = vpop.f32.mrf.mxu0
  %352 = vmatprep.mubr.f32.mxu0 0.0
  %353 = vmatmul.mubr.f32.gmra.mxu0 %v179
  %v354 = vpop.f32.mrf.mxu0
  %v355 = vadd.f32 0.0, %v354
  %v356 = vpop.f32.mrf.mxu0
  %357 = vmatprep.mubr.f32.mxu0 0.0
  %358 = vmatmul.mubr.f32.gmra.mxu0 %v182
  %v359 = vpop.f32.mrf.mxu0
  %v360 = vadd.f32 0.0, %v359
  %v361 = vpop.f32.mrf.mxu0
  %362 = vmatprep.mubr.f32.mxu0 0.0
  %363 = vmatmul.mubr.f32.gmra.mxu0 %v185
  %v364 = vpop.f32.mrf.mxu0
  %v365 = vadd.f32 0.0, %v364
  %v366 = vpop.f32.mrf.mxu0
  %367 = vmatprep.mubr.f32.mxu0 0.0
  %368 = vmatmul.mubr.f32.gmra.mxu0 %v188
  %v369 = vpop.f32.mrf.mxu0
  %v370 = vadd.f32 0.0, %v369
  %v371 = vpop.f32.mrf.mxu0
  %372 = vmatprep.mubr.f32.mxu0 0.0
  %373 = vmatmul.mubr.f32.gmra.mxu0 %v191
  %v374 = vpop.f32.mrf.mxu0
  %v375 = vadd.f32 0.0, %v374
  %v376 = vpop.f32.mrf.mxu0
  %377 = vdwg.mxu0
  %378 = vst [vmem:[#allocation2] sm:$0xff] %v260
  %379 = vst [vmem:[#allocation2 + $0x8] sm:$0xff] %v265
  %380 = vst [vmem:[#allocation2 + $0x10] sm:$0xff] %v270
  %381 = vst [vmem:[#allocation2 + $0x18] sm:$0xff] %v275
  %382 = vst [vmem:[#allocation2 + $0x20] sm:$0xff] %v280
  %383 = vst [vmem:[#allocation2 + $0x28] sm:$0xff] %v285
  %384 = vst [vmem:[#allocation2 + $0x30] sm:$0xff] %v290
  %385 = vst [vmem:[#allocation2 + $0x38] sm:$0xff] %v295
  %386 = vst [vmem:[#allocation2 + $0x40] sm:$0xff] %v300
  %387 = vst [vmem:[#allocation2 + $0x48] sm:$0xff] %v305
  %388 = vst [vmem:[#allocation2 + $0x50] sm:$0xff] %v310
  %389 = vst [vmem:[#allocation2 + $0x58] sm:$0xff] %v315
  %390 = vst [vmem:[#allocation2 + $0x60] sm:$0xff] %v320
  %391 = vst [vmem:[#allocation2 + $0x68] sm:$0xff] %v325
  %392 = vst [vmem:[#allocation2 + $0x70] sm:$0xff] %v330
  %393 = vst [vmem:[#allocation2 + $0x78] sm:$0xff] %v335
  %394 = vst [vmem:[#allocation2 + $0x80] sm:$0xff] %v340
  %395 = vst [vmem:[#allocation2 + $0x88] sm:$0xff] %v345
  %396 = vst [vmem:[#allocation2 + $0x90] sm:$0xff] %v350
  %397 = vst [vmem:[#allocation2 + $0x98] sm:$0xff] %v355
  %398 = vst [vmem:[#allocation2 + $0xa0] sm:$0xff] %v360
  %399 = vst [vmem:[#allocation2 + $0xa8] sm:$0xff] %v365
  %400 = vst [vmem:[#allocation2 + $0xb0] sm:$0xff] %v370
  %401 = vst [vmem:[#allocation2 + $0xb8] sm:$0xff] %v375
  %v402 = vld [vmem:[%s5] sm:$0xff]
  %v403 = vld [vmem:[%s5 + $0x8] sm:$0xff]
  %v404 = vld [vmem:[%s5 + $0x10] sm:$0xff]
  %v405 = vld [vmem:[%s5 + $0x18] sm:$0xff]
  %v407 = vsel %vm120, %v50, 0
  %v410 = vsel %vm120, %v51, 0
  %v413 = vsel %vm120, %v52, 0
  %415 = vmatprep.subr.mxu0 0.0
  %416 = vmatpush1.msra.mxu0 0.0
  %417 = vmatprep.subr.mxu0 0.0
  %418 = vmatpush1.msra.mxu0 0.0
  %419 = vmatprep.subr.mxu0 0.0
  %420 = vmatpush1.msra.mxu0 0.0
  %421 = vmatprep.subr.mxu0 0.0
  %422 = vmatpush1.msra.mxu0 0.0
  %423 = vmatprep.subr.mxu0 0.0
  %424 = vmatpush1.msra.mxu0 0.0
  %425 = vmatprep.subr.mxu0 0.0
  %426 = vmatpush1.msra.mxu0 0.0
  %427 = vmatprep.subr.mxu0 0.0
  %428 = vmatpush1.msra.mxu0 0.0
  %429 = vmatprep.subr.mxu0 0.0
  %430 = vmatpush1.msra.mxu0 0.0
  %431 = vmatprep.subr.mxu0 0.0
  %432 = vmatpush1.msra.mxu0 0.0
  %433 = vmatprep.subr.mxu0 0.0
  %434 = vmatpush1.msra.mxu0 0.0
  %435 = vmatprep.subr.mxu0 0.0
  %436 = vmatpush1.msra.mxu0 0.0
  %437 = vmatprep.subr.mxu0 0.0
  %438 = vmatpush1.msra.mxu0 0.0
  %439 = vmatprep.subr.mxu0 0.0
  %440 = vmatpush1.msra.mxu0 %v405
  %441 = vmatprep.subr.mxu0 0.0
  %442 = vmatpush1.msra.mxu0 %v404
  %443 = vmatprep.subr.mxu0 0.0
  %444 = vmatpush1.msra.mxu0 %v403
  %445 = vmatprep.subr.mxu0 0.0
  %446 = vmatpush1.msra.mxu0 %v402
  %447 = vmatprep.subr.mxu0 0.0
  %448 = vmatpush2.msra.mxu0 0.0
  %449 = vmatprep.subr.mxu0 0.0
  %450 = vmatpush2.msra.mxu0 0.0
  %451 = vmatprep.subr.mxu0 0.0
  %452 = vmatpush2.msra.mxu0 0.0
  %453 = vmatprep.subr.mxu0 0.0
  %454 = vmatpush2.msra.mxu0 0.0
  %455 = vmatprep.subr.mxu0 0.0
  %456 = vmatpush2.msra.mxu0 0.0
  %457 = vmatprep.subr.mxu0 0.0
  %458 = vmatpush2.msra.mxu0 0.0
  %459 = vmatprep.subr.mxu0 0.0
  %460 = vmatpush2.msra.mxu0 0.0
  %461 = vmatprep.subr.mxu0 0.0
  %462 = vmatpush2.msra.mxu0 0.0
  %463 = vmatprep.subr.mxu0 0.0
  %464 = vmatpush2.msra.mxu0 0.0
  %465 = vmatprep.subr.mxu0 0.0
  %466 = vmatpush2.msra.mxu0 0.0
  %467 = vmatprep.subr.mxu0 0.0
  %468 = vmatpush2.msra.mxu0 0.0
  %469 = vmatprep.subr.mxu0 0.0
  %470 = vmatpush2.msra.mxu0 0.0
  %471 = vmatprep.subr.mxu0 0.0
  %472 = vmatpush2.msra.mxu0 0.0
  %473 = vmatprep.subr.mxu0 0.0
  %474 = vmatpush2.msra.mxu0 0.0
  %475 = vmatprep.subr.mxu0 0.0
  %476 = vmatpush2.msra.mxu0 0.0
  %477 = vmatprep.subr.mxu0 0.0
  %478 = vmatpush2.msra.mxu0 0.0
  %479 = vmatprep.mubr.f32.mxu0 0.0
  %480 = vmatmul.mubr.f32.gmra.mxu0 %v407
  %v481 = vpop.f32.mrf.mxu0
  %v482 = vadd.f32 0.0, %v481
  %v483 = vpop.f32.mrf.mxu0
  %484 = vmatprep.mubr.f32.mxu0 0.0
  %485 = vmatmul.mubr.f32.gmra.mxu0 %v410
  %v486 = vpop.f32.mrf.mxu0
  %v487 = vadd.f32 0.0, %v486
  %v488 = vpop.f32.mrf.mxu0
  %489 = vmatprep.mubr.f32.mxu0 0.0
  %490 = vmatmul.mubr.f32.gmra.mxu0 %v413
  %v491 = vpop.f32.mrf.mxu0
  %v492 = vadd.f32 0.0, %v491
  %v493 = vpop.f32.mrf.mxu0
  %494 = vdwg.mxu0
  %495 = vmatprep.subr.mxu0 0.0
  %496 = vmatpush1.msra.mxu0 0.0
  %497 = vmatprep.subr.mxu0 0.0
  %498 = vmatpush1.msra.mxu0 0.0
  %499 = vmatprep.subr.mxu0 0.0
  %500 = vmatpush1.msra.mxu0 0.0
  %501 = vmatprep.subr.mxu0 0.0
  %502 = vmatpush1.msra.mxu0 0.0
  %503 = vmatprep.subr.mxu0 0.0
  %504 = vmatpush1.msra.mxu0 0.0
  %505 = vmatprep.subr.mxu0 0.0
  %506 = vmatpush1.msra.mxu0 0.0
  %507 = vmatprep.subr.mxu0 0.0
  %508 = vmatpush1.msra.mxu0 0.0
  %509 = vmatprep.subr.mxu0 0.0
  %510 = vmatpush1.msra.mxu0 0.0
  %511 = vmatprep.subr.mxu0 0.0
  %512 = vmatpush1.msra.mxu0 0.0
  %513 = vmatprep.subr.mxu0 0.0
  %514 = vmatpush1.msra.mxu0 0.0
  %515 = vmatprep.subr.mxu0 0.0
  %516 = vmatpush1.msra.mxu0 0.0
  %517 = vmatprep.subr.mxu0 0.0
  %518 = vmatpush1.msra.mxu0 0.0
  %519 = vmatprep.subr.mxu0 0.0
  %520 = vmatpush1.msra.mxu0 %v56
  %521 = vmatprep.subr.mxu0 0.0
  %522 = vmatpush1.msra.mxu0 %v55
  %523 = vmatprep.subr.mxu0 0.0
  %524 = vmatpush1.msra.mxu0 %v54
  %525 = vmatprep.subr.mxu0 0.0
  %526 = vmatpush1.msra.mxu0 %v53
  %527 = vmatprep.subr.mxu0 0.0
  %528 = vmatpush2.msra.mxu0 0.0
  %529 = vmatprep.subr.mxu0 0.0
  %530 = vmatpush2.msra.mxu0 0.0
  %531 = vmatprep.subr.mxu0 0.0
  %532 = vmatpush2.msra.mxu0 0.0
  %533 = vmatprep.subr.mxu0 0.0
  %534 = vmatpush2.msra.mxu0 0.0
  %535 = vmatprep.subr.mxu0 0.0
  %536 = vmatpush2.msra.mxu0 0.0
  %537 = vmatprep.subr.mxu0 0.0
  %538 = vmatpush2.msra.mxu0 0.0
  %539 = vmatprep.subr.mxu0 0.0
  %540 = vmatpush2.msra.mxu0 0.0
  %541 = vmatprep.subr.mxu0 0.0
  %542 = vmatpush2.msra.mxu0 0.0
  %543 = vmatprep.subr.mxu0 0.0
  %544 = vmatpush2.msra.mxu0 0.0
  %545 = vmatprep.subr.mxu0 0.0
  %546 = vmatpush2.msra.mxu0 0.0
  %547 = vmatprep.subr.mxu0 0.0
  %548 = vmatpush2.msra.mxu0 0.0
  %549 = vmatprep.subr.mxu0 0.0
  %550 = vmatpush2.msra.mxu0 0.0
  %551 = vmatprep.subr.mxu0 0.0
  %552 = vmatpush2.msra.mxu0 0.0
  %553 = vmatprep.subr.mxu0 0.0
  %554 = vmatpush2.msra.mxu0 0.0
  %555 = vmatprep.subr.mxu0 0.0
  %556 = vmatpush2.msra.mxu0 0.0
  %557 = vmatprep.subr.mxu0 0.0
  %558 = vmatpush2.msra.mxu0 0.0
  %559 = vmatprep.mubr.f32.mxu0 0.0
  %560 = vmatmul.mubr.f32.gmra.mxu0 %v407
  %v561 = vpop.f32.mrf.mxu0
  %v562 = vadd.f32 %v57, %v561
  %v563 = vpop.f32.mrf.mxu0
  %564 = vdwg.mxu0
  %v566 = vsel %vm120, %v562, 0
  %568 = vmatprep.subr.mxu0 0.0
  %569 = vmatpush1.msra.mxu0 0.0
  %570 = vmatprep.subr.mxu0 0.0
  %571 = vmatpush1.msra.mxu0 0.0
  %572 = vmatprep.subr.mxu0 0.0
  %573 = vmatpush1.msra.mxu0 0.0
  %574 = vmatprep.subr.mxu0 0.0
  %575 = vmatpush1.msra.mxu0 0.0
  %576 = vmatprep.subr.mxu0 0.0
  %577 = vmatpush1.msra.mxu0 0.0
  %578 = vmatprep.subr.mxu0 0.0
  %579 = vmatpush1.msra.mxu0 0.0
  %580 = vmatprep.subr.mxu0 0.0
  %581 = vmatpush1.msra.mxu0 0.0
  %582 = vmatprep.subr.mxu0 0.0
  %583 = vmatpush1.msra.mxu0 0.0
  %584 = vmatprep.subr.mxu0 0.0
  %585 = vmatpush1.msra.mxu0 0.0
  %586 = vmatprep.subr.mxu0 0.0
  %587 = vmatpush1.msra.mxu0 0.0
  %588 = vmatprep.subr.mxu0 0.0
  %589 = vmatpush1.msra.mxu0 0.0
  %590 = vmatprep.subr.mxu0 0.0
  %591 = vmatpush1.msra.mxu0 0.0
  %592 = vmatprep.subr.mxu0 0.0
  %593 = vmatpush1.msra.mxu0 %v61
  %594 = vmatprep.subr.mxu0 0.0
  %595 = vmatpush1.msra.mxu0 %v60
  %596 = vmatprep.subr.mxu0 0.0
  %597 = vmatpush1.msra.mxu0 %v59
  %598 = vmatprep.subr.mxu0 0.0
  %599 = vmatpush1.msra.mxu0 %v58
  %600 = vmatprep.subr.mxu0 0.0
  %601 = vmatpush2.msra.mxu0 0.0
  %602 = vmatprep.subr.mxu0 0.0
  %603 = vmatpush2.msra.mxu0 0.0
  %604 = vmatprep.subr.mxu0 0.0
  %605 = vmatpush2.msra.mxu0 0.0
  %606 = vmatprep.subr.mxu0 0.0
  %607 = vmatpush2.msra.mxu0 0.0
  %608 = vmatprep.subr.mxu0 0.0
  %609 = vmatpush2.msra.mxu0 0.0
  %610 = vmatprep.subr.mxu0 0.0
  %611 = vmatpush2.msra.mxu0 0.0
  %612 = vmatprep.subr.mxu0 0.0
  %613 = vmatpush2.msra.mxu0 0.0
  %614 = vmatprep.subr.mxu0 0.0
  %615 = vmatpush2.msra.mxu0 0.0
  %616 = vmatprep.subr.mxu0 0.0
  %617 = vmatpush2.msra.mxu0 0.0
  %618 = vmatprep.subr.mxu0 0.0
  %619 = vmatpush2.msra.mxu0 0.0
  %620 = vmatprep.subr.mxu0 0.0
  %621 = vmatpush2.msra.mxu0 0.0
  %622 = vmatprep.subr.mxu0 0.0
  %623 = vmatpush2.msra.mxu0 0.0
  %624 = vmatprep.subr.mxu0 0.0
  %625 = vmatpush2.msra.mxu0 0.0
  %626 = vmatprep.subr.mxu0 0.0
  %627 = vmatpush2.msra.mxu0 0.0
  %628 = vmatprep.subr.mxu0 0.0
  %629 = vmatpush2.msra.mxu0 0.0
  %630 = vmatprep.subr.mxu0 0.0
  %631 = vmatpush2.msra.mxu0 0.0
  %632 = vmatprep.mubr.f32.mxu0 0.0
  %633 = vmatmul.mubr.f32.gmra.mxu0 %v566
  %v634 = vpop.f32.mrf.mxu0
  %v635 = vadd.f32 0.0, %v634
  %v636 = vpop.f32.mrf.mxu0
  %637 = vdwg.mxu0
  %v638 = vadd.f32 %v482, %v635
  %639 = vrot.lane.b32.xlu0 %v562, 96
  %v640 = vpop.permute.xlu0 %639
  %v641 = vsel %vm120, %v640, 0
  %643 = vmatprep.subr.mxu0 0.0
  %644 = vmatpush1.msra.mxu0 0.0
  %645 = vmatprep.subr.mxu0 0.0
  %646 = vmatpush1.msra.mxu0 0.0
  %647 = vmatprep.subr.mxu0 0.0
  %648 = vmatpush1.msra.mxu0 0.0
  %649 = vmatprep.subr.mxu0 0.0
  %650 = vmatpush1.msra.mxu0 0.0
  %651 = vmatprep.subr.mxu0 0.0
  %652 = vmatpush1.msra.mxu0 0.0
  %653 = vmatprep.subr.mxu0 0.0
  %654 = vmatpush1.msra.mxu0 0.0
  %655 = vmatprep.subr.mxu0 0.0
  %656 = vmatpush1.msra.mxu0 0.0
  %657 = vmatprep.subr.mxu0 0.0
  %658 = vmatpush1.msra.mxu0 0.0
  %659 = vmatprep.subr.mxu0 0.0
  %660 = vmatpush1.msra.mxu0 0.0
  %661 = vmatprep.subr.mxu0 0.0
  %662 = vmatpush1.msra.mxu0 0.0
  %663 = vmatprep.subr.mxu0 0.0
  %664 = vmatpush1.msra.mxu0 0.0
  %665 = vmatprep.subr.mxu0 0.0
  %666 = vmatpush1.msra.mxu0 0.0
  %667 = vmatprep.subr.mxu0 0.0
  %668 = vmatpush1.msra.mxu0 %v65
  %669 = vmatprep.subr.mxu0 0.0
  %670 = vmatpush1.msra.mxu0 %v64
  %671 = vmatprep.subr.mxu0 0.0
  %672 = vmatpush1.msra.mxu0 %v63
  %673 = vmatprep.subr.mxu0 0.0
  %674 = vmatpush1.msra.mxu0 %v62
  %675 = vmatprep.subr.mxu0 0.0
  %676 = vmatpush2.msra.mxu0 0.0
  %677 = vmatprep.subr.mxu0 0.0
  %678 = vmatpush2.msra.mxu0 0.0
  %679 = vmatprep.subr.mxu0 0.0
  %680 = vmatpush2.msra.mxu0 0.0
  %681 = vmatprep.subr.mxu0 0.0
  %682 = vmatpush2.msra.mxu0 0.0
  %683 = vmatprep.subr.mxu0 0.0
  %684 = vmatpush2.msra.mxu0 0.0
  %685 = vmatprep.subr.mxu0 0.0
  %686 = vmatpush2.msra.mxu0 0.0
  %687 = vmatprep.subr.mxu0 0.0
  %688 = vmatpush2.msra.mxu0 0.0
  %689 = vmatprep.subr.mxu0 0.0
  %690 = vmatpush2.msra.mxu0 0.0
  %691 = vmatprep.subr.mxu0 0.0
  %692 = vmatpush2.msra.mxu0 0.0
  %693 = vmatprep.subr.mxu0 0.0
  %694 = vmatpush2.msra.mxu0 0.0
  %695 = vmatprep.subr.mxu0 0.0
  %696 = vmatpush2.msra.mxu0 0.0
  %697 = vmatprep.subr.mxu0 0.0
  %698 = vmatpush2.msra.mxu0 0.0
  %699 = vmatprep.subr.mxu0 0.0
  %700 = vmatpush2.msra.mxu0 0.0
  %701 = vmatprep.subr.mxu0 0.0
  %702 = vmatpush2.msra.mxu0 0.0
  %703 = vmatprep.subr.mxu0 0.0
  %704 = vmatpush2.msra.mxu0 0.0
  %705 = vmatprep.subr.mxu0 0.0
  %706 = vmatpush2.msra.mxu0 0.0
  %707 = vmatprep.mubr.f32.mxu0 0.0
  %708 = vmatmul.mubr.f32.gmra.mxu0 %v641
  %v709 = vpop.f32.mrf.mxu0
  %v710 = vadd.f32 0.0, %v709
  %v711 = vpop.f32.mrf.mxu0
  %712 = vdwg.mxu0
  %v713 = vadd.f32 %v638, %v710
  %v714 = vadd.f32 %v713, %v66
  %v715 = vmul.f32 %v714, %v91
  %v716 = vtanh.pop %v715
  %v717 = vmul.f32 %v716, 0.5
  %v718 = vadd.f32 %v717, 0.5
  %v720 = vmul.f32 %v718, %v640
  %722 = vrot.lane.b32.xlu0 %v716, 64
  %v723 = vpop.permute.xlu0 %722
  %v725 = vmul.f32 %v718, %v723
  %727 = vrot.lane.b32.xlu0 %v725, 32
  %v728 = vpop.permute.xlu0 %727
  %v730 = vadd.f32 %v720, %v728
  %v731 = vtanh.pop %v730
  %733 = vrot.lane.b32.xlu0 %v731, 64
  %v734 = vpop.permute.xlu0 %733
  %v736 = vmul.f32 %v718, %v734
  %738 = vrot.lane.b32.xlu0 %v736, 32
  %v739 = vpop.permute.xlu0 %738
  %v740 = vsel %vm120, %v739, 0
  %742 = vmatprep.subr.mxu0 0.0
  %743 = vmatpush1.msra.mxu0 0.0
  %744 = vmatprep.subr.mxu0 0.0
  %745 = vmatpush1.msra.mxu0 0.0
  %746 = vmatprep.subr.mxu0 0.0
  %747 = vmatpush1.msra.mxu0 0.0
  %748 = vmatprep.subr.mxu0 0.0
  %749 = vmatpush1.msra.mxu0 0.0
  %750 = vmatprep.subr.mxu0 0.0
  %751 = vmatpush1.msra.mxu0 0.0
  %752 = vmatprep.subr.mxu0 0.0
  %753 = vmatpush1.msra.mxu0 0.0
  %754 = vmatprep.subr.mxu0 0.0
  %755 = vmatpush1.msra.mxu0 0.0
  %756 = vmatprep.subr.mxu0 0.0
  %757 = vmatpush1.msra.mxu0 0.0
  %758 = vmatprep.subr.mxu0 0.0
  %759 = vmatpush1.msra.mxu0 0.0
  %760 = vmatprep.subr.mxu0 0.0
  %761 = vmatpush1.msra.mxu0 0.0
  %762 = vmatprep.subr.mxu0 0.0
  %763 = vmatpush1.msra.mxu0 0.0
  %764 = vmatprep.subr.mxu0 0.0
  %765 = vmatpush1.msra.mxu0 0.0
  %766 = vmatprep.subr.mxu0 %v77
  %767 = vmatpush1.msra.mxu0 %v76
  %768 = vmatprep.subr.mxu0 %v74
  %769 = vmatpush1.msra.mxu0 %v73
  %770 = vmatprep.subr.mxu0 %v71
  %771 = vmatpush1.msra.mxu0 %v70
  %772 = vmatprep.subr.mxu0 %v68
  %773 = vmatpush1.msra.mxu0 %v67
  %774 = vmatprep.subr.mxu0 0.0
  %775 = vmatpush2.msra.mxu0 0.0
  %776 = vmatprep.subr.mxu0 0.0
  %777 = vmatpush2.msra.mxu0 0.0
  %778 = vmatprep.subr.mxu0 0.0
  %779 = vmatpush2.msra.mxu0 0.0
  %780 = vmatprep.subr.mxu0 0.0
  %781 = vmatpush2.msra.mxu0 0.0
  %782 = vmatprep.subr.mxu0 0.0
  %783 = vmatpush2.msra.mxu0 0.0
  %784 = vmatprep.subr.mxu0 0.0
  %785 = vmatpush2.msra.mxu0 0.0
  %786 = vmatprep.subr.mxu0 0.0
  %787 = vmatpush2.msra.mxu0 0.0
  %788 = vmatprep.subr.mxu0 0.0
  %789 = vmatpush2.msra.mxu0 0.0
  %790 = vmatprep.subr.mxu0 0.0
  %791 = vmatpush2.msra.mxu0 0.0
  %792 = vmatprep.subr.mxu0 0.0
  %793 = vmatpush2.msra.mxu0 0.0
  %794 = vmatprep.subr.mxu0 0.0
  %795 = vmatpush2.msra.mxu0 0.0
  %796 = vmatprep.subr.mxu0 0.0
  %797 = vmatpush2.msra.mxu0 0.0
  %798 = vmatprep.subr.mxu0 0.0
  %799 = vmatpush2.msra.mxu0 0.0
  %800 = vmatprep.subr.mxu0 0.0
  %801 = vmatpush2.msra.mxu0 0.0
  %802 = vmatprep.subr.mxu0 0.0
  %803 = vmatpush2.msra.mxu0 0.0
  %804 = vmatprep.subr.mxu0 0.0
  %805 = vmatpush2.msra.mxu0 0.0
  %806 = vmatprep.mubr.f32.mxu0 0.0
  %807 = vmatmul.mubr.f32.gmra.mxu0 %v740
  %v808 = vpop.f32.mrf.mxu0
  %v809 = vadd.f32 %v79, %v808
  %v810 = vpop.f32.mrf.mxu0
  %v811 = vadd.f32 %v80, %v810
  %812 = vdwg.mxu0
  %813 = vmatprep.subr.mxu0 0.0
  %814 = vmatpush1.msra.mxu0 0.0
  %815 = vmatprep.subr.mxu0 0.0
  %816 = vmatpush1.msra.mxu0 0.0
  %817 = vmatprep.subr.mxu0 0.0
  %818 = vmatpush1.msra.mxu0 0.0
  %819 = vmatprep.subr.mxu0 0.0
  %820 = vmatpush1.msra.mxu0 0.0
  %821 = vmatprep.subr.mxu0 0.0
  %822 = vmatpush1.msra.mxu0 0.0
  %823 = vmatprep.subr.mxu0 0.0
  %824 = vmatpush1.msra.mxu0 0.0
  %825 = vmatprep.subr.mxu0 0.0
  %826 = vmatpush1.msra.mxu0 0.0
  %827 = vmatprep.subr.mxu0 0.0
  %828 = vmatpush1.msra.mxu0 0.0
  %829 = vmatprep.subr.mxu0 0.0
  %830 = vmatpush1.msra.mxu0 0.0
  %831 = vmatprep.subr.mxu0 0.0
  %832 = vmatpush1.msra.mxu0 0.0
  %833 = vmatprep.subr.mxu0 0.0
  %834 = vmatpush1.msra.mxu0 0.0
  %835 = vmatprep.subr.mxu0 0.0
  %836 = vmatpush1.msra.mxu0 0.0
  %837 = vmatprep.subr.mxu0 0.0
  %838 = vmatpush1.msra.mxu0 %v78
  %839 = vmatprep.subr.mxu0 0.0
  %840 = vmatpush1.msra.mxu0 %v75
  %841 = vmatprep.subr.mxu0 0.0
  %842 = vmatpush1.msra.mxu0 %v72
  %843 = vmatprep.subr.mxu0 0.0
  %844 = vmatpush1.msra.mxu0 %v69
  %845 = vmatprep.subr.mxu0 0.0
  %846 = vmatpush2.msra.mxu0 0.0
  %847 = vmatprep.subr.mxu0 0.0
  %848 = vmatpush2.msra.mxu0 0.0
  %849 = vmatprep.subr.mxu0 0.0
  %850 = vmatpush2.msra.mxu0 0.0
  %851 = vmatprep.subr.mxu0 0.0
  %852 = vmatpush2.msra.mxu0 0.0
  %853 = vmatprep.subr.mxu0 0.0
  %854 = vmatpush2.msra.mxu0 0.0
  %855 = vmatprep.subr.mxu0 0.0
  %856 = vmatpush2.msra.mxu0 0.0
  %857 = vmatprep.subr.mxu0 0.0
  %858 = vmatpush2.msra.mxu0 0.0
  %859 = vmatprep.subr.mxu0 0.0
  %860 = vmatpush2.msra.mxu0 0.0
  %861 = vmatprep.subr.mxu0 0.0
  %862 = vmatpush2.msra.mxu0 0.0
  %863 = vmatprep.subr.mxu0 0.0
  %864 = vmatpush2.msra.mxu0 0.0
  %865 = vmatprep.subr.mxu0 0.0
  %866 = vmatpush2.msra.mxu0 0.0
  %867 = vmatprep.subr.mxu0 0.0
  %868 = vmatpush2.msra.mxu0 0.0
  %869 = vmatprep.subr.mxu0 0.0
  %870 = vmatpush2.msra.mxu0 0.0
  %871 = vmatprep.subr.mxu0 0.0
  %872 = vmatpush2.msra.mxu0 0.0
  %873 = vmatprep.subr.mxu0 0.0
  %874 = vmatpush2.msra.mxu0 0.0
  %875 = vmatprep.subr.mxu0 0.0
  %876 = vmatpush2.msra.mxu0 0.0
  %877 = vmatprep.mubr.f32.mxu0 0.0
  %878 = vmatmul.mubr.f32.gmra.mxu0 %v740
  %v879 = vpop.f32.mrf.mxu0
  %v880 = vadd.f32 %v81, %v879
  %v881 = vpop.f32.mrf.mxu0
  %882 = vdwg.mxu0
  %v883 = vadd.f32 %v811, %v809
  %v885 = vsel %vm120, %v880, 0
  %887 = vmatprep.subr.mxu0 0.0
  %888 = vmatpush1.msra.mxu0 0.0
  %889 = vmatprep.subr.mxu0 0.0
  %890 = vmatpush1.msra.mxu0 0.0
  %891 = vmatprep.subr.mxu0 0.0
  %892 = vmatpush1.msra.mxu0 0.0
  %893 = vmatprep.subr.mxu0 0.0
  %894 = vmatpush1.msra.mxu0 0.0
  %895 = vmatprep.subr.mxu0 0.0
  %896 = vmatpush1.msra.mxu0 0.0
  %897 = vmatprep.subr.mxu0 0.0
  %898 = vmatpush1.msra.mxu0 0.0
  %899 = vmatprep.subr.mxu0 0.0
  %900 = vmatpush1.msra.mxu0 0.0
  %901 = vmatprep.subr.mxu0 0.0
  %902 = vmatpush1.msra.mxu0 0.0
  %903 = vmatprep.subr.mxu0 0.0
  %904 = vmatpush1.msra.mxu0 0.0
  %905 = vmatprep.subr.mxu0 0.0
  %906 = vmatpush1.msra.mxu0 0.0
  %907 = vmatprep.subr.mxu0 0.0
  %908 = vmatpush1.msra.mxu0 0.0
  %909 = vmatprep.subr.mxu0 0.0
  %910 = vmatpush1.msra.mxu0 0.0
  %911 = vmatprep.subr.mxu0 0.0
  %912 = vmatpush1.msra.mxu0 %v85
  %913 = vmatprep.subr.mxu0 0.0
  %914 = vmatpush1.msra.mxu0 %v84
  %915 = vmatprep.subr.mxu0 0.0
  %916 = vmatpush1.msra.mxu0 %v83
  %917 = vmatprep.subr.mxu0 0.0
  %918 = vmatpush1.msra.mxu0 %v82
  %919 = vmatprep.subr.mxu0 0.0
  %920 = vmatpush2.msra.mxu0 0.0
  %921 = vmatprep.subr.mxu0 0.0
  %922 = vmatpush2.msra.mxu0 0.0
  %923 = vmatprep.subr.mxu0 0.0
  %924 = vmatpush2.msra.mxu0 0.0
  %925 = vmatprep.subr.mxu0 0.0
  %926 = vmatpush2.msra.mxu0 0.0
  %927 = vmatprep.subr.mxu0 0.0
  %928 = vmatpush2.msra.mxu0 0.0
  %929 = vmatprep.subr.mxu0 0.0
  %930 = vmatpush2.msra.mxu0 0.0
  %931 = vmatprep.subr.mxu0 0.0
  %932 = vmatpush2.msra.mxu0 0.0
  %933 = vmatprep.subr.mxu0 0.0
  %934 = vmatpush2.msra.mxu0 0.0
  %935 = vmatprep.subr.mxu0 0.0
  %936 = vmatpush2.msra.mxu0 0.0
  %937 = vmatprep.subr.mxu0 0.0
  %938 = vmatpush2.msra.mxu0 0.0
  %939 = vmatprep.subr.mxu0 0.0
  %940 = vmatpush2.msra.mxu0 0.0
  %941 = vmatprep.subr.mxu0 0.0
  %942 = vmatpush2.msra.mxu0 0.0
  %943 = vmatprep.subr.mxu0 0.0
  %944 = vmatpush2.msra.mxu0 0.0
  %945 = vmatprep.subr.mxu0 0.0
  %946 = vmatpush2.msra.mxu0 0.0
  %947 = vmatprep.subr.mxu0 0.0
  %948 = vmatpush2.msra.mxu0 0.0
  %949 = vmatprep.subr.mxu0 0.0
  %950 = vmatpush2.msra.mxu0 0.0
  %951 = vmatprep.mubr.f32.mxu0 0.0
  %952 = vmatmul.mubr.f32.gmra.mxu0 %v885
  %v953 = vpop.f32.mrf.mxu0
  %v954 = vadd.f32 0.0, %v953
  %v955 = vpop.f32.mrf.mxu0
  %956 = vdwg.mxu0
  %v957 = vadd.f32 %v883, %v954
  %v958 = vmul.f32 %v957, %v91
  %v959 = vtanh.pop %v958
  %v960 = vmul.f32 %v959, 0.5
  %v961 = vadd.f32 %v960, 0.5
  %v962 = vmul.f32 %v961, %v880
  %964 = vrot.lane.b32.xlu0 %v959, 64
  %v965 = vpop.permute.xlu0 %964
  %v967 = vmul.f32 %v961, %v965
  %969 = vrot.lane.b32.xlu0 %v967, 32
  %v970 = vpop.permute.xlu0 %969
  %v972 = vadd.f32 %v962, %v970
  %v973 = vtanh.pop %v972
  %975 = vrot.lane.b32.xlu0 %v973, 64
  %v976 = vpop.permute.xlu0 %975
  %v978 = vmul.f32 %v961, %v976
  %980 = vrot.lane.b32.xlu0 %v978, 32
  %v981 = vpop.permute.xlu0 %980
  %983 = vst.msk [vmem:[#allocation3] sm:$0xff] %vm120, %v981
  %v984 = vld [vmem:[%s2] sm:$0xff]
  %v985 = vmul.f32 %v984, %v981
  %v986 = vadd.f32 %v985, 0.0
  %v987 = vld [vmem:[#allocation2] sm:$0xff]
  %v988 = vadd.f32 %v987, %v809
  %v989 = vsel %vm120, %v981, 0
  %991 = vmatprep.subr.mxu0 0.0
  %992 = vmatpush1.msra.mxu0 0.0
  %993 = vmatprep.subr.mxu0 0.0
  %994 = vmatpush1.msra.mxu0 0.0
  %995 = vmatprep.subr.mxu0 0.0
  %996 = vmatpush1.msra.mxu0 0.0
  %997 = vmatprep.subr.mxu0 0.0
  %998 = vmatpush1.msra.mxu0 0.0
  %999 = vmatprep.subr.mxu0 0.0
  %1000 = vmatpush1.msra.mxu0 0.0
  %1001 = vmatprep.subr.mxu0 0.0
  %1002 = vmatpush1.msra.mxu0 0.0
  %1003 = vmatprep.subr.mxu0 0.0
  %1004 = vmatpush1.msra.mxu0 0.0
  %1005 = vmatprep.subr.mxu0 0.0
  %1006 = vmatpush1.msra.mxu0 0.0
  %1007 = vmatprep.subr.mxu0 0.0
  %1008 = vmatpush1.msra.mxu0 0.0
  %1009 = vmatprep.subr.mxu0 0.0
  %1010 = vmatpush1.msra.mxu0 0.0
  %1011 = vmatprep.subr.mxu0 0.0
  %1012 = vmatpush1.msra.mxu0 0.0
  %1013 = vmatprep.subr.mxu0 0.0
  %1014 = vmatpush1.msra.mxu0 0.0
  %1015 = vmatprep.subr.mxu0 0.0
  %1016 = vmatpush1.msra.mxu0 %v85
  %1017 = vmatprep.subr.mxu0 0.0
  %1018 = vmatpush1.msra.mxu0 %v84
  %1019 = vmatprep.subr.mxu0 0.0
  %1020 = vmatpush1.msra.mxu0 %v83
  %1021 = vmatprep.subr.mxu0 0.0
  %1022 = vmatpush1.msra.mxu0 %v82
  %1023 = vmatprep.subr.mxu0 0.0
  %1024 = vmatpush2.msra.mxu0 0.0
  %1025 = vmatprep.subr.mxu0 0.0
  %1026 = vmatpush2.msra.mxu0 0.0
  %1027 = vmatprep.subr.mxu0 0.0
  %1028 = vmatpush2.msra.mxu0 0.0
  %1029 = vmatprep.subr.mxu0 0.0
  %1030 = vmatpush2.msra.mxu0 0.0
  %1031 = vmatprep.subr.mxu0 0.0
  %1032 = vmatpush2.msra.mxu0 0.0
  %1033 = vmatprep.subr.mxu0 0.0
  %1034 = vmatpush2.msra.mxu0 0.0
  %1035 = vmatprep.subr.mxu0 0.0
  %1036 = vmatpush2.msra.mxu0 0.0
  %1037 = vmatprep.subr.mxu0 0.0
  %1038 = vmatpush2.msra.mxu0 0.0
  %1039 = vmatprep.subr.mxu0 0.0
  %1040 = vmatpush2.msra.mxu0 0.0
  %1041 = vmatprep.subr.mxu0 0.0
  %1042 = vmatpush2.msra.mxu0 0.0
  %1043 = vmatprep.subr.mxu0 0.0
  %1044 = vmatpush2.msra.mxu0 0.0
  %1045 = vmatprep.subr.mxu0 0.0
  %1046 = vmatpush2.msra.mxu0 0.0
  %1047 = vmatprep.subr.mxu0 0.0
  %1048 = vmatpush2.msra.mxu0 0.0
  %1049 = vmatprep.subr.mxu0 0.0
  %1050 = vmatpush2.msra.mxu0 0.0
  %1051 = vmatprep.subr.mxu0 0.0
  %1052 = vmatpush2.msra.mxu0 0.0
  %1053 = vmatprep.subr.mxu0 0.0
  %1054 = vmatpush2.msra.mxu0 0.0
  %1055 = vmatprep.mubr.f32.mxu0 0.0
  %1056 = vmatmul.mubr.f32.gmra.mxu0 %v989
  %v1057 = vpop.f32.mrf.mxu0
  %v1058 = vadd.f32 0.0, %v1057
  %v1059 = vpop.f32.mrf.mxu0
  %1060 = vdwg.mxu0
  %v1061 = vadd.f32 %v988, %v1058
  %v1062 = vmul.f32 %v1061, %v91
  %v1063 = vtanh.pop %v1062
  %v1064 = vmul.f32 %v1063, 0.5
  %v1065 = vadd.f32 %v1064, 0.5
  %v1066 = vmul.f32 %v1065, %v972
  %1068 = vrot.lane.b32.xlu0 %v1063, 64
  %v1069 = vpop.permute.xlu0 %1068
  %v1071 = vmul.f32 %v1065, %v1069
  %1073 = vrot.lane.b32.xlu0 %v1071, 32
  %v1074 = vpop.permute.xlu0 %1073
  %v1076 = vadd.f32 %v1066, %v1074
  %v1077 = vtanh.pop %v1076
  %1079 = vrot.lane.b32.xlu0 %v1077, 64
  %v1080 = vpop.permute.xlu0 %1079
  %v1082 = vmul.f32 %v1065, %v1080
  %1084 = vrot.lane.b32.xlu0 %v1082, 32
  %v1085 = vpop.permute.xlu0 %1084
  %1087 = vst.msk [vmem:[#allocation3 + $0x8] sm:$0xff] %vm120, %v1085
  %v1088 = vld [vmem:[%s2 + $0x8] sm:$0xff]
  %v1089 = vmul.f32 %v1088, %v1085
  %v1090 = vadd.f32 %v986, %v1089
  %v1091 = vld [vmem:[#allocation2 + $0x8] sm:$0xff]
  %v1092 = vadd.f32 %v1091, %v809
  %v1093 = vsel %vm120, %v1085, 0
  %1095 = vmatprep.subr.mxu0 0.0
  %1096 = vmatpush1.msra.mxu0 0.0
  %1097 = vmatprep.subr.mxu0 0.0
  %1098 = vmatpush1.msra.mxu0 0.0
  %1099 = vmatprep.subr.mxu0 0.0
  %1100 = vmatpush1.msra.mxu0 0.0
  %1101 = vmatprep.subr.mxu0 0.0
  %1102 = vmatpush1.msra.mxu0 0.0
  %1103 = vmatprep.subr.mxu0 0.0
  %1104 = vmatpush1.msra.mxu0 0.0
  %1105 = vmatprep.subr.mxu0 0.0
  %1106 = vmatpush1.msra.mxu0 0.0
  %1107 = vmatprep.subr.mxu0 0.0
  %1108 = vmatpush1.msra.mxu0 0.0
  %1109 = vmatprep.subr.mxu0 0.0
  %1110 = vmatpush1.msra.mxu0 0.0
  %1111 = vmatprep.subr.mxu0 0.0
  %1112 = vmatpush1.msra.mxu0 0.0
  %1113 = vmatprep.subr.mxu0 0.0
  %1114 = vmatpush1.msra.mxu0 0.0
  %1115 = vmatprep.subr.mxu0 0.0
  %1116 = vmatpush1.msra.mxu0 0.0
  %1117 = vmatprep.subr.mxu0 0.0
  %1118 = vmatpush1.msra.mxu0 0.0
  %1119 = vmatprep.subr.mxu0 0.0
  %1120 = vmatpush1.msra.mxu0 %v85
  %1121 = vmatprep.subr.mxu0 0.0
  %1122 = vmatpush1.msra.mxu0 %v84
  %1123 = vmatprep.subr.mxu0 0.0
  %1124 = vmatpush1.msra.mxu0 %v83
  %1125 = vmatprep.subr.mxu0 0.0
  %1126 = vmatpush1.msra.mxu0 %v82
  %1127 = vmatprep.subr.mxu0 0.0
  %1128 = vmatpush2.msra.mxu0 0.0
  %1129 = vmatprep.subr.mxu0 0.0
  %1130 = vmatpush2.msra.mxu0 0.0
  %1131 = vmatprep.subr.mxu0 0.0
  %1132 = vmatpush2.msra.mxu0 0.0
  %1133 = vmatprep.subr.mxu0 0.0
  %1134 = vmatpush2.msra.mxu0 0.0
  %1135 = vmatprep.subr.mxu0 0.0
  %1136 = vmatpush2.msra.mxu0 0.0
  %1137 = vmatprep.subr.mxu0 0.0
  %1138 = vmatpush2.msra.mxu0 0.0
  %1139 = vmatprep.subr.mxu0 0.0
  %1140 = vmatpush2.msra.mxu0 0.0
  %1141 = vmatprep.subr.mxu0 0.0
  %1142 = vmatpush2.msra.mxu0 0.0
  %1143 = vmatprep.subr.mxu0 0.0
  %1144 = vmatpush2.msra.mxu0 0.0
  %1145 = vmatprep.subr.mxu0 0.0
  %1146 = vmatpush2.msra.mxu0 0.0
  %1147 = vmatprep.subr.mxu0 0.0
  %1148 = vmatpush2.msra.mxu0 0.0
  %1149 = vmatprep.subr.mxu0 0.0
  %1150 = vmatpush2.msra.mxu0 0.0
  %1151 = vmatprep.subr.mxu0 0.0
  %1152 = vmatpush2.msra.mxu0 0.0
  %1153 = vmatprep.subr.mxu0 0.0
  %1154 = vmatpush2.msra.mxu0 0.0
  %1155 = vmatprep.subr.mxu0 0.0
  %1156 = vmatpush2.msra.mxu0 0.0
  %1157 = vmatprep.subr.mxu0 0.0
  %1158 = vmatpush2.msra.mxu0 0.0
  %1159 = vmatprep.mubr.f32.mxu0 0.0
  %1160 = vmatmul.mubr.f32.gmra.mxu0 %v1093
  %v1161 = vpop.f32.mrf.mxu0
  %v1162 = vadd.f32 0.0, %v1161
  %v1163 = vpop.f32.mrf.mxu0
  %1164 = vdwg.mxu0
  %v1165 = vadd.f32 %v1092, %v1162
  %v1166 = vmul.f32 %v1165, %v91
  %v1167 = vtanh.pop %v1166
  %v1168 = vmul.f32 %v1167, 0.5
  %v1169 = vadd.f32 %v1168, 0.5
  %v1170 = vmul.f32 %v1169, %v1076
  %1172 = vrot.lane.b32.xlu0 %v1167, 64
  %v1173 = vpop.permute.xlu0 %1172
  %v1175 = vmul.f32 %v1169, %v1173
  %1177 = vrot.lane.b32.xlu0 %v1175, 32
  %v1178 = vpop.permute.xlu0 %1177
  %v1180 = vadd.f32 %v1170, %v1178
  %v1181 = vtanh.pop %v1180
  %1183 = vrot.lane.b32.xlu0 %v1181, 64
  %v1184 = vpop.permute.xlu0 %1183
  %v1186 = vmul.f32 %v1169, %v1184
  %1188 = vrot.lane.b32.xlu0 %v1186, 32
  %v1189 = vpop.permute.xlu0 %1188
  %1191 = vst.msk [vmem:[#allocation3 + $0x10] sm:$0xff] %vm120, %v1189
  %v1192 = vld [vmem:[%s2 + $0x10] sm:$0xff]
  %v1193 = vmul.f32 %v1192, %v1189
  %v1194 = vadd.f32 %v1090, %v1193
  %v1195 = vld [vmem:[#allocation2 + $0x10] sm:$0xff]
  %v1196 = vadd.f32 %v1195, %v809
  %v1197 = vsel %vm120, %v1189, 0
  %1199 = vmatprep.subr.mxu0 0.0
  %1200 = vmatpush1.msra.mxu0 0.0
  %1201 = vmatprep.subr.mxu0 0.0
  %1202 = vmatpush1.msra.mxu0 0.0
  %1203 = vmatprep.subr.mxu0 0.0
  %1204 = vmatpush1.msra.mxu0 0.0
  %1205 = vmatprep.subr.mxu0 0.0
  %1206 = vmatpush1.msra.mxu0 0.0
  %1207 = vmatprep.subr.mxu0 0.0
  %1208 = vmatpush1.msra.mxu0 0.0
  %1209 = vmatprep.subr.mxu0 0.0
  %1210 = vmatpush1.msra.mxu0 0.0
  %1211 = vmatprep.subr.mxu0 0.0
  %1212 = vmatpush1.msra.mxu0 0.0
  %1213 = vmatprep.subr.mxu0 0.0
  %1214 = vmatpush1.msra.mxu0 0.0
  %1215 = vmatprep.subr.mxu0 0.0
  %1216 = vmatpush1.msra.mxu0 0.0
  %1217 = vmatprep.subr.mxu0 0.0
  %1218 = vmatpush1.msra.mxu0 0.0
  %1219 = vmatprep.subr.mxu0 0.0
  %1220 = vmatpush1.msra.mxu0 0.0
  %1221 = vmatprep.subr.mxu0 0.0
  %1222 = vmatpush1.msra.mxu0 0.0
  %1223 = vmatprep.subr.mxu0 0.0
  %1224 = vmatpush1.msra.mxu0 %v85
  %1225 = vmatprep.subr.mxu0 0.0
  %1226 = vmatpush1.msra.mxu0 %v84
  %1227 = vmatprep.subr.mxu0 0.0
  %1228 = vmatpush1.msra.mxu0 %v83
  %1229 = vmatprep.subr.mxu0 0.0
  %1230 = vmatpush1.msra.mxu0 %v82
  %1231 = vmatprep.subr.mxu0 0.0
  %1232 = vmatpush2.msra.mxu0 0.0
  %1233 = vmatprep.subr.mxu0 0.0
  %1234 = vmatpush2.msra.mxu0 0.0
  %1235 = vmatprep.subr.mxu0 0.0
  %1236 = vmatpush2.msra.mxu0 0.0
  %1237 = vmatprep.subr.mxu0 0.0
  %1238 = vmatpush2.msra.mxu0 0.0
  %1239 = vmatprep.subr.mxu0 0.0
  %1240 = vmatpush2.msra.mxu0 0.0
  %1241 = vmatprep.subr.mxu0 0.0
  %1242 = vmatpush2.msra.mxu0 0.0
  %1243 = vmatprep.subr.mxu0 0.0
  %1244 = vmatpush2.msra.mxu0 0.0
  %1245 = vmatprep.subr.mxu0 0.0
  %1246 = vmatpush2.msra.mxu0 0.0
  %1247 = vmatprep.subr.mxu0 0.0
  %1248 = vmatpush2.msra.mxu0 0.0
  %1249 = vmatprep.subr.mxu0 0.0
  %1250 = vmatpush2.msra.mxu0 0.0
  %1251 = vmatprep.subr.mxu0 0.0
  %1252 = vmatpush2.msra.mxu0 0.0
  %1253 = vmatprep.subr.mxu0 0.0
  %1254 = vmatpush2.msra.mxu0 0.0
  %1255 = vmatprep.subr.mxu0 0.0
  %1256 = vmatpush2.msra.mxu0 0.0
  %1257 = vmatprep.subr.mxu0 0.0
  %1258 = vmatpush2.msra.mxu0 0.0
  %1259 = vmatprep.subr.mxu0 0.0
  %1260 = vmatpush2.msra.mxu0 0.0
  %1261 = vmatprep.subr.mxu0 0.0
  %1262 = vmatpush2.msra.mxu0 0.0
  %1263 = vmatprep.mubr.f32.mxu0 0.0
  %1264 = vmatmul.mubr.f32.gmra.mxu0 %v1197
  %v1265 = vpop.f32.mrf.mxu0
  %v1266 = vadd.f32 0.0, %v1265
  %v1267 = vpop.f32.mrf.mxu0
  %1268 = vdwg.mxu0
  %v1269 = vadd.f32 %v1196, %v1266
  %v1270 = vmul.f32 %v1269, %v91
  %v1271 = vtanh.pop %v1270
  %v1272 = vmul.f32 %v1271, 0.5
  %v1273 = vadd.f32 %v1272, 0.5
  %v1274 = vmul.f32 %v1273, %v1180
  %1276 = vrot.lane.b32.xlu0 %v1271, 64
  %v1277 = vpop.permute.xlu0 %1276
  %v1279 = vmul.f32 %v1273, %v1277
  %1281 = vrot.lane.b32.xlu0 %v1279, 32
  %v1282 = vpop.permute.xlu0 %1281
  %v1284 = vadd.f32 %v1274, %v1282
  %v1285 = vtanh.pop %v1284
  %1287 = vrot.lane.b32.xlu0 %v1285, 64
  %v1288 = vpop.permute.xlu0 %1287
  %v1290 = vmul.f32 %v1273, %v1288
  %1292 = vrot.lane.b32.xlu0 %v1290, 32
  %v1293 = vpop.permute.xlu0 %1292
  %1295 = vst.msk [vmem:[#allocation3 + $0x18] sm:$0xff] %vm120, %v1293
  %v1296 = vld [vmem:[%s2 + $0x18] sm:$0xff]
  %v1297 = vmul.f32 %v1296, %v1293
  %v1298 = vadd.f32 %v1194, %v1297
  %v1299 = vld [vmem:[#allocation2 + $0x18] sm:$0xff]
  %v1300 = vadd.f32 %v1299, %v809
  %v1301 = vsel %vm120, %v1293, 0
  %1303 = vmatprep.subr.mxu0 0.0
  %1304 = vmatpush1.msra.mxu0 0.0
  %1305 = vmatprep.subr.mxu0 0.0
  %1306 = vmatpush1.msra.mxu0 0.0
  %1307 = vmatprep.subr.mxu0 0.0
  %1308 = vmatpush1.msra.mxu0 0.0
  %1309 = vmatprep.subr.mxu0 0.0
  %1310 = vmatpush1.msra.mxu0 0.0
  %1311 = vmatprep.subr.mxu0 0.0
  %1312 = vmatpush1.msra.mxu0 0.0
  %1313 = vmatprep.subr.mxu0 0.0
  %1314 = vmatpush1.msra.mxu0 0.0
  %1315 = vmatprep.subr.mxu0 0.0
  %1316 = vmatpush1.msra.mxu0 0.0
  %1317 = vmatprep.subr.mxu0 0.0
  %1318 = vmatpush1.msra.mxu0 0.0
  %1319 = vmatprep.subr.mxu0 0.0
  %1320 = vmatpush1.msra.mxu0 0.0
  %1321 = vmatprep.subr.mxu0 0.0
  %1322 = vmatpush1.msra.mxu0 0.0
  %1323 = vmatprep.subr.mxu0 0.0
  %1324 = vmatpush1.msra.mxu0 0.0
  %1325 = vmatprep.subr.mxu0 0.0
  %1326 = vmatpush1.msra.mxu0 0.0
  %1327 = vmatprep.subr.mxu0 0.0
  %1328 = vmatpush1.msra.mxu0 %v85
  %1329 = vmatprep.subr.mxu0 0.0
  %1330 = vmatpush1.msra.mxu0 %v84
  %1331 = vmatprep.subr.mxu0 0.0
  %1332 = vmatpush1.msra.mxu0 %v83
  %1333 = vmatprep.subr.mxu0 0.0
  %1334 = vmatpush1.msra.mxu0 %v82
  %1335 = vmatprep.subr.mxu0 0.0
  %1336 = vmatpush2.msra.mxu0 0.0
  %1337 = vmatprep.subr.mxu0 0.0
  %1338 = vmatpush2.msra.mxu0 0.0
  %1339 = vmatprep.subr.mxu0 0.0
  %1340 = vmatpush2.msra.mxu0 0.0
  %1341 = vmatprep.subr.mxu0 0.0
  %1342 = vmatpush2.msra.mxu0 0.0
  %1343 = vmatprep.subr.mxu0 0.0
  %1344 = vmatpush2.msra.mxu0 0.0
  %1345 = vmatprep.subr.mxu0 0.0
  %1346 = vmatpush2.msra.mxu0 0.0
  %1347 = vmatprep.subr.mxu0 0.0
  %1348 = vmatpush2.msra.mxu0 0.0
  %1349 = vmatprep.subr.mxu0 0.0
  %1350 = vmatpush2.msra.mxu0 0.0
  %1351 = vmatprep.subr.mxu0 0.0
  %1352 = vmatpush2.msra.mxu0 0.0
  %1353 = vmatprep.subr.mxu0 0.0
  %1354 = vmatpush2.msra.mxu0 0.0
  %1355 = vmatprep.subr.mxu0 0.0
  %1356 = vmatpush2.msra.mxu0 0.0
  %1357 = vmatprep.subr.mxu0 0.0
  %1358 = vmatpush2.msra.mxu0 0.0
  %1359 = vmatprep.subr.mxu0 0.0
  %1360 = vmatpush2.msra.mxu0 0.0
  %1361 = vmatprep.subr.mxu0 0.0
  %1362 = vmatpush2.msra.mxu0 0.0
  %1363 = vmatprep.subr.mxu0 0.0
  %1364 = vmatpush2.msra.mxu0 0.0
  %1365 = vmatprep.subr.mxu0 0.0
  %1366 = vmatpush2.msra.mxu0 0.0
  %1367 = vmatprep.mubr.f32.mxu0 0.0
  %1368 = vmatmul.mubr.f32.gmra.mxu0 %v1301
  %v1369 = vpop.f32.mrf.mxu0
  %v1370 = vadd.f32 0.0, %v1369
  %v1371 = vpop.f32.mrf.mxu0
  %1372 = vdwg.mxu0
  %v1373 = vadd.f32 %v1300, %v1370
  %v1374 = vmul.f32 %v1373, %v91
  %v1375 = vtanh.pop %v1374
  %v1376 = vmul.f32 %v1375, 0.5
  %v1377 = vadd.f32 %v1376, 0.5
  %v1378 = vmul.f32 %v1377, %v1284
  %1380 = vrot.lane.b32.xlu0 %v1375, 64
  %v1381 = vpop.permute.xlu0 %1380
  %v1383 = vmul.f32 %v1377, %v1381
  %1385 = vrot.lane.b32.xlu0 %v1383, 32
  %v1386 = vpop.permute.xlu0 %1385
  %v1388 = vadd.f32 %v1378, %v1386
  %v1389 = vtanh.pop %v1388
  %1391 = vrot.lane.b32.xlu0 %v1389, 64
  %v1392 = vpop.permute.xlu0 %1391
  %v1394 = vmul.f32 %v1377, %v1392
  %1396 = vrot.lane.b32.xlu0 %v1394, 32
  %v1397 = vpop.permute.xlu0 %1396
  %1399 = vst.msk [vmem:[#allocation3 + $0x20] sm:$0xff] %vm120, %v1397
  %v1400 = vld [vmem:[%s2 + $0x20] sm:$0xff]
  %v1401 = vmul.f32 %v1400, %v1397
  %v1402 = vadd.f32 %v1298, %v1401
  %v1403 = vld [vmem:[#allocation2 + $0x20] sm:$0xff]
  %v1404 = vadd.f32 %v1403, %v809
  %v1405 = vsel %vm120, %v1397, 0
  %1407 = vmatprep.subr.mxu0 0.0
  %1408 = vmatpush1.msra.mxu0 0.0
  %1409 = vmatprep.subr.mxu0 0.0
  %1410 = vmatpush1.msra.mxu0 0.0
  %1411 = vmatprep.subr.mxu0 0.0
  %1412 = vmatpush1.msra.mxu0 0.0
  %1413 = vmatprep.subr.mxu0 0.0
  %1414 = vmatpush1.msra.mxu0 0.0
  %1415 = vmatprep.subr.mxu0 0.0
  %1416 = vmatpush1.msra.mxu0 0.0
  %1417 = vmatprep.subr.mxu0 0.0
  %1418 = vmatpush1.msra.mxu0 0.0
  %1419 = vmatprep.subr.mxu0 0.0
  %1420 = vmatpush1.msra.mxu0 0.0
  %1421 = vmatprep.subr.mxu0 0.0
  %1422 = vmatpush1.msra.mxu0 0.0
  %1423 = vmatprep.subr.mxu0 0.0
  %1424 = vmatpush1.msra.mxu0 0.0
  %1425 = vmatprep.subr.mxu0 0.0
  %1426 = vmatpush1.msra.mxu0 0.0
  %1427 = vmatprep.subr.mxu0 0.0
  %1428 = vmatpush1.msra.mxu0 0.0
  %1429 = vmatprep.subr.mxu0 0.0
  %1430 = vmatpush1.msra.mxu0 0.0
  %1431 = vmatprep.subr.mxu0 0.0
  %1432 = vmatpush1.msra.mxu0 %v85
  %1433 = vmatprep.subr.mxu0 0.0
  %1434 = vmatpush1.msra.mxu0 %v84
  %1435 = vmatprep.subr.mxu0 0.0
  %1436 = vmatpush1.msra.mxu0 %v83
  %1437 = vmatprep.subr.mxu0 0.0
  %1438 = vmatpush1.msra.mxu0 %v82
  %1439 = vmatprep.subr.mxu0 0.0
  %1440 = vmatpush2.msra.mxu0 0.0
  %1441 = vmatprep.subr.mxu0 0.0
  %1442 = vmatpush2.msra.mxu0 0.0
  %1443 = vmatprep.subr.mxu0 0.0
  %1444 = vmatpush2.msra.mxu0 0.0
  %1445 = vmatprep.subr.mxu0 0.0
  %1446 = vmatpush2.msra.mxu0 0.0
  %1447 = vmatprep.subr.mxu0 0.0
  %1448 = vmatpush2.msra.mxu0 0.0
  %1449 = vmatprep.subr.mxu0 0.0
  %1450 = vmatpush2.msra.mxu0 0.0
  %1451 = vmatprep.subr.mxu0 0.0
  %1452 = vmatpush2.msra.mxu0 0.0
  %1453 = vmatprep.subr.mxu0 0.0
  %1454 = vmatpush2.msra.mxu0 0.0
  %1455 = vmatprep.subr.mxu0 0.0
  %1456 = vmatpush2.msra.mxu0 0.0
  %1457 = vmatprep.subr.mxu0 0.0
  %1458 = vmatpush2.msra.mxu0 0.0
  %1459 = vmatprep.subr.mxu0 0.0
  %1460 = vmatpush2.msra.mxu0 0.0
  %1461 = vmatprep.subr.mxu0 0.0
  %1462 = vmatpush2.msra.mxu0 0.0
  %1463 = vmatprep.subr.mxu0 0.0
  %1464 = vmatpush2.msra.mxu0 0.0
  %1465 = vmatprep.subr.mxu0 0.0
  %1466 = vmatpush2.msra.mxu0 0.0
  %1467 = vmatprep.subr.mxu0 0.0
  %1468 = vmatpush2.msra.mxu0 0.0
  %1469 = vmatprep.subr.mxu0 0.0
  %1470 = vmatpush2.msra.mxu0 0.0
  %1471 = vmatprep.mubr.f32.mxu0 0.0
  %1472 = vmatmul.mubr.f32.gmra.mxu0 %v1405
  %v1473 = vpop.f32.mrf.mxu0
  %v1474 = vadd.f32 0.0, %v1473
  %v1475 = vpop.f32.mrf.mxu0
  %1476 = vdwg.mxu0
  %v1477 = vadd.f32 %v1404, %v1474
  %v1478 = vmul.f32 %v1477, %v91
  %v1479 = vtanh.pop %v1478
  %v1480 = vmul.f32 %v1479, 0.5
  %v1481 = vadd.f32 %v1480, 0.5
  %v1482 = vmul.f32 %v1481, %v1388
  %1484 = vrot.lane.b32.xlu0 %v1479, 64
  %v1485 = vpop.permute.xlu0 %1484
  %v1487 = vmul.f32 %v1481, %v1485
  %1489 = vrot.lane.b32.xlu0 %v1487, 32
  %v1490 = vpop.permute.xlu0 %1489
  %v1492 = vadd.f32 %v1482, %v1490
  %v1493 = vtanh.pop %v1492
  %1495 = vrot.lane.b32.xlu0 %v1493, 64
  %v1496 = vpop.permute.xlu0 %1495
  %v1498 = vmul.f32 %v1481, %v1496
  %1500 = vrot.lane.b32.xlu0 %v1498, 32
  %v1501 = vpop.permute.xlu0 %1500
  %1503 = vst.msk [vmem:[#allocation3 + $0x28] sm:$0xff] %vm120, %v1501
  %v1504 = vld [vmem:[%s2 + $0x28] sm:$0xff]
  %v1505 = vmul.f32 %v1504, %v1501
  %v1506 = vadd.f32 %v1402, %v1505
  %v1507 = vld [vmem:[#allocation2 + $0x28] sm:$0xff]
  %v1508 = vadd.f32 %v1507, %v809
  %v1509 = vsel %vm120, %v1501, 0
  %1511 = vmatprep.subr.mxu0 0.0
  %1512 = vmatpush1.msra.mxu0 0.0
  %1513 = vmatprep.subr.mxu0 0.0
  %1514 = vmatpush1.msra.mxu0 0.0
  %1515 = vmatprep.subr.mxu0 0.0
  %1516 = vmatpush1.msra.mxu0 0.0
  %1517 = vmatprep.subr.mxu0 0.0
  %1518 = vmatpush1.msra.mxu0 0.0
  %1519 = vmatprep.subr.mxu0 0.0
  %1520 = vmatpush1.msra.mxu0 0.0
  %1521 = vmatprep.subr.mxu0 0.0
  %1522 = vmatpush1.msra.mxu0 0.0
  %1523 = vmatprep.subr.mxu0 0.0
  %1524 = vmatpush1.msra.mxu0 0.0
  %1525 = vmatprep.subr.mxu0 0.0
  %1526 = vmatpush1.msra.mxu0 0.0
  %1527 = vmatprep.subr.mxu0 0.0
  %1528 = vmatpush1.msra.mxu0 0.0
  %1529 = vmatprep.subr.mxu0 0.0
  %1530 = vmatpush1.msra.mxu0 0.0
  %1531 = vmatprep.subr.mxu0 0.0
  %1532 = vmatpush1.msra.mxu0 0.0
  %1533 = vmatprep.subr.mxu0 0.0
  %1534 = vmatpush1.msra.mxu0 0.0
  %1535 = vmatprep.subr.mxu0 0.0
  %1536 = vmatpush1.msra.mxu0 %v85
  %1537 = vmatprep.subr.mxu0 0.0
  %1538 = vmatpush1.msra.mxu0 %v84
  %1539 = vmatprep.subr.mxu0 0.0
  %1540 = vmatpush1.msra.mxu0 %v83
  %1541 = vmatprep.subr.mxu0 0.0
  %1542 = vmatpush1.msra.mxu0 %v82
  %1543 = vmatprep.subr.mxu0 0.0
  %1544 = vmatpush2.msra.mxu0 0.0
  %1545 = vmatprep.subr.mxu0 0.0
  %1546 = vmatpush2.msra.mxu0 0.0
  %1547 = vmatprep.subr.mxu0 0.0
  %1548 = vmatpush2.msra.mxu0 0.0
  %1549 = vmatprep.subr.mxu0 0.0
  %1550 = vmatpush2.msra.mxu0 0.0
  %1551 = vmatprep.subr.mxu0 0.0
  %1552 = vmatpush2.msra.mxu0 0.0
  %1553 = vmatprep.subr.mxu0 0.0
  %1554 = vmatpush2.msra.mxu0 0.0
  %1555 = vmatprep.subr.mxu0 0.0
  %1556 = vmatpush2.msra.mxu0 0.0
  %1557 = vmatprep.subr.mxu0 0.0
  %1558 = vmatpush2.msra.mxu0 0.0
  %1559 = vmatprep.subr.mxu0 0.0
  %1560 = vmatpush2.msra.mxu0 0.0
  %1561 = vmatprep.subr.mxu0 0.0
  %1562 = vmatpush2.msra.mxu0 0.0
  %1563 = vmatprep.subr.mxu0 0.0
  %1564 = vmatpush2.msra.mxu0 0.0
  %1565 = vmatprep.subr.mxu0 0.0
  %1566 = vmatpush2.msra.mxu0 0.0
  %1567 = vmatprep.subr.mxu0 0.0
  %1568 = vmatpush2.msra.mxu0 0.0
  %1569 = vmatprep.subr.mxu0 0.0
  %1570 = vmatpush2.msra.mxu0 0.0
  %1571 = vmatprep.subr.mxu0 0.0
  %1572 = vmatpush2.msra.mxu0 0.0
  %1573 = vmatprep.subr.mxu0 0.0
  %1574 = vmatpush2.msra.mxu0 0.0
  %1575 = vmatprep.mubr.f32.mxu0 0.0
  %1576 = vmatmul.mubr.f32.gmra.mxu0 %v1509
  %v1577 = vpop.f32.mrf.mxu0
  %v1578 = vadd.f32 0.0, %v1577
  %v1579 = vpop.f32.mrf.mxu0
  %1580 = vdwg.mxu0
  %v1581 = vadd.f32 %v1508, %v1578
  %v1582 = vmul.f32 %v1581, %v91
  %v1583 = vtanh.pop %v1582
  %v1584 = vmul.f32 %v1583, 0.5
  %v1585 = vadd.f32 %v1584, 0.5
  %v1586 = vmul.f32 %v1585, %v1492
  %1588 = vrot.lane.b32.xlu0 %v1583, 64
  %v1589 = vpop.permute.xlu0 %1588
  %v1591 = vmul.f32 %v1585, %v1589
  %1593 = vrot.lane.b32.xlu0 %v1591, 32
  %v1594 = vpop.permute.xlu0 %1593
  %v1596 = vadd.f32 %v1586, %v1594
  %v1597 = vtanh.pop %v1596
  %1599 = vrot.lane.b32.xlu0 %v1597, 64
  %v1600 = vpop.permute.xlu0 %1599
  %v1602 = vmul.f32 %v1585, %v1600
  %1604 = vrot.lane.b32.xlu0 %v1602, 32
  %v1605 = vpop.permute.xlu0 %1604
  %1607 = vst.msk [vmem:[#allocation3 + $0x30] sm:$0xff] %vm120, %v1605
  %v1608 = vld [vmem:[%s2 + $0x30] sm:$0xff]
  %v1609 = vmul.f32 %v1608, %v1605
  %v1610 = vadd.f32 %v1506, %v1609
  %v1611 = vld [vmem:[#allocation2 + $0x30] sm:$0xff]
  %v1612 = vadd.f32 %v1611, %v809
  %v1613 = vsel %vm120, %v1605, 0
  %1615 = vmatprep.subr.mxu0 0.0
  %1616 = vmatpush1.msra.mxu0 0.0
  %1617 = vmatprep.subr.mxu0 0.0
  %1618 = vmatpush1.msra.mxu0 0.0
  %1619 = vmatprep.subr.mxu0 0.0
  %1620 = vmatpush1.msra.mxu0 0.0
  %1621 = vmatprep.subr.mxu0 0.0
  %1622 = vmatpush1.msra.mxu0 0.0
  %1623 = vmatprep.subr.mxu0 0.0
  %1624 = vmatpush1.msra.mxu0 0.0
  %1625 = vmatprep.subr.mxu0 0.0
  %1626 = vmatpush1.msra.mxu0 0.0
  %1627 = vmatprep.subr.mxu0 0.0
  %1628 = vmatpush1.msra.mxu0 0.0
  %1629 = vmatprep.subr.mxu0 0.0
  %1630 = vmatpush1.msra.mxu0 0.0
  %1631 = vmatprep.subr.mxu0 0.0
  %1632 = vmatpush1.msra.mxu0 0.0
  %1633 = vmatprep.subr.mxu0 0.0
  %1634 = vmatpush1.msra.mxu0 0.0
  %1635 = vmatprep.subr.mxu0 0.0
  %1636 = vmatpush1.msra.mxu0 0.0
  %1637 = vmatprep.subr.mxu0 0.0
  %1638 = vmatpush1.msra.mxu0 0.0
  %1639 = vmatprep.subr.mxu0 0.0
  %1640 = vmatpush1.msra.mxu0 %v85
  %1641 = vmatprep.subr.mxu0 0.0
  %1642 = vmatpush1.msra.mxu0 %v84
  %1643 = vmatprep.subr.mxu0 0.0
  %1644 = vmatpush1.msra.mxu0 %v83
  %1645 = vmatprep.subr.mxu0 0.0
  %1646 = vmatpush1.msra.mxu0 %v82
  %1647 = vmatprep.subr.mxu0 0.0
  %1648 = vmatpush2.msra.mxu0 0.0
  %1649 = vmatprep.subr.mxu0 0.0
  %1650 = vmatpush2.msra.mxu0 0.0
  %1651 = vmatprep.subr.mxu0 0.0
  %1652 = vmatpush2.msra.mxu0 0.0
  %1653 = vmatprep.subr.mxu0 0.0
  %1654 = vmatpush2.msra.mxu0 0.0
  %1655 = vmatprep.subr.mxu0 0.0
  %1656 = vmatpush2.msra.mxu0 0.0
  %1657 = vmatprep.subr.mxu0 0.0
  %1658 = vmatpush2.msra.mxu0 0.0
  %1659 = vmatprep.subr.mxu0 0.0
  %1660 = vmatpush2.msra.mxu0 0.0
  %1661 = vmatprep.subr.mxu0 0.0
  %1662 = vmatpush2.msra.mxu0 0.0
  %1663 = vmatprep.subr.mxu0 0.0
  %1664 = vmatpush2.msra.mxu0 0.0
  %1665 = vmatprep.subr.mxu0 0.0
  %1666 = vmatpush2.msra.mxu0 0.0
  %1667 = vmatprep.subr.mxu0 0.0
  %1668 = vmatpush2.msra.mxu0 0.0
  %1669 = vmatprep.subr.mxu0 0.0
  %1670 = vmatpush2.msra.mxu0 0.0
  %1671 = vmatprep.subr.mxu0 0.0
  %1672 = vmatpush2.msra.mxu0 0.0
  %1673 = vmatprep.subr.mxu0 0.0
  %1674 = vmatpush2.msra.mxu0 0.0
  %1675 = vmatprep.subr.mxu0 0.0
  %1676 = vmatpush2.msra.mxu0 0.0
  %1677 = vmatprep.subr.mxu0 0.0
  %1678 = vmatpush2.msra.mxu0 0.0
  %1679 = vmatprep.mubr.f32.mxu0 0.0
  %1680 = vmatmul.mubr.f32.gmra.mxu0 %v1613
  %v1681 = vpop.f32.mrf.mxu0
  %v1682 = vadd.f32 0.0, %v1681
  %v1683 = vpop.f32.mrf.mxu0
  %1684 = vdwg.mxu0
  %v1685 = vadd.f32 %v1612, %v1682
  %v1686 = vmul.f32 %v1685, %v91
  %v1687 = vtanh.pop %v1686
  %v1688 = vmul.f32 %v1687, 0.5
  %v1689 = vadd.f32 %v1688, 0.5
  %v1690 = vmul.f32 %v1689, %v1596
  %1692 = vrot.lane.b32.xlu0 %v1687, 64
  %v1693 = vpop.permute.xlu0 %1692
  %v1695 = vmul.f32 %v1689, %v1693
  %1697 = vrot.lane.b32.xlu0 %v1695, 32
  %v1698 = vpop.permute.xlu0 %1697
  %v1700 = vadd.f32 %v1690, %v1698
  %v1701 = vtanh.pop %v1700
  %1703 = vrot.lane.b32.xlu0 %v1701, 64
  %v1704 = vpop.permute.xlu0 %1703
  %v1706 = vmul.f32 %v1689, %v1704
  %1708 = vrot.lane.b32.xlu0 %v1706, 32
  %v1709 = vpop.permute.xlu0 %1708
  %1711 = vst.msk [vmem:[#allocation3 + $0x38] sm:$0xff] %vm120, %v1709
  %v1712 = vld [vmem:[%s2 + $0x38] sm:$0xff]
  %v1713 = vmul.f32 %v1712, %v1709
  %v1714 = vadd.f32 %v1610, %v1713
  %v1716 = vsel %vm120, %v1714, 0
  %1718 = vmatprep.subr.mxu0 0.0
  %1719 = vmatpush1.msra.mxu0 0.0
  %1720 = vmatprep.subr.mxu0 0.0
  %1721 = vmatpush1.msra.mxu0 0.0
  %1722 = vmatprep.subr.mxu0 0.0
  %1723 = vmatpush1.msra.mxu0 0.0
  %1724 = vmatprep.subr.mxu0 0.0
  %1725 = vmatpush1.msra.mxu0 0.0
  %1726 = vmatprep.subr.mxu0 0.0
  %1727 = vmatpush1.msra.mxu0 0.0
  %1728 = vmatprep.subr.mxu0 0.0
  %1729 = vmatpush1.msra.mxu0 0.0
  %1730 = vmatprep.subr.mxu0 0.0
  %1731 = vmatpush1.msra.mxu0 0.0
  %1732 = vmatprep.subr.mxu0 0.0
  %1733 = vmatpush1.msra.mxu0 0.0
  %1734 = vmatprep.subr.mxu0 0.0
  %1735 = vmatpush1.msra.mxu0 0.0
  %1736 = vmatprep.subr.mxu0 0.0
  %1737 = vmatpush1.msra.mxu0 0.0
  %1738 = vmatprep.subr.mxu0 0.0
  %1739 = vmatpush1.msra.mxu0 0.0
  %1740 = vmatprep.subr.mxu0 0.0
  %1741 = vmatpush1.msra.mxu0 0.0
  %1742 = vmatprep.subr.mxu0 0.0
  %1743 = vmatpush1.msra.mxu0 %v61
  %1744 = vmatprep.subr.mxu0 0.0
  %1745 = vmatpush1.msra.mxu0 %v60
  %1746 = vmatprep.subr.mxu0 0.0
  %1747 = vmatpush1.msra.mxu0 %v59
  %1748 = vmatprep.subr.mxu0 0.0
  %1749 = vmatpush1.msra.mxu0 %v58
  %1750 = vmatprep.subr.mxu0 0.0
  %1751 = vmatpush2.msra.mxu0 0.0
  %1752 = vmatprep.subr.mxu0 0.0
  %1753 = vmatpush2.msra.mxu0 0.0
  %1754 = vmatprep.subr.mxu0 0.0
  %1755 = vmatpush2.msra.mxu0 0.0
  %1756 = vmatprep.subr.mxu0 0.0
  %1757 = vmatpush2.msra.mxu0 0.0
  %1758 = vmatprep.subr.mxu0 0.0
  %1759 = vmatpush2.msra.mxu0 0.0
  %1760 = vmatprep.subr.mxu0 0.0
  %1761 = vmatpush2.msra.mxu0 0.0
  %1762 = vmatprep.subr.mxu0 0.0
  %1763 = vmatpush2.msra.mxu0 0.0
  %1764 = vmatprep.subr.mxu0 0.0
  %1765 = vmatpush2.msra.mxu0 0.0
  %1766 = vmatprep.subr.mxu0 0.0
  %1767 = vmatpush2.msra.mxu0 0.0
  %1768 = vmatprep.subr.mxu0 0.0
  %1769 = vmatpush2.msra.mxu0 0.0
  %1770 = vmatprep.subr.mxu0 0.0
  %1771 = vmatpush2.msra.mxu0 0.0
  %1772 = vmatprep.subr.mxu0 0.0
  %1773 = vmatpush2.msra.mxu0 0.0
  %1774 = vmatprep.subr.mxu0 0.0
  %1775 = vmatpush2.msra.mxu0 0.0
  %1776 = vmatprep.subr.mxu0 0.0
  %1777 = vmatpush2.msra.mxu0 0.0
  %1778 = vmatprep.subr.mxu0 0.0
  %1779 = vmatpush2.msra.mxu0 0.0
  %1780 = vmatprep.subr.mxu0 0.0
  %1781 = vmatpush2.msra.mxu0 0.0
  %1782 = vmatprep.mubr.f32.mxu0 0.0
  %1783 = vmatmul.mubr.f32.gmra.mxu0 %v1716
  %v1784 = vpop.f32.mrf.mxu0
  %v1785 = vadd.f32 0.0, %v1784
  %v1786 = vpop.f32.mrf.mxu0
  %1787 = vdwg.mxu0
  %v1788 = vadd.f32 %v487, %v1785
  %1789 = vmatprep.subr.mxu0 0.0
  %1790 = vmatpush1.msra.mxu0 0.0
  %1791 = vmatprep.subr.mxu0 0.0
  %1792 = vmatpush1.msra.mxu0 0.0
  %1793 = vmatprep.subr.mxu0 0.0
  %1794 = vmatpush1.msra.mxu0 0.0
  %1795 = vmatprep.subr.mxu0 0.0
  %1796 = vmatpush1.msra.mxu0 0.0
  %1797 = vmatprep.subr.mxu0 0.0
  %1798 = vmatpush1.msra.mxu0 0.0
  %1799 = vmatprep.subr.mxu0 0.0
  %1800 = vmatpush1.msra.mxu0 0.0
  %1801 = vmatprep.subr.mxu0 0.0
  %1802 = vmatpush1.msra.mxu0 0.0
  %1803 = vmatprep.subr.mxu0 0.0
  %1804 = vmatpush1.msra.mxu0 0.0
  %1805 = vmatprep.subr.mxu0 0.0
  %1806 = vmatpush1.msra.mxu0 0.0
  %1807 = vmatprep.subr.mxu0 0.0
  %1808 = vmatpush1.msra.mxu0 0.0
  %1809 = vmatprep.subr.mxu0 0.0
  %1810 = vmatpush1.msra.mxu0 0.0
  %1811 = vmatprep.subr.mxu0 0.0
  %1812 = vmatpush1.msra.mxu0 0.0
  %1813 = vmatprep.subr.mxu0 0.0
  %1814 = vmatpush1.msra.mxu0 %v65
  %1815 = vmatprep.subr.mxu0 0.0
  %1816 = vmatpush1.msra.mxu0 %v64
  %1817 = vmatprep.subr.mxu0 0.0
  %1818 = vmatpush1.msra.mxu0 %v63
  %1819 = vmatprep.subr.mxu0 0.0
  %1820 = vmatpush1.msra.mxu0 %v62
  %1821 = vmatprep.subr.mxu0 0.0
  %1822 = vmatpush2.msra.mxu0 0.0
  %1823 = vmatprep.subr.mxu0 0.0
  %1824 = vmatpush2.msra.mxu0 0.0
  %1825 = vmatprep.subr.mxu0 0.0
  %1826 = vmatpush2.msra.mxu0 0.0
  %1827 = vmatprep.subr.mxu0 0.0
  %1828 = vmatpush2.msra.mxu0 0.0
  %1829 = vmatprep.subr.mxu0 0.0
  %1830 = vmatpush2.msra.mxu0 0.0
  %1831 = vmatprep.subr.mxu0 0.0
  %1832 = vmatpush2.msra.mxu0 0.0
  %1833 = vmatprep.subr.mxu0 0.0
  %1834 = vmatpush2.msra.mxu0 0.0
  %1835 = vmatprep.subr.mxu0 0.0
  %1836 = vmatpush2.msra.mxu0 0.0
  %1837 = vmatprep.subr.mxu0 0.0
  %1838 = vmatpush2.msra.mxu0 0.0
  %1839 = vmatprep.subr.mxu0 0.0
  %1840 = vmatpush2.msra.mxu0 0.0
  %1841 = vmatprep.subr.mxu0 0.0
  %1842 = vmatpush2.msra.mxu0 0.0
  %1843 = vmatprep.subr.mxu0 0.0
  %1844 = vmatpush2.msra.mxu0 0.0
  %1845 = vmatprep.subr.mxu0 0.0
  %1846 = vmatpush2.msra.mxu0 0.0
  %1847 = vmatprep.subr.mxu0 0.0
  %1848 = vmatpush2.msra.mxu0 0.0
  %1849 = vmatprep.subr.mxu0 0.0
  %1850 = vmatpush2.msra.mxu0 0.0
  %1851 = vmatprep.subr.mxu0 0.0
  %1852 = vmatpush2.msra.mxu0 0.0
  %1853 = vmatprep.mubr.f32.mxu0 0.0
  %1854 = vmatmul.mubr.f32.gmra.mxu0 %v740
  %v1855 = vpop.f32.mrf.mxu0
  %v1856 = vadd.f32 0.0, %v1855
  %v1857 = vpop.f32.mrf.mxu0
  %1858 = vdwg.mxu0
  %v1859 = vadd.f32 %v1788, %v1856
  %v1860 = vadd.f32 %v1859, %v66
  %v1861 = vmul.f32 %v1860, %v91
  %v1862 = vtanh.pop %v1861
  %v1863 = vmul.f32 %v1862, 0.5
  %v1864 = vadd.f32 %v1863, 0.5
  %v1865 = vmul.f32 %v1864, %v730
  %1867 = vrot.lane.b32.xlu0 %v1862, 64
  %v1868 = vpop.permute.xlu0 %1867
  %v1870 = vmul.f32 %v1864, %v1868
  %1872 = vrot.lane.b32.xlu0 %v1870, 32
  %v1873 = vpop.permute.xlu0 %1872
  %v1875 = vadd.f32 %v1865, %v1873
  %v1876 = vtanh.pop %v1875
  %1878 = vrot.lane.b32.xlu0 %v1876, 64
  %v1879 = vpop.permute.xlu0 %1878
  %v1881 = vmul.f32 %v1864, %v1879
  %1883 = vrot.lane.b32.xlu0 %v1881, 32
  %v1884 = vpop.permute.xlu0 %1883
  %v1885 = vsel %vm120, %v1884, 0
  %1887 = vmatprep.subr.mxu0 0.0
  %1888 = vmatpush1.msra.mxu0 0.0
  %1889 = vmatprep.subr.mxu0 0.0
  %1890 = vmatpush1.msra.mxu0 0.0
  %1891 = vmatprep.subr.mxu0 0.0
  %1892 = vmatpush1.msra.mxu0 0.0
  %1893 = vmatprep.subr.mxu0 0.0
  %1894 = vmatpush1.msra.mxu0 0.0
  %1895 = vmatprep.subr.mxu0 0.0
  %1896 = vmatpush1.msra.mxu0 0.0
  %1897 = vmatprep.subr.mxu0 0.0
  %1898 = vmatpush1.msra.mxu0 0.0
  %1899 = vmatprep.subr.mxu0 0.0
  %1900 = vmatpush1.msra.mxu0 0.0
  %1901 = vmatprep.subr.mxu0 0.0
  %1902 = vmatpush1.msra.mxu0 0.0
  %1903 = vmatprep.subr.mxu0 0.0
  %1904 = vmatpush1.msra.mxu0 0.0
  %1905 = vmatprep.subr.mxu0 0.0
  %1906 = vmatpush1.msra.mxu0 0.0
  %1907 = vmatprep.subr.mxu0 0.0
  %1908 = vmatpush1.msra.mxu0 0.0
  %1909 = vmatprep.subr.mxu0 0.0
  %1910 = vmatpush1.msra.mxu0 0.0
  %1911 = vmatprep.subr.mxu0 %v77
  %1912 = vmatpush1.msra.mxu0 %v76
  %1913 = vmatprep.subr.mxu0 %v74
  %1914 = vmatpush1.msra.mxu0 %v73
  %1915 = vmatprep.subr.mxu0 %v71
  %1916 = vmatpush1.msra.mxu0 %v70
  %1917 = vmatprep.subr.mxu0 %v68
  %1918 = vmatpush1.msra.mxu0 %v67
  %1919 = vmatprep.subr.mxu0 0.0
  %1920 = vmatpush2.msra.mxu0 0.0
  %1921 = vmatprep.subr.mxu0 0.0
  %1922 = vmatpush2.msra.mxu0 0.0
  %1923 = vmatprep.subr.mxu0 0.0
  %1924 = vmatpush2.msra.mxu0 0.0
  %1925 = vmatprep.subr.mxu0 0.0
  %1926 = vmatpush2.msra.mxu0 0.0
  %1927 = vmatprep.subr.mxu0 0.0
  %1928 = vmatpush2.msra.mxu0 0.0
  %1929 = vmatprep.subr.mxu0 0.0
  %1930 = vmatpush2.msra.mxu0 0.0
  %1931 = vmatprep.subr.mxu0 0.0
  %1932 = vmatpush2.msra.mxu0 0.0
  %1933 = vmatprep.subr.mxu0 0.0
  %1934 = vmatpush2.msra.mxu0 0.0
  %1935 = vmatprep.subr.mxu0 0.0
  %1936 = vmatpush2.msra.mxu0 0.0
  %1937 = vmatprep.subr.mxu0 0.0
  %1938 = vmatpush2.msra.mxu0 0.0
  %1939 = vmatprep.subr.mxu0 0.0
  %1940 = vmatpush2.msra.mxu0 0.0
  %1941 = vmatprep.subr.mxu0 0.0
  %1942 = vmatpush2.msra.mxu0 0.0
  %1943 = vmatprep.subr.mxu0 0.0
  %1944 = vmatpush2.msra.mxu0 0.0
  %1945 = vmatprep.subr.mxu0 0.0
  %1946 = vmatpush2.msra.mxu0 0.0
  %1947 = vmatprep.subr.mxu0 0.0
  %1948 = vmatpush2.msra.mxu0 0.0
  %1949 = vmatprep.subr.mxu0 0.0
  %1950 = vmatpush2.msra.mxu0 0.0
  %1951 = vmatprep.mubr.f32.mxu0 0.0
  %1952 = vmatmul.mubr.f32.gmra.mxu0 %v1885
  %v1953 = vpop.f32.mrf.mxu0
  %v1954 = vadd.f32 %v79, %v1953
  %v1955 = vpop.f32.mrf.mxu0
  %v1956 = vadd.f32 %v80, %v1955
  %1957 = vdwg.mxu0
  %1958 = vmatprep.subr.mxu0 0.0
  %1959 = vmatpush1.msra.mxu0 0.0
  %1960 = vmatprep.subr.mxu0 0.0
  %1961 = vmatpush1.msra.mxu0 0.0
  %1962 = vmatprep.subr.mxu0 0.0
  %1963 = vmatpush1.msra.mxu0 0.0
  %1964 = vmatprep.subr.mxu0 0.0
  %1965 = vmatpush1.msra.mxu0 0.0
  %1966 = vmatprep.subr.mxu0 0.0
  %1967 = vmatpush1.msra.mxu0 0.0
  %1968 = vmatprep.subr.mxu0 0.0
  %1969 = vmatpush1.msra.mxu0 0.0
  %1970 = vmatprep.subr.mxu0 0.0
  %1971 = vmatpush1.msra.mxu0 0.0
  %1972 = vmatprep.subr.mxu0 0.0
  %1973 = vmatpush1.msra.mxu0 0.0
  %1974 = vmatprep.subr.mxu0 0.0
  %1975 = vmatpush1.msra.mxu0 0.0
  %1976 = vmatprep.subr.mxu0 0.0
  %1977 = vmatpush1.msra.mxu0 0.0
  %1978 = vmatprep.subr.mxu0 0.0
  %1979 = vmatpush1.msra.mxu0 0.0
  %1980 = vmatprep.subr.mxu0 0.0
  %1981 = vmatpush1.msra.mxu0 0.0
  %1982 = vmatprep.subr.mxu0 0.0
  %1983 = vmatpush1.msra.mxu0 %v78
  %1984 = vmatprep.subr.mxu0 0.0
  %1985 = vmatpush1.msra.mxu0 %v75
  %1986 = vmatprep.subr.mxu0 0.0
  %1987 = vmatpush1.msra.mxu0 %v72
  %1988 = vmatprep.subr.mxu0 0.0
  %1989 = vmatpush1.msra.mxu0 %v69
  %1990 = vmatprep.subr.mxu0 0.0
  %1991 = vmatpush2.msra.mxu0 0.0
  %1992 = vmatprep.subr.mxu0 0.0
  %1993 = vmatpush2.msra.mxu0 0.0
  %1994 = vmatprep.subr.mxu0 0.0
  %1995 = vmatpush2.msra.mxu0 0.0
  %1996 = vmatprep.subr.mxu0 0.0
  %1997 = vmatpush2.msra.mxu0 0.0
  %1998 = vmatprep.subr.mxu0 0.0
  %1999 = vmatpush2.msra.mxu0 0.0
  %2000 = vmatprep.subr.mxu0 0.0
  %2001 = vmatpush2.msra.mxu0 0.0
  %2002 = vmatprep.subr.mxu0 0.0
  %2003 = vmatpush2.msra.mxu0 0.0
  %2004 = vmatprep.subr.mxu0 0.0
  %2005 = vmatpush2.msra.mxu0 0.0
  %2006 = vmatprep.subr.mxu0 0.0
  %2007 = vmatpush2.msra.mxu0 0.0
  %2008 = vmatprep.subr.mxu0 0.0
  %2009 = vmatpush2.msra.mxu0 0.0
  %2010 = vmatprep.subr.mxu0 0.0
  %2011 = vmatpush2.msra.mxu0 0.0
  %2012 = vmatprep.subr.mxu0 0.0
  %2013 = vmatpush2.msra.mxu0 0.0
  %2014 = vmatprep.subr.mxu0 0.0
  %2015 = vmatpush2.msra.mxu0 0.0
  %2016 = vmatprep.subr.mxu0 0.0
  %2017 = vmatpush2.msra.mxu0 0.0
  %2018 = vmatprep.subr.mxu0 0.0
  %2019 = vmatpush2.msra.mxu0 0.0
  %2020 = vmatprep.subr.mxu0 0.0
  %2021 = vmatpush2.msra.mxu0 0.0
  %2022 = vmatprep.mubr.f32.mxu0 0.0
  %2023 = vmatmul.mubr.f32.gmra.mxu0 %v1885
  %v2024 = vpop.f32.mrf.mxu0
  %v2025 = vadd.f32 %v81, %v2024
  %v2026 = vpop.f32.mrf.mxu0
  %2027 = vdwg.mxu0
  %v2028 = vadd.f32 %v1956, %v1954
  %v2030 = vsel %vm120, %v2025, 0
  %2032 = vmatprep.subr.mxu0 0.0
  %2033 = vmatpush1.msra.mxu0 0.0
  %2034 = vmatprep.subr.mxu0 0.0
  %2035 = vmatpush1.msra.mxu0 0.0
  %2036 = vmatprep.subr.mxu0 0.0
  %2037 = vmatpush1.msra.mxu0 0.0
  %2038 = vmatprep.subr.mxu0 0.0
  %2039 = vmatpush1.msra.mxu0 0.0
  %2040 = vmatprep.subr.mxu0 0.0
  %2041 = vmatpush1.msra.mxu0 0.0
  %2042 = vmatprep.subr.mxu0 0.0
  %2043 = vmatpush1.msra.mxu0 0.0
  %2044 = vmatprep.subr.mxu0 0.0
  %2045 = vmatpush1.msra.mxu0 0.0
  %2046 = vmatprep.subr.mxu0 0.0
  %2047 = vmatpush1.msra.mxu0 0.0
  %2048 = vmatprep.subr.mxu0 0.0
  %2049 = vmatpush1.msra.mxu0 0.0
  %2050 = vmatprep.subr.mxu0 0.0
  %2051 = vmatpush1.msra.mxu0 0.0
  %2052 = vmatprep.subr.mxu0 0.0
  %2053 = vmatpush1.msra.mxu0 0.0
  %2054 = vmatprep.subr.mxu0 0.0
  %2055 = vmatpush1.msra.mxu0 0.0
  %2056 = vmatprep.subr.mxu0 0.0
  %2057 = vmatpush1.msra.mxu0 %v85
  %2058 = vmatprep.subr.mxu0 0.0
  %2059 = vmatpush1.msra.mxu0 %v84
  %2060 = vmatprep.subr.mxu0 0.0
  %2061 = vmatpush1.msra.mxu0 %v83
  %2062 = vmatprep.subr.mxu0 0.0
  %2063 = vmatpush1.msra.mxu0 %v82
  %2064 = vmatprep.subr.mxu0 0.0
  %2065 = vmatpush2.msra.mxu0 0.0
  %2066 = vmatprep.subr.mxu0 0.0
  %2067 = vmatpush2.msra.mxu0 0.0
  %2068 = vmatprep.subr.mxu0 0.0
  %2069 = vmatpush2.msra.mxu0 0.0
  %2070 = vmatprep.subr.mxu0 0.0
  %2071 = vmatpush2.msra.mxu0 0.0
  %2072 = vmatprep.subr.mxu0 0.0
  %2073 = vmatpush2.msra.mxu0 0.0
  %2074 = vmatprep.subr.mxu0 0.0
  %2075 = vmatpush2.msra.mxu0 0.0
  %2076 = vmatprep.subr.mxu0 0.0
  %2077 = vmatpush2.msra.mxu0 0.0
  %2078 = vmatprep.subr.mxu0 0.0
  %2079 = vmatpush2.msra.mxu0 0.0
  %2080 = vmatprep.subr.mxu0 0.0
  %2081 = vmatpush2.msra.mxu0 0.0
  %2082 = vmatprep.subr.mxu0 0.0
  %2083 = vmatpush2.msra.mxu0 0.0
  %2084 = vmatprep.subr.mxu0 0.0
  %2085 = vmatpush2.msra.mxu0 0.0
  %2086 = vmatprep.subr.mxu0 0.0
  %2087 = vmatpush2.msra.mxu0 0.0
  %2088 = vmatprep.subr.mxu0 0.0
  %2089 = vmatpush2.msra.mxu0 0.0
  %2090 = vmatprep.subr.mxu0 0.0
  %2091 = vmatpush2.msra.mxu0 0.0
  %2092 = vmatprep.subr.mxu0 0.0
  %2093 = vmatpush2.msra.mxu0 0.0
  %2094 = vmatprep.subr.mxu0 0.0
  %2095 = vmatpush2.msra.mxu0 0.0
  %2096 = vmatprep.mubr.f32.mxu0 0.0
  %2097 = vmatmul.mubr.f32.gmra.mxu0 %v2030
  %v2098 = vpop.f32.mrf.mxu0
  %v2099 = vadd.f32 0.0, %v2098
  %v2100 = vpop.f32.mrf.mxu0
  %2101 = vdwg.mxu0
  %v2102 = vadd.f32 %v2028, %v2099
  %v2103 = vmul.f32 %v2102, %v91
  %v2104 = vtanh.pop %v2103
  %v2105 = vmul.f32 %v2104, 0.5
  %v2106 = vadd.f32 %v2105, 0.5
  %v2107 = vmul.f32 %v2106, %v2025
  %2109 = vrot.lane.b32.xlu0 %v2104, 64
  %v2110 = vpop.permute.xlu0 %2109
  %v2112 = vmul.f32 %v2106, %v2110
  %2114 = vrot.lane.b32.xlu0 %v2112, 32
  %v2115 = vpop.permute.xlu0 %2114
  %v2117 = vadd.f32 %v2107, %v2115
  %v2118 = vtanh.pop %v2117
  %2120 = vrot.lane.b32.xlu0 %v2118, 64
  %v2121 = vpop.permute.xlu0 %2120
  %v2123 = vmul.f32 %v2106, %v2121
  %2125 = vrot.lane.b32.xlu0 %v2123, 32
  %v2126 = vpop.permute.xlu0 %2125
  %2128 = vst.msk [vmem:[#allocation3 + $0x40] sm:$0xff] %vm120, %v2126
  %v2129 = vld [vmem:[%s2 + $0x40] sm:$0xff]
  %v2130 = vmul.f32 %v2129, %v2126
  %v2131 = vadd.f32 %v2130, 0.0
  %v2132 = vld [vmem:[#allocation2 + $0x40] sm:$0xff]
  %v2133 = vadd.f32 %v2132, %v1954
  %v2134 = vsel %vm120, %v2126, 0
  %2136 = vmatprep.subr.mxu0 0.0
  %2137 = vmatpush1.msra.mxu0 0.0
  %2138 = vmatprep.subr.mxu0 0.0
  %2139 = vmatpush1.msra.mxu0 0.0
  %2140 = vmatprep.subr.mxu0 0.0
  %2141 = vmatpush1.msra.mxu0 0.0
  %2142 = vmatprep.subr.mxu0 0.0
  %2143 = vmatpush1.msra.mxu0 0.0
  %2144 = vmatprep.subr.mxu0 0.0
  %2145 = vmatpush1.msra.mxu0 0.0
  %2146 = vmatprep.subr.mxu0 0.0
  %2147 = vmatpush1.msra.mxu0 0.0
  %2148 = vmatprep.subr.mxu0 0.0
  %2149 = vmatpush1.msra.mxu0 0.0
  %2150 = vmatprep.subr.mxu0 0.0
  %2151 = vmatpush1.msra.mxu0 0.0
  %2152 = vmatprep.subr.mxu0 0.0
  %2153 = vmatpush1.msra.mxu0 0.0
  %2154 = vmatprep.subr.mxu0 0.0
  %2155 = vmatpush1.msra.mxu0 0.0
  %2156 = vmatprep.subr.mxu0 0.0
  %2157 = vmatpush1.msra.mxu0 0.0
  %2158 = vmatprep.subr.mxu0 0.0
  %2159 = vmatpush1.msra.mxu0 0.0
  %2160 = vmatprep.subr.mxu0 0.0
  %2161 = vmatpush1.msra.mxu0 %v85
  %2162 = vmatprep.subr.mxu0 0.0
  %2163 = vmatpush1.msra.mxu0 %v84
  %2164 = vmatprep.subr.mxu0 0.0
  %2165 = vmatpush1.msra.mxu0 %v83
  %2166 = vmatprep.subr.mxu0 0.0
  %2167 = vmatpush1.msra.mxu0 %v82
  %2168 = vmatprep.subr.mxu0 0.0
  %2169 = vmatpush2.msra.mxu0 0.0
  %2170 = vmatprep.subr.mxu0 0.0
  %2171 = vmatpush2.msra.mxu0 0.0
  %2172 = vmatprep.subr.mxu0 0.0
  %2173 = vmatpush2.msra.mxu0 0.0
  %2174 = vmatprep.subr.mxu0 0.0
  %2175 = vmatpush2.msra.mxu0 0.0
  %2176 = vmatprep.subr.mxu0 0.0
  %2177 = vmatpush2.msra.mxu0 0.0
  %2178 = vmatprep.subr.mxu0 0.0
  %2179 = vmatpush2.msra.mxu0 0.0
  %2180 = vmatprep.subr.mxu0 0.0
  %2181 = vmatpush2.msra.mxu0 0.0
  %2182 = vmatprep.subr.mxu0 0.0
  %2183 = vmatpush2.msra.mxu0 0.0
  %2184 = vmatprep.subr.mxu0 0.0
  %2185 = vmatpush2.msra.mxu0 0.0
  %2186 = vmatprep.subr.mxu0 0.0
  %2187 = vmatpush2.msra.mxu0 0.0
  %2188 = vmatprep.subr.mxu0 0.0
  %2189 = vmatpush2.msra.mxu0 0.0
  %2190 = vmatprep.subr.mxu0 0.0
  %2191 = vmatpush2.msra.mxu0 0.0
  %2192 = vmatprep.subr.mxu0 0.0
  %2193 = vmatpush2.msra.mxu0 0.0
  %2194 = vmatprep.subr.mxu0 0.0
  %2195 = vmatpush2.msra.mxu0 0.0
  %2196 = vmatprep.subr.mxu0 0.0
  %2197 = vmatpush2.msra.mxu0 0.0
  %2198 = vmatprep.subr.mxu0 0.0
  %2199 = vmatpush2.msra.mxu0 0.0
  %2200 = vmatprep.mubr.f32.mxu0 0.0
  %2201 = vmatmul.mubr.f32.gmra.mxu0 %v2134
  %v2202 = vpop.f32.mrf.mxu0
  %v2203 = vadd.f32 0.0, %v2202
  %v2204 = vpop.f32.mrf.mxu0
  %2205 = vdwg.mxu0
  %v2206 = vadd.f32 %v2133, %v2203
  %v2207 = vmul.f32 %v2206, %v91
  %v2208 = vtanh.pop %v2207
  %v2209 = vmul.f32 %v2208, 0.5
  %v2210 = vadd.f32 %v2209, 0.5
  %v2211 = vmul.f32 %v2210, %v2117
  %2213 = vrot.lane.b32.xlu0 %v2208, 64
  %v2214 = vpop.permute.xlu0 %2213
  %v2216 = vmul.f32 %v2210, %v2214
  %2218 = vrot.lane.b32.xlu0 %v2216, 32
  %v2219 = vpop.permute.xlu0 %2218
  %v2221 = vadd.f32 %v2211, %v2219
  %v2222 = vtanh.pop %v2221
  %2224 = vrot.lane.b32.xlu0 %v2222, 64
  %v2225 = vpop.permute.xlu0 %2224
  %v2227 = vmul.f32 %v2210, %v2225
  %2229 = vrot.lane.b32.xlu0 %v2227, 32
  %v2230 = vpop.permute.xlu0 %2229
  %2232 = vst.msk [vmem:[#allocation3 + $0x48] sm:$0xff] %vm120, %v2230
  %v2233 = vld [vmem:[%s2 + $0x48] sm:$0xff]
  %v2234 = vmul.f32 %v2233, %v2230
  %v2235 = vadd.f32 %v2131, %v2234
  %v2236 = vld [vmem:[#allocation2 + $0x48] sm:$0xff]
  %v2237 = vadd.f32 %v2236, %v1954
  %v2238 = vsel %vm120, %v2230, 0
  %2240 = vmatprep.subr.mxu0 0.0
  %2241 = vmatpush1.msra.mxu0 0.0
  %2242 = vmatprep.subr.mxu0 0.0
  %2243 = vmatpush1.msra.mxu0 0.0
  %2244 = vmatprep.subr.mxu0 0.0
  %2245 = vmatpush1.msra.mxu0 0.0
  %2246 = vmatprep.subr.mxu0 0.0
  %2247 = vmatpush1.msra.mxu0 0.0
  %2248 = vmatprep.subr.mxu0 0.0
  %2249 = vmatpush1.msra.mxu0 0.0
  %2250 = vmatprep.subr.mxu0 0.0
  %2251 = vmatpush1.msra.mxu0 0.0
  %2252 = vmatprep.subr.mxu0 0.0
  %2253 = vmatpush1.msra.mxu0 0.0
  %2254 = vmatprep.subr.mxu0 0.0
  %2255 = vmatpush1.msra.mxu0 0.0
  %2256 = vmatprep.subr.mxu0 0.0
  %2257 = vmatpush1.msra.mxu0 0.0
  %2258 = vmatprep.subr.mxu0 0.0
  %2259 = vmatpush1.msra.mxu0 0.0
  %2260 = vmatprep.subr.mxu0 0.0
  %2261 = vmatpush1.msra.mxu0 0.0
  %2262 = vmatprep.subr.mxu0 0.0
  %2263 = vmatpush1.msra.mxu0 0.0
  %2264 = vmatprep.subr.mxu0 0.0
  %2265 = vmatpush1.msra.mxu0 %v85
  %2266 = vmatprep.subr.mxu0 0.0
  %2267 = vmatpush1.msra.mxu0 %v84
  %2268 = vmatprep.subr.mxu0 0.0
  %2269 = vmatpush1.msra.mxu0 %v83
  %2270 = vmatprep.subr.mxu0 0.0
  %2271 = vmatpush1.msra.mxu0 %v82
  %2272 = vmatprep.subr.mxu0 0.0
  %2273 = vmatpush2.msra.mxu0 0.0
  %2274 = vmatprep.subr.mxu0 0.0
  %2275 = vmatpush2.msra.mxu0 0.0
  %2276 = vmatprep.subr.mxu0 0.0
  %2277 = vmatpush2.msra.mxu0 0.0
  %2278 = vmatprep.subr.mxu0 0.0
  %2279 = vmatpush2.msra.mxu0 0.0
  %2280 = vmatprep.subr.mxu0 0.0
  %2281 = vmatpush2.msra.mxu0 0.0
  %2282 = vmatprep.subr.mxu0 0.0
  %2283 = vmatpush2.msra.mxu0 0.0
  %2284 = vmatprep.subr.mxu0 0.0
  %2285 = vmatpush2.msra.mxu0 0.0
  %2286 = vmatprep.subr.mxu0 0.0
  %2287 = vmatpush2.msra.mxu0 0.0
  %2288 = vmatprep.subr.mxu0 0.0
  %2289 = vmatpush2.msra.mxu0 0.0
  %2290 = vmatprep.subr.mxu0 0.0
  %2291 = vmatpush2.msra.mxu0 0.0
  %2292 = vmatprep.subr.mxu0 0.0
  %2293 = vmatpush2.msra.mxu0 0.0
  %2294 = vmatprep.subr.mxu0 0.0
  %2295 = vmatpush2.msra.mxu0 0.0
  %2296 = vmatprep.subr.mxu0 0.0
  %2297 = vmatpush2.msra.mxu0 0.0
  %2298 = vmatprep.subr.mxu0 0.0
  %2299 = vmatpush2.msra.mxu0 0.0
  %2300 = vmatprep.subr.mxu0 0.0
  %2301 = vmatpush2.msra.mxu0 0.0
  %2302 = vmatprep.subr.mxu0 0.0
  %2303 = vmatpush2.msra.mxu0 0.0
  %2304 = vmatprep.mubr.f32.mxu0 0.0
  %2305 = vmatmul.mubr.f32.gmra.mxu0 %v2238
  %v2306 = vpop.f32.mrf.mxu0
  %v2307 = vadd.f32 0.0, %v2306
  %v2308 = vpop.f32.mrf.mxu0
  %2309 = vdwg.mxu0
  %v2310 = vadd.f32 %v2237, %v2307
  %v2311 = vmul.f32 %v2310, %v91
  %v2312 = vtanh.pop %v2311
  %v2313 = vmul.f32 %v2312, 0.5
  %v2314 = vadd.f32 %v2313, 0.5
  %v2315 = vmul.f32 %v2314, %v2221
  %2317 = vrot.lane.b32.xlu0 %v2312, 64
  %v2318 = vpop.permute.xlu0 %2317
  %v2320 = vmul.f32 %v2314, %v2318
  %2322 = vrot.lane.b32.xlu0 %v2320, 32
  %v2323 = vpop.permute.xlu0 %2322
  %v2325 = vadd.f32 %v2315, %v2323
  %v2326 = vtanh.pop %v2325
  %2328 = vrot.lane.b32.xlu0 %v2326, 64
  %v2329 = vpop.permute.xlu0 %2328
  %v2331 = vmul.f32 %v2314, %v2329
  %2333 = vrot.lane.b32.xlu0 %v2331, 32
  %v2334 = vpop.permute.xlu0 %2333
  %2336 = vst.msk [vmem:[#allocation3 + $0x50] sm:$0xff] %vm120, %v2334
  %v2337 = vld [vmem:[%s2 + $0x50] sm:$0xff]
  %v2338 = vmul.f32 %v2337, %v2334
  %v2339 = vadd.f32 %v2235, %v2338
  %v2340 = vld [vmem:[#allocation2 + $0x50] sm:$0xff]
  %v2341 = vadd.f32 %v2340, %v1954
  %v2342 = vsel %vm120, %v2334, 0
  %2344 = vmatprep.subr.mxu0 0.0
  %2345 = vmatpush1.msra.mxu0 0.0
  %2346 = vmatprep.subr.mxu0 0.0
  %2347 = vmatpush1.msra.mxu0 0.0
  %2348 = vmatprep.subr.mxu0 0.0
  %2349 = vmatpush1.msra.mxu0 0.0
  %2350 = vmatprep.subr.mxu0 0.0
  %2351 = vmatpush1.msra.mxu0 0.0
  %2352 = vmatprep.subr.mxu0 0.0
  %2353 = vmatpush1.msra.mxu0 0.0
  %2354 = vmatprep.subr.mxu0 0.0
  %2355 = vmatpush1.msra.mxu0 0.0
  %2356 = vmatprep.subr.mxu0 0.0
  %2357 = vmatpush1.msra.mxu0 0.0
  %2358 = vmatprep.subr.mxu0 0.0
  %2359 = vmatpush1.msra.mxu0 0.0
  %2360 = vmatprep.subr.mxu0 0.0
  %2361 = vmatpush1.msra.mxu0 0.0
  %2362 = vmatprep.subr.mxu0 0.0
  %2363 = vmatpush1.msra.mxu0 0.0
  %2364 = vmatprep.subr.mxu0 0.0
  %2365 = vmatpush1.msra.mxu0 0.0
  %2366 = vmatprep.subr.mxu0 0.0
  %2367 = vmatpush1.msra.mxu0 0.0
  %2368 = vmatprep.subr.mxu0 0.0
  %2369 = vmatpush1.msra.mxu0 %v85
  %2370 = vmatprep.subr.mxu0 0.0
  %2371 = vmatpush1.msra.mxu0 %v84
  %2372 = vmatprep.subr.mxu0 0.0
  %2373 = vmatpush1.msra.mxu0 %v83
  %2374 = vmatprep.subr.mxu0 0.0
  %2375 = vmatpush1.msra.mxu0 %v82
  %2376 = vmatprep.subr.mxu0 0.0
  %2377 = vmatpush2.msra.mxu0 0.0
  %2378 = vmatprep.subr.mxu0 0.0
  %2379 = vmatpush2.msra.mxu0 0.0
  %2380 = vmatprep.subr.mxu0 0.0
  %2381 = vmatpush2.msra.mxu0 0.0
  %2382 = vmatprep.subr.mxu0 0.0
  %2383 = vmatpush2.msra.mxu0 0.0
  %2384 = vmatprep.subr.mxu0 0.0
  %2385 = vmatpush2.msra.mxu0 0.0
  %2386 = vmatprep.subr.mxu0 0.0
  %2387 = vmatpush2.msra.mxu0 0.0
  %2388 = vmatprep.subr.mxu0 0.0
  %2389 = vmatpush2.msra.mxu0 0.0
  %2390 = vmatprep.subr.mxu0 0.0
  %2391 = vmatpush2.msra.mxu0 0.0
  %2392 = vmatprep.subr.mxu0 0.0
  %2393 = vmatpush2.msra.mxu0 0.0
  %2394 = vmatprep.subr.mxu0 0.0
  %2395 = vmatpush2.msra.mxu0 0.0
  %2396 = vmatprep.subr.mxu0 0.0
  %2397 = vmatpush2.msra.mxu0 0.0
  %2398 = vmatprep.subr.mxu0 0.0
  %2399 = vmatpush2.msra.mxu0 0.0
  %2400 = vmatprep.subr.mxu0 0.0
  %2401 = vmatpush2.msra.mxu0 0.0
  %2402 = vmatprep.subr.mxu0 0.0
  %2403 = vmatpush2.msra.mxu0 0.0
  %2404 = vmatprep.subr.mxu0 0.0
  %2405 = vmatpush2.msra.mxu0 0.0
  %2406 = vmatprep.subr.mxu0 0.0
  %2407 = vmatpush2.msra.mxu0 0.0
  %2408 = vmatprep.mubr.f32.mxu0 0.0
  %2409 = vmatmul.mubr.f32.gmra.mxu0 %v2342
  %v2410 = vpop.f32.mrf.mxu0
  %v2411 = vadd.f32 0.0, %v2410
  %v2412 = vpop.f32.mrf.mxu0
  %2413 = vdwg.mxu0
  %v2414 = vadd.f32 %v2341, %v2411
  %v2415 = vmul.f32 %v2414, %v91
  %v2416 = vtanh.pop %v2415
  %v2417 = vmul.f32 %v2416, 0.5
  %v2418 = vadd.f32 %v2417, 0.5
  %v2419 = vmul.f32 %v2418, %v2325
  %2421 = vrot.lane.b32.xlu0 %v2416, 64
  %v2422 = vpop.permute.xlu0 %2421
  %v2424 = vmul.f32 %v2418, %v2422
  %2426 = vrot.lane.b32.xlu0 %v2424, 32
  %v2427 = vpop.permute.xlu0 %2426
  %v2429 = vadd.f32 %v2419, %v2427
  %v2430 = vtanh.pop %v2429
  %2432 = vrot.lane.b32.xlu0 %v2430, 64
  %v2433 = vpop.permute.xlu0 %2432
  %v2435 = vmul.f32 %v2418, %v2433
  %2437 = vrot.lane.b32.xlu0 %v2435, 32
  %v2438 = vpop.permute.xlu0 %2437
  %2440 = vst.msk [vmem:[#allocation3 + $0x58] sm:$0xff] %vm120, %v2438
  %v2441 = vld [vmem:[%s2 + $0x58] sm:$0xff]
  %v2442 = vmul.f32 %v2441, %v2438
  %v2443 = vadd.f32 %v2339, %v2442
  %v2444 = vld [vmem:[#allocation2 + $0x58] sm:$0xff]
  %v2445 = vadd.f32 %v2444, %v1954
  %v2446 = vsel %vm120, %v2438, 0
  %2448 = vmatprep.subr.mxu0 0.0
  %2449 = vmatpush1.msra.mxu0 0.0
  %2450 = vmatprep.subr.mxu0 0.0
  %2451 = vmatpush1.msra.mxu0 0.0
  %2452 = vmatprep.subr.mxu0 0.0
  %2453 = vmatpush1.msra.mxu0 0.0
  %2454 = vmatprep.subr.mxu0 0.0
  %2455 = vmatpush1.msra.mxu0 0.0
  %2456 = vmatprep.subr.mxu0 0.0
  %2457 = vmatpush1.msra.mxu0 0.0
  %2458 = vmatprep.subr.mxu0 0.0
  %2459 = vmatpush1.msra.mxu0 0.0
  %2460 = vmatprep.subr.mxu0 0.0
  %2461 = vmatpush1.msra.mxu0 0.0
  %2462 = vmatprep.subr.mxu0 0.0
  %2463 = vmatpush1.msra.mxu0 0.0
  %2464 = vmatprep.subr.mxu0 0.0
  %2465 = vmatpush1.msra.mxu0 0.0
  %2466 = vmatprep.subr.mxu0 0.0
  %2467 = vmatpush1.msra.mxu0 0.0
  %2468 = vmatprep.subr.mxu0 0.0
  %2469 = vmatpush1.msra.mxu0 0.0
  %2470 = vmatprep.subr.mxu0 0.0
  %2471 = vmatpush1.msra.mxu0 0.0
  %2472 = vmatprep.subr.mxu0 0.0
  %2473 = vmatpush1.msra.mxu0 %v85
  %2474 = vmatprep.subr.mxu0 0.0
  %2475 = vmatpush1.msra.mxu0 %v84
  %2476 = vmatprep.subr.mxu0 0.0
  %2477 = vmatpush1.msra.mxu0 %v83
  %2478 = vmatprep.subr.mxu0 0.0
  %2479 = vmatpush1.msra.mxu0 %v82
  %2480 = vmatprep.subr.mxu0 0.0
  %2481 = vmatpush2.msra.mxu0 0.0
  %2482 = vmatprep.subr.mxu0 0.0
  %2483 = vmatpush2.msra.mxu0 0.0
  %2484 = vmatprep.subr.mxu0 0.0
  %2485 = vmatpush2.msra.mxu0 0.0
  %2486 = vmatprep.subr.mxu0 0.0
  %2487 = vmatpush2.msra.mxu0 0.0
  %2488 = vmatprep.subr.mxu0 0.0
  %2489 = vmatpush2.msra.mxu0 0.0
  %2490 = vmatprep.subr.mxu0 0.0
  %2491 = vmatpush2.msra.mxu0 0.0
  %2492 = vmatprep.subr.mxu0 0.0
  %2493 = vmatpush2.msra.mxu0 0.0
  %2494 = vmatprep.subr.mxu0 0.0
  %2495 = vmatpush2.msra.mxu0 0.0
  %2496 = vmatprep.subr.mxu0 0.0
  %2497 = vmatpush2.msra.mxu0 0.0
  %2498 = vmatprep.subr.mxu0 0.0
  %2499 = vmatpush2.msra.mxu0 0.0
  %2500 = vmatprep.subr.mxu0 0.0
  %2501 = vmatpush2.msra.mxu0 0.0
  %2502 = vmatprep.subr.mxu0 0.0
  %2503 = vmatpush2.msra.mxu0 0.0
  %2504 = vmatprep.subr.mxu0 0.0
  %2505 = vmatpush2.msra.mxu0 0.0
  %2506 = vmatprep.subr.mxu0 0.0
  %2507 = vmatpush2.msra.mxu0 0.0
  %2508 = vmatprep.subr.mxu0 0.0
  %2509 = vmatpush2.msra.mxu0 0.0
  %2510 = vmatprep.subr.mxu0 0.0
  %2511 = vmatpush2.msra.mxu0 0.0
  %2512 = vmatprep.mubr.f32.mxu0 0.0
  %2513 = vmatmul.mubr.f32.gmra.mxu0 %v2446
  %v2514 = vpop.f32.mrf.mxu0
  %v2515 = vadd.f32 0.0, %v2514
  %v2516 = vpop.f32.mrf.mxu0
  %2517 = vdwg.mxu0
  %v2518 = vadd.f32 %v2445, %v2515
  %v2519 = vmul.f32 %v2518, %v91
  %v2520 = vtanh.pop %v2519
  %v2521 = vmul.f32 %v2520, 0.5
  %v2522 = vadd.f32 %v2521, 0.5
  %v2523 = vmul.f32 %v2522, %v2429
  %2525 = vrot.lane.b32.xlu0 %v2520, 64
  %v2526 = vpop.permute.xlu0 %2525
  %v2528 = vmul.f32 %v2522, %v2526
  %2530 = vrot.lane.b32.xlu0 %v2528, 32
  %v2531 = vpop.permute.xlu0 %2530
  %v2533 = vadd.f32 %v2523, %v2531
  %v2534 = vtanh.pop %v2533
  %2536 = vrot.lane.b32.xlu0 %v2534, 64
  %v2537 = vpop.permute.xlu0 %2536
  %v2539 = vmul.f32 %v2522, %v2537
  %2541 = vrot.lane.b32.xlu0 %v2539, 32
  %v2542 = vpop.permute.xlu0 %2541
  %2544 = vst.msk [vmem:[#allocation3 + $0x60] sm:$0xff] %vm120, %v2542
  %v2545 = vld [vmem:[%s2 + $0x60] sm:$0xff]
  %v2546 = vmul.f32 %v2545, %v2542
  %v2547 = vadd.f32 %v2443, %v2546
  %v2548 = vld [vmem:[#allocation2 + $0x60] sm:$0xff]
  %v2549 = vadd.f32 %v2548, %v1954
  %v2550 = vsel %vm120, %v2542, 0
  %2552 = vmatprep.subr.mxu0 0.0
  %2553 = vmatpush1.msra.mxu0 0.0
  %2554 = vmatprep.subr.mxu0 0.0
  %2555 = vmatpush1.msra.mxu0 0.0
  %2556 = vmatprep.subr.mxu0 0.0
  %2557 = vmatpush1.msra.mxu0 0.0
  %2558 = vmatprep.subr.mxu0 0.0
  %2559 = vmatpush1.msra.mxu0 0.0
  %2560 = vmatprep.subr.mxu0 0.0
  %2561 = vmatpush1.msra.mxu0 0.0
  %2562 = vmatprep.subr.mxu0 0.0
  %2563 = vmatpush1.msra.mxu0 0.0
  %2564 = vmatprep.subr.mxu0 0.0
  %2565 = vmatpush1.msra.mxu0 0.0
  %2566 = vmatprep.subr.mxu0 0.0
  %2567 = vmatpush1.msra.mxu0 0.0
  %2568 = vmatprep.subr.mxu0 0.0
  %2569 = vmatpush1.msra.mxu0 0.0
  %2570 = vmatprep.subr.mxu0 0.0
  %2571 = vmatpush1.msra.mxu0 0.0
  %2572 = vmatprep.subr.mxu0 0.0
  %2573 = vmatpush1.msra.mxu0 0.0
  %2574 = vmatprep.subr.mxu0 0.0
  %2575 = vmatpush1.msra.mxu0 0.0
  %2576 = vmatprep.subr.mxu0 0.0
  %2577 = vmatpush1.msra.mxu0 %v85
  %2578 = vmatprep.subr.mxu0 0.0
  %2579 = vmatpush1.msra.mxu0 %v84
  %2580 = vmatprep.subr.mxu0 0.0
  %2581 = vmatpush1.msra.mxu0 %v83
  %2582 = vmatprep.subr.mxu0 0.0
  %2583 = vmatpush1.msra.mxu0 %v82
  %2584 = vmatprep.subr.mxu0 0.0
  %2585 = vmatpush2.msra.mxu0 0.0
  %2586 = vmatprep.subr.mxu0 0.0
  %2587 = vmatpush2.msra.mxu0 0.0
  %2588 = vmatprep.subr.mxu0 0.0
  %2589 = vmatpush2.msra.mxu0 0.0
  %2590 = vmatprep.subr.mxu0 0.0
  %2591 = vmatpush2.msra.mxu0 0.0
  %2592 = vmatprep.subr.mxu0 0.0
  %2593 = vmatpush2.msra.mxu0 0.0
  %2594 = vmatprep.subr.mxu0 0.0
  %2595 = vmatpush2.msra.mxu0 0.0
  %2596 = vmatprep.subr.mxu0 0.0
  %2597 = vmatpush2.msra.mxu0 0.0
  %2598 = vmatprep.subr.mxu0 0.0
  %2599 = vmatpush2.msra.mxu0 0.0
  %2600 = vmatprep.subr.mxu0 0.0
  %2601 = vmatpush2.msra.mxu0 0.0
  %2602 = vmatprep.subr.mxu0 0.0
  %2603 = vmatpush2.msra.mxu0 0.0
  %2604 = vmatprep.subr.mxu0 0.0
  %2605 = vmatpush2.msra.mxu0 0.0
  %2606 = vmatprep.subr.mxu0 0.0
  %2607 = vmatpush2.msra.mxu0 0.0
  %2608 = vmatprep.subr.mxu0 0.0
  %2609 = vmatpush2.msra.mxu0 0.0
  %2610 = vmatprep.subr.mxu0 0.0
  %2611 = vmatpush2.msra.mxu0 0.0
  %2612 = vmatprep.subr.mxu0 0.0
  %2613 = vmatpush2.msra.mxu0 0.0
  %2614 = vmatprep.subr.mxu0 0.0
  %2615 = vmatpush2.msra.mxu0 0.0
  %2616 = vmatprep.mubr.f32.mxu0 0.0
  %2617 = vmatmul.mubr.f32.gmra.mxu0 %v2550
  %v2618 = vpop.f32.mrf.mxu0
  %v2619 = vadd.f32 0.0, %v2618
  %v2620 = vpop.f32.mrf.mxu0
  %2621 = vdwg.mxu0
  %v2622 = vadd.f32 %v2549, %v2619
  %v2623 = vmul.f32 %v2622, %v91
  %v2624 = vtanh.pop %v2623
  %v2625 = vmul.f32 %v2624, 0.5
  %v2626 = vadd.f32 %v2625, 0.5
  %v2627 = vmul.f32 %v2626, %v2533
  %2629 = vrot.lane.b32.xlu0 %v2624, 64
  %v2630 = vpop.permute.xlu0 %2629
  %v2632 = vmul.f32 %v2626, %v2630
  %2634 = vrot.lane.b32.xlu0 %v2632, 32
  %v2635 = vpop.permute.xlu0 %2634
  %v2637 = vadd.f32 %v2627, %v2635
  %v2638 = vtanh.pop %v2637
  %2640 = vrot.lane.b32.xlu0 %v2638, 64
  %v2641 = vpop.permute.xlu0 %2640
  %v2643 = vmul.f32 %v2626, %v2641
  %2645 = vrot.lane.b32.xlu0 %v2643, 32
  %v2646 = vpop.permute.xlu0 %2645
  %2648 = vst.msk [vmem:[#allocation3 + $0x68] sm:$0xff] %vm120, %v2646
  %v2649 = vld [vmem:[%s2 + $0x68] sm:$0xff]
  %v2650 = vmul.f32 %v2649, %v2646
  %v2651 = vadd.f32 %v2547, %v2650
  %v2652 = vld [vmem:[#allocation2 + $0x68] sm:$0xff]
  %v2653 = vadd.f32 %v2652, %v1954
  %v2654 = vsel %vm120, %v2646, 0
  %2656 = vmatprep.subr.mxu0 0.0
  %2657 = vmatpush1.msra.mxu0 0.0
  %2658 = vmatprep.subr.mxu0 0.0
  %2659 = vmatpush1.msra.mxu0 0.0
  %2660 = vmatprep.subr.mxu0 0.0
  %2661 = vmatpush1.msra.mxu0 0.0
  %2662 = vmatprep.subr.mxu0 0.0
  %2663 = vmatpush1.msra.mxu0 0.0
  %2664 = vmatprep.subr.mxu0 0.0
  %2665 = vmatpush1.msra.mxu0 0.0
  %2666 = vmatprep.subr.mxu0 0.0
  %2667 = vmatpush1.msra.mxu0 0.0
  %2668 = vmatprep.subr.mxu0 0.0
  %2669 = vmatpush1.msra.mxu0 0.0
  %2670 = vmatprep.subr.mxu0 0.0
  %2671 = vmatpush1.msra.mxu0 0.0
  %2672 = vmatprep.subr.mxu0 0.0
  %2673 = vmatpush1.msra.mxu0 0.0
  %2674 = vmatprep.subr.mxu0 0.0
  %2675 = vmatpush1.msra.mxu0 0.0
  %2676 = vmatprep.subr.mxu0 0.0
  %2677 = vmatpush1.msra.mxu0 0.0
  %2678 = vmatprep.subr.mxu0 0.0
  %2679 = vmatpush1.msra.mxu0 0.0
  %2680 = vmatprep.subr.mxu0 0.0
  %2681 = vmatpush1.msra.mxu0 %v85
  %2682 = vmatprep.subr.mxu0 0.0
  %2683 = vmatpush1.msra.mxu0 %v84
  %2684 = vmatprep.subr.mxu0 0.0
  %2685 = vmatpush1.msra.mxu0 %v83
  %2686 = vmatprep.subr.mxu0 0.0
  %2687 = vmatpush1.msra.mxu0 %v82
  %2688 = vmatprep.subr.mxu0 0.0
  %2689 = vmatpush2.msra.mxu0 0.0
  %2690 = vmatprep.subr.mxu0 0.0
  %2691 = vmatpush2.msra.mxu0 0.0
  %2692 = vmatprep.subr.mxu0 0.0
  %2693 = vmatpush2.msra.mxu0 0.0
  %2694 = vmatprep.subr.mxu0 0.0
  %2695 = vmatpush2.msra.mxu0 0.0
  %2696 = vmatprep.subr.mxu0 0.0
  %2697 = vmatpush2.msra.mxu0 0.0
  %2698 = vmatprep.subr.mxu0 0.0
  %2699 = vmatpush2.msra.mxu0 0.0
  %2700 = vmatprep.subr.mxu0 0.0
  %2701 = vmatpush2.msra.mxu0 0.0
  %2702 = vmatprep.subr.mxu0 0.0
  %2703 = vmatpush2.msra.mxu0 0.0
  %2704 = vmatprep.subr.mxu0 0.0
  %2705 = vmatpush2.msra.mxu0 0.0
  %2706 = vmatprep.subr.mxu0 0.0
  %2707 = vmatpush2.msra.mxu0 0.0
  %2708 = vmatprep.subr.mxu0 0.0
  %2709 = vmatpush2.msra.mxu0 0.0
  %2710 = vmatprep.subr.mxu0 0.0
  %2711 = vmatpush2.msra.mxu0 0.0
  %2712 = vmatprep.subr.mxu0 0.0
  %2713 = vmatpush2.msra.mxu0 0.0
  %2714 = vmatprep.subr.mxu0 0.0
  %2715 = vmatpush2.msra.mxu0 0.0
  %2716 = vmatprep.subr.mxu0 0.0
  %2717 = vmatpush2.msra.mxu0 0.0
  %2718 = vmatprep.subr.mxu0 0.0
  %2719 = vmatpush2.msra.mxu0 0.0
  %2720 = vmatprep.mubr.f32.mxu0 0.0
  %2721 = vmatmul.mubr.f32.gmra.mxu0 %v2654
  %v2722 = vpop.f32.mrf.mxu0
  %v2723 = vadd.f32 0.0, %v2722
  %v2724 = vpop.f32.mrf.mxu0
  %2725 = vdwg.mxu0
  %v2726 = vadd.f32 %v2653, %v2723
  %v2727 = vmul.f32 %v2726, %v91
  %v2728 = vtanh.pop %v2727
  %v2729 = vmul.f32 %v2728, 0.5
  %v2730 = vadd.f32 %v2729, 0.5
  %v2731 = vmul.f32 %v2730, %v2637
  %2733 = vrot.lane.b32.xlu0 %v2728, 64
  %v2734 = vpop.permute.xlu0 %2733
  %v2736 = vmul.f32 %v2730, %v2734
  %2738 = vrot.lane.b32.xlu0 %v2736, 32
  %v2739 = vpop.permute.xlu0 %2738
  %v2741 = vadd.f32 %v2731, %v2739
  %v2742 = vtanh.pop %v2741
  %2744 = vrot.lane.b32.xlu0 %v2742, 64
  %v2745 = vpop.permute.xlu0 %2744
  %v2747 = vmul.f32 %v2730, %v2745
  %2749 = vrot.lane.b32.xlu0 %v2747, 32
  %v2750 = vpop.permute.xlu0 %2749
  %2752 = vst.msk [vmem:[#allocation3 + $0x70] sm:$0xff] %vm120, %v2750
  %v2753 = vld [vmem:[%s2 + $0x70] sm:$0xff]
  %v2754 = vmul.f32 %v2753, %v2750
  %v2755 = vadd.f32 %v2651, %v2754
  %v2756 = vld [vmem:[#allocation2 + $0x70] sm:$0xff]
  %v2757 = vadd.f32 %v2756, %v1954
  %v2758 = vsel %vm120, %v2750, 0
  %2760 = vmatprep.subr.mxu0 0.0
  %2761 = vmatpush1.msra.mxu0 0.0
  %2762 = vmatprep.subr.mxu0 0.0
  %2763 = vmatpush1.msra.mxu0 0.0
  %2764 = vmatprep.subr.mxu0 0.0
  %2765 = vmatpush1.msra.mxu0 0.0
  %2766 = vmatprep.subr.mxu0 0.0
  %2767 = vmatpush1.msra.mxu0 0.0
  %2768 = vmatprep.subr.mxu0 0.0
  %2769 = vmatpush1.msra.mxu0 0.0
  %2770 = vmatprep.subr.mxu0 0.0
  %2771 = vmatpush1.msra.mxu0 0.0
  %2772 = vmatprep.subr.mxu0 0.0
  %2773 = vmatpush1.msra.mxu0 0.0
  %2774 = vmatprep.subr.mxu0 0.0
  %2775 = vmatpush1.msra.mxu0 0.0
  %2776 = vmatprep.subr.mxu0 0.0
  %2777 = vmatpush1.msra.mxu0 0.0
  %2778 = vmatprep.subr.mxu0 0.0
  %2779 = vmatpush1.msra.mxu0 0.0
  %2780 = vmatprep.subr.mxu0 0.0
  %2781 = vmatpush1.msra.mxu0 0.0
  %2782 = vmatprep.subr.mxu0 0.0
  %2783 = vmatpush1.msra.mxu0 0.0
  %2784 = vmatprep.subr.mxu0 0.0
  %2785 = vmatpush1.msra.mxu0 %v85
  %2786 = vmatprep.subr.mxu0 0.0
  %2787 = vmatpush1.msra.mxu0 %v84
  %2788 = vmatprep.subr.mxu0 0.0
  %2789 = vmatpush1.msra.mxu0 %v83
  %2790 = vmatprep.subr.mxu0 0.0
  %2791 = vmatpush1.msra.mxu0 %v82
  %2792 = vmatprep.subr.mxu0 0.0
  %2793 = vmatpush2.msra.mxu0 0.0
  %2794 = vmatprep.subr.mxu0 0.0
  %2795 = vmatpush2.msra.mxu0 0.0
  %2796 = vmatprep.subr.mxu0 0.0
  %2797 = vmatpush2.msra.mxu0 0.0
  %2798 = vmatprep.subr.mxu0 0.0
  %2799 = vmatpush2.msra.mxu0 0.0
  %2800 = vmatprep.subr.mxu0 0.0
  %2801 = vmatpush2.msra.mxu0 0.0
  %2802 = vmatprep.subr.mxu0 0.0
  %2803 = vmatpush2.msra.mxu0 0.0
  %2804 = vmatprep.subr.mxu0 0.0
  %2805 = vmatpush2.msra.mxu0 0.0
  %2806 = vmatprep.subr.mxu0 0.0
  %2807 = vmatpush2.msra.mxu0 0.0
  %2808 = vmatprep.subr.mxu0 0.0
  %2809 = vmatpush2.msra.mxu0 0.0
  %2810 = vmatprep.subr.mxu0 0.0
  %2811 = vmatpush2.msra.mxu0 0.0
  %2812 = vmatprep.subr.mxu0 0.0
  %2813 = vmatpush2.msra.mxu0 0.0
  %2814 = vmatprep.subr.mxu0 0.0
  %2815 = vmatpush2.msra.mxu0 0.0
  %2816 = vmatprep.subr.mxu0 0.0
  %2817 = vmatpush2.msra.mxu0 0.0
  %2818 = vmatprep.subr.mxu0 0.0
  %2819 = vmatpush2.msra.mxu0 0.0
  %2820 = vmatprep.subr.mxu0 0.0
  %2821 = vmatpush2.msra.mxu0 0.0
  %2822 = vmatprep.subr.mxu0 0.0
  %2823 = vmatpush2.msra.mxu0 0.0
  %2824 = vmatprep.mubr.f32.mxu0 0.0
  %2825 = vmatmul.mubr.f32.gmra.mxu0 %v2758
  %v2826 = vpop.f32.mrf.mxu0
  %v2827 = vadd.f32 0.0, %v2826
  %v2828 = vpop.f32.mrf.mxu0
  %2829 = vdwg.mxu0
  %v2830 = vadd.f32 %v2757, %v2827
  %v2831 = vmul.f32 %v2830, %v91
  %v2832 = vtanh.pop %v2831
  %v2833 = vmul.f32 %v2832, 0.5
  %v2834 = vadd.f32 %v2833, 0.5
  %v2835 = vmul.f32 %v2834, %v2741
  %2837 = vrot.lane.b32.xlu0 %v2832, 64
  %v2838 = vpop.permute.xlu0 %2837
  %v2840 = vmul.f32 %v2834, %v2838
  %2842 = vrot.lane.b32.xlu0 %v2840, 32
  %v2843 = vpop.permute.xlu0 %2842
  %v2845 = vadd.f32 %v2835, %v2843
  %v2846 = vtanh.pop %v2845
  %2848 = vrot.lane.b32.xlu0 %v2846, 64
  %v2849 = vpop.permute.xlu0 %2848
  %v2851 = vmul.f32 %v2834, %v2849
  %2853 = vrot.lane.b32.xlu0 %v2851, 32
  %v2854 = vpop.permute.xlu0 %2853
  %2856 = vst.msk [vmem:[#allocation3 + $0x78] sm:$0xff] %vm120, %v2854
  %v2857 = vld [vmem:[%s2 + $0x78] sm:$0xff]
  %v2858 = vmul.f32 %v2857, %v2854
  %v2859 = vadd.f32 %v2755, %v2858
  %v2861 = vsel %vm120, %v2859, 0
  %2863 = vmatprep.subr.mxu0 0.0
  %2864 = vmatpush1.msra.mxu0 0.0
  %2865 = vmatprep.subr.mxu0 0.0
  %2866 = vmatpush1.msra.mxu0 0.0
  %2867 = vmatprep.subr.mxu0 0.0
  %2868 = vmatpush1.msra.mxu0 0.0
  %2869 = vmatprep.subr.mxu0 0.0
  %2870 = vmatpush1.msra.mxu0 0.0
  %2871 = vmatprep.subr.mxu0 0.0
  %2872 = vmatpush1.msra.mxu0 0.0
  %2873 = vmatprep.subr.mxu0 0.0
  %2874 = vmatpush1.msra.mxu0 0.0
  %2875 = vmatprep.subr.mxu0 0.0
  %2876 = vmatpush1.msra.mxu0 0.0
  %2877 = vmatprep.subr.mxu0 0.0
  %2878 = vmatpush1.msra.mxu0 0.0
  %2879 = vmatprep.subr.mxu0 0.0
  %2880 = vmatpush1.msra.mxu0 0.0
  %2881 = vmatprep.subr.mxu0 0.0
  %2882 = vmatpush1.msra.mxu0 0.0
  %2883 = vmatprep.subr.mxu0 0.0
  %2884 = vmatpush1.msra.mxu0 0.0
  %2885 = vmatprep.subr.mxu0 0.0
  %2886 = vmatpush1.msra.mxu0 0.0
  %2887 = vmatprep.subr.mxu0 0.0
  %2888 = vmatpush1.msra.mxu0 %v61
  %2889 = vmatprep.subr.mxu0 0.0
  %2890 = vmatpush1.msra.mxu0 %v60
  %2891 = vmatprep.subr.mxu0 0.0
  %2892 = vmatpush1.msra.mxu0 %v59
  %2893 = vmatprep.subr.mxu0 0.0
  %2894 = vmatpush1.msra.mxu0 %v58
  %2895 = vmatprep.subr.mxu0 0.0
  %2896 = vmatpush2.msra.mxu0 0.0
  %2897 = vmatprep.subr.mxu0 0.0
  %2898 = vmatpush2.msra.mxu0 0.0
  %2899 = vmatprep.subr.mxu0 0.0
  %2900 = vmatpush2.msra.mxu0 0.0
  %2901 = vmatprep.subr.mxu0 0.0
  %2902 = vmatpush2.msra.mxu0 0.0
  %2903 = vmatprep.subr.mxu0 0.0
  %2904 = vmatpush2.msra.mxu0 0.0
  %2905 = vmatprep.subr.mxu0 0.0
  %2906 = vmatpush2.msra.mxu0 0.0
  %2907 = vmatprep.subr.mxu0 0.0
  %2908 = vmatpush2.msra.mxu0 0.0
  %2909 = vmatprep.subr.mxu0 0.0
  %2910 = vmatpush2.msra.mxu0 0.0
  %2911 = vmatprep.subr.mxu0 0.0
  %2912 = vmatpush2.msra.mxu0 0.0
  %2913 = vmatprep.subr.mxu0 0.0
  %2914 = vmatpush2.msra.mxu0 0.0
  %2915 = vmatprep.subr.mxu0 0.0
  %2916 = vmatpush2.msra.mxu0 0.0
  %2917 = vmatprep.subr.mxu0 0.0
  %2918 = vmatpush2.msra.mxu0 0.0
  %2919 = vmatprep.subr.mxu0 0.0
  %2920 = vmatpush2.msra.mxu0 0.0
  %2921 = vmatprep.subr.mxu0 0.0
  %2922 = vmatpush2.msra.mxu0 0.0
  %2923 = vmatprep.subr.mxu0 0.0
  %2924 = vmatpush2.msra.mxu0 0.0
  %2925 = vmatprep.subr.mxu0 0.0
  %2926 = vmatpush2.msra.mxu0 0.0
  %2927 = vmatprep.mubr.f32.mxu0 0.0
  %2928 = vmatmul.mubr.f32.gmra.mxu0 %v2861
  %v2929 = vpop.f32.mrf.mxu0
  %v2930 = vadd.f32 0.0, %v2929
  %v2931 = vpop.f32.mrf.mxu0
  %2932 = vdwg.mxu0
  %v2933 = vadd.f32 %v492, %v2930
  %2934 = vmatprep.subr.mxu0 0.0
  %2935 = vmatpush1.msra.mxu0 0.0
  %2936 = vmatprep.subr.mxu0 0.0
  %2937 = vmatpush1.msra.mxu0 0.0
  %2938 = vmatprep.subr.mxu0 0.0
  %2939 = vmatpush1.msra.mxu0 0.0
  %2940 = vmatprep.subr.mxu0 0.0
  %2941 = vmatpush1.msra.mxu0 0.0
  %2942 = vmatprep.subr.mxu0 0.0
  %2943 = vmatpush1.msra.mxu0 0.0
  %2944 = vmatprep.subr.mxu0 0.0
  %2945 = vmatpush1.msra.mxu0 0.0
  %2946 = vmatprep.subr.mxu0 0.0
  %2947 = vmatpush1.msra.mxu0 0.0
  %2948 = vmatprep.subr.mxu0 0.0
  %2949 = vmatpush1.msra.mxu0 0.0
  %2950 = vmatprep.subr.mxu0 0.0
  %2951 = vmatpush1.msra.mxu0 0.0
  %2952 = vmatprep.subr.mxu0 0.0
  %2953 = vmatpush1.msra.mxu0 0.0
  %2954 = vmatprep.subr.mxu0 0.0
  %2955 = vmatpush1.msra.mxu0 0.0
  %2956 = vmatprep.subr.mxu0 0.0
  %2957 = vmatpush1.msra.mxu0 0.0
  %2958 = vmatprep.subr.mxu0 0.0
  %2959 = vmatpush1.msra.mxu0 %v65
  %2960 = vmatprep.subr.mxu0 0.0
  %2961 = vmatpush1.msra.mxu0 %v64
  %2962 = vmatprep.subr.mxu0 0.0
  %2963 = vmatpush1.msra.mxu0 %v63
  %2964 = vmatprep.subr.mxu0 0.0
  %2965 = vmatpush1.msra.mxu0 %v62
  %2966 = vmatprep.subr.mxu0 0.0
  %2967 = vmatpush2.msra.mxu0 0.0
  %2968 = vmatprep.subr.mxu0 0.0
  %2969 = vmatpush2.msra.mxu0 0.0
  %2970 = vmatprep.subr.mxu0 0.0
  %2971 = vmatpush2.msra.mxu0 0.0
  %2972 = vmatprep.subr.mxu0 0.0
  %2973 = vmatpush2.msra.mxu0 0.0
  %2974 = vmatprep.subr.mxu0 0.0
  %2975 = vmatpush2.msra.mxu0 0.0
  %2976 = vmatprep.subr.mxu0 0.0
  %2977 = vmatpush2.msra.mxu0 0.0
  %2978 = vmatprep.subr.mxu0 0.0
  %2979 = vmatpush2.msra.mxu0 0.0
  %2980 = vmatprep.subr.mxu0 0.0
  %2981 = vmatpush2.msra.mxu0 0.0
  %2982 = vmatprep.subr.mxu0 0.0
  %2983 = vmatpush2.msra.mxu0 0.0
  %2984 = vmatprep.subr.mxu0 0.0
  %2985 = vmatpush2.msra.mxu0 0.0
  %2986 = vmatprep.subr.mxu0 0.0
  %2987 = vmatpush2.msra.mxu0 0.0
  %2988 = vmatprep.subr.mxu0 0.0
  %2989 = vmatpush2.msra.mxu0 0.0
  %2990 = vmatprep.subr.mxu0 0.0
  %2991 = vmatpush2.msra.mxu0 0.0
  %2992 = vmatprep.subr.mxu0 0.0
  %2993 = vmatpush2.msra.mxu0 0.0
  %2994 = vmatprep.subr.mxu0 0.0
  %2995 = vmatpush2.msra.mxu0 0.0
  %2996 = vmatprep.subr.mxu0 0.0
  %2997 = vmatpush2.msra.mxu0 0.0
  %2998 = vmatprep.mubr.f32.mxu0 0.0
  %2999 = vmatmul.mubr.f32.gmra.mxu0 %v1885
  %v3000 = vpop.f32.mrf.mxu0
  %v3001 = vadd.f32 0.0, %v3000
  %v3002 = vpop.f32.mrf.mxu0
  %3003 = vdwg.mxu0
  %v3004 = vadd.f32 %v2933, %v3001
  %v3005 = vadd.f32 %v3004, %v66
  %v3006 = vmul.f32 %v3005, %v91
  %v3007 = vtanh.pop %v3006
  %v3008 = vmul.f32 %v3007, 0.5
  %v3009 = vadd.f32 %v3008, 0.5
  %v3010 = vmul.f32 %v3009, %v1875
  %3012 = vrot.lane.b32.xlu0 %v3007, 64
  %v3013 = vpop.permute.xlu0 %3012
  %v3015 = vmul.f32 %v3009, %v3013
  %3017 = vrot.lane.b32.xlu0 %v3015, 32
  %v3018 = vpop.permute.xlu0 %3017
  %v3020 = vadd.f32 %v3010, %v3018
  %v3021 = vtanh.pop %v3020
  %3023 = vrot.lane.b32.xlu0 %v3021, 64
  %v3024 = vpop.permute.xlu0 %3023
  %v3026 = vmul.f32 %v3009, %v3024
  %3028 = vrot.lane.b32.xlu0 %v3026, 32
  %v3029 = vpop.permute.xlu0 %3028
  %v3030 = vsel %vm120, %v3029, 0
  %3032 = vmatprep.subr.mxu0 0.0
  %3033 = vmatpush1.msra.mxu0 0.0
  %3034 = vmatprep.subr.mxu0 0.0
  %3035 = vmatpush1.msra.mxu0 0.0
  %3036 = vmatprep.subr.mxu0 0.0
  %3037 = vmatpush1.msra.mxu0 0.0
  %3038 = vmatprep.subr.mxu0 0.0
  %3039 = vmatpush1.msra.mxu0 0.0
  %3040 = vmatprep.subr.mxu0 0.0
  %3041 = vmatpush1.msra.mxu0 0.0
  %3042 = vmatprep.subr.mxu0 0.0
  %3043 = vmatpush1.msra.mxu0 0.0
  %3044 = vmatprep.subr.mxu0 0.0
  %3045 = vmatpush1.msra.mxu0 0.0
  %3046 = vmatprep.subr.mxu0 0.0
  %3047 = vmatpush1.msra.mxu0 0.0
  %3048 = vmatprep.subr.mxu0 0.0
  %3049 = vmatpush1.msra.mxu0 0.0
  %3050 = vmatprep.subr.mxu0 0.0
  %3051 = vmatpush1.msra.mxu0 0.0
  %3052 = vmatprep.subr.mxu0 0.0
  %3053 = vmatpush1.msra.mxu0 0.0
  %3054 = vmatprep.subr.mxu0 0.0
  %3055 = vmatpush1.msra.mxu0 0.0
  %3056 = vmatprep.subr.mxu0 %v77
  %3057 = vmatpush1.msra.mxu0 %v76
  %3058 = vmatprep.subr.mxu0 %v74
  %3059 = vmatpush1.msra.mxu0 %v73
  %3060 = vmatprep.subr.mxu0 %v71
  %3061 = vmatpush1.msra.mxu0 %v70
  %3062 = vmatprep.subr.mxu0 %v68
  %3063 = vmatpush1.msra.mxu0 %v67
  %3064 = vmatprep.subr.mxu0 0.0
  %3065 = vmatpush2.msra.mxu0 0.0
  %3066 = vmatprep.subr.mxu0 0.0
  %3067 = vmatpush2.msra.mxu0 0.0
  %3068 = vmatprep.subr.mxu0 0.0
  %3069 = vmatpush2.msra.mxu0 0.0
  %3070 = vmatprep.subr.mxu0 0.0
  %3071 = vmatpush2.msra.mxu0 0.0
  %3072 = vmatprep.subr.mxu0 0.0
  %3073 = vmatpush2.msra.mxu0 0.0
  %3074 = vmatprep.subr.mxu0 0.0
  %3075 = vmatpush2.msra.mxu0 0.0
  %3076 = vmatprep.subr.mxu0 0.0
  %3077 = vmatpush2.msra.mxu0 0.0
  %3078 = vmatprep.subr.mxu0 0.0
  %3079 = vmatpush2.msra.mxu0 0.0
  %3080 = vmatprep.subr.mxu0 0.0
  %3081 = vmatpush2.msra.mxu0 0.0
  %3082 = vmatprep.subr.mxu0 0.0
  %3083 = vmatpush2.msra.mxu0 0.0
  %3084 = vmatprep.subr.mxu0 0.0
  %3085 = vmatpush2.msra.mxu0 0.0
  %3086 = vmatprep.subr.mxu0 0.0
  %3087 = vmatpush2.msra.mxu0 0.0
  %3088 = vmatprep.subr.mxu0 0.0
  %3089 = vmatpush2.msra.mxu0 0.0
  %3090 = vmatprep.subr.mxu0 0.0
  %3091 = vmatpush2.msra.mxu0 0.0
  %3092 = vmatprep.subr.mxu0 0.0
  %3093 = vmatpush2.msra.mxu0 0.0
  %3094 = vmatprep.subr.mxu0 0.0
  %3095 = vmatpush2.msra.mxu0 0.0
  %3096 = vmatprep.mubr.f32.mxu0 0.0
  %3097 = vmatmul.mubr.f32.gmra.mxu0 %v3030
  %v3098 = vpop.f32.mrf.mxu0
  %v3099 = vadd.f32 %v79, %v3098
  %v3100 = vpop.f32.mrf.mxu0
  %v3101 = vadd.f32 %v80, %v3100
  %3102 = vdwg.mxu0
  %3103 = vmatprep.subr.mxu0 0.0
  %3104 = vmatpush1.msra.mxu0 0.0
  %3105 = vmatprep.subr.mxu0 0.0
  %3106 = vmatpush1.msra.mxu0 0.0
  %3107 = vmatprep.subr.mxu0 0.0
  %3108 = vmatpush1.msra.mxu0 0.0
  %3109 = vmatprep.subr.mxu0 0.0
  %3110 = vmatpush1.msra.mxu0 0.0
  %3111 = vmatprep.subr.mxu0 0.0
  %3112 = vmatpush1.msra.mxu0 0.0
  %3113 = vmatprep.subr.mxu0 0.0
  %3114 = vmatpush1.msra.mxu0 0.0
  %3115 = vmatprep.subr.mxu0 0.0
  %3116 = vmatpush1.msra.mxu0 0.0
  %3117 = vmatprep.subr.mxu0 0.0
  %3118 = vmatpush1.msra.mxu0 0.0
  %3119 = vmatprep.subr.mxu0 0.0
  %3120 = vmatpush1.msra.mxu0 0.0
  %3121 = vmatprep.subr.mxu0 0.0
  %3122 = vmatpush1.msra.mxu0 0.0
  %3123 = vmatprep.subr.mxu0 0.0
  %3124 = vmatpush1.msra.mxu0 0.0
  %3125 = vmatprep.subr.mxu0 0.0
  %3126 = vmatpush1.msra.mxu0 0.0
  %3127 = vmatprep.subr.mxu0 0.0
  %3128 = vmatpush1.msra.mxu0 %v78
  %3129 = vmatprep.subr.mxu0 0.0
  %3130 = vmatpush1.msra.mxu0 %v75
  %3131 = vmatprep.subr.mxu0 0.0
  %3132 = vmatpush1.msra.mxu0 %v72
  %3133 = vmatprep.subr.mxu0 0.0
  %3134 = vmatpush1.msra.mxu0 %v69
  %3135 = vmatprep.subr.mxu0 0.0
  %3136 = vmatpush2.msra.mxu0 0.0
  %3137 = vmatprep.subr.mxu0 0.0
  %3138 = vmatpush2.msra.mxu0 0.0
  %3139 = vmatprep.subr.mxu0 0.0
  %3140 = vmatpush2.msra.mxu0 0.0
  %3141 = vmatprep.subr.mxu0 0.0
  %3142 = vmatpush2.msra.mxu0 0.0
  %3143 = vmatprep.subr.mxu0 0.0
  %3144 = vmatpush2.msra.mxu0 0.0
  %3145 = vmatprep.subr.mxu0 0.0
  %3146 = vmatpush2.msra.mxu0 0.0
  %3147 = vmatprep.subr.mxu0 0.0
  %3148 = vmatpush2.msra.mxu0 0.0
  %3149 = vmatprep.subr.mxu0 0.0
  %3150 = vmatpush2.msra.mxu0 0.0
  %3151 = vmatprep.subr.mxu0 0.0
  %3152 = vmatpush2.msra.mxu0 0.0
  %3153 = vmatprep.subr.mxu0 0.0
  %3154 = vmatpush2.msra.mxu0 0.0
  %3155 = vmatprep.subr.mxu0 0.0
  %3156 = vmatpush2.msra.mxu0 0.0
  %3157 = vmatprep.subr.mxu0 0.0
  %3158 = vmatpush2.msra.mxu0 0.0
  %3159 = vmatprep.subr.mxu0 0.0
  %3160 = vmatpush2.msra.mxu0 0.0
  %3161 = vmatprep.subr.mxu0 0.0
  %3162 = vmatpush2.msra.mxu0 0.0
  %3163 = vmatprep.subr.mxu0 0.0
  %3164 = vmatpush2.msra.mxu0 0.0
  %3165 = vmatprep.subr.mxu0 0.0
  %3166 = vmatpush2.msra.mxu0 0.0
  %3167 = vmatprep.mubr.f32.mxu0 0.0
  %3168 = vmatmul.mubr.f32.gmra.mxu0 %v3030
  %v3169 = vpop.f32.mrf.mxu0
  %v3170 = vadd.f32 %v81, %v3169
  %v3171 = vpop.f32.mrf.mxu0
  %3172 = vdwg.mxu0
  %v3173 = vadd.f32 %v3101, %v3099
  %v3175 = vsel %vm120, %v3170, 0
  %3177 = vmatprep.subr.mxu0 0.0
  %3178 = vmatpush1.msra.mxu0 0.0
  %3179 = vmatprep.subr.mxu0 0.0
  %3180 = vmatpush1.msra.mxu0 0.0
  %3181 = vmatprep.subr.mxu0 0.0
  %3182 = vmatpush1.msra.mxu0 0.0
  %3183 = vmatprep.subr.mxu0 0.0
  %3184 = vmatpush1.msra.mxu0 0.0
  %3185 = vmatprep.subr.mxu0 0.0
  %3186 = vmatpush1.msra.mxu0 0.0
  %3187 = vmatprep.subr.mxu0 0.0
  %3188 = vmatpush1.msra.mxu0 0.0
  %3189 = vmatprep.subr.mxu0 0.0
  %3190 = vmatpush1.msra.mxu0 0.0
  %3191 = vmatprep.subr.mxu0 0.0
  %3192 = vmatpush1.msra.mxu0 0.0
  %3193 = vmatprep.subr.mxu0 0.0
  %3194 = vmatpush1.msra.mxu0 0.0
  %3195 = vmatprep.subr.mxu0 0.0
  %3196 = vmatpush1.msra.mxu0 0.0
  %3197 = vmatprep.subr.mxu0 0.0
  %3198 = vmatpush1.msra.mxu0 0.0
  %3199 = vmatprep.subr.mxu0 0.0
  %3200 = vmatpush1.msra.mxu0 0.0
  %3201 = vmatprep.subr.mxu0 0.0
  %3202 = vmatpush1.msra.mxu0 %v85
  %3203 = vmatprep.subr.mxu0 0.0
  %3204 = vmatpush1.msra.mxu0 %v84
  %3205 = vmatprep.subr.mxu0 0.0
  %3206 = vmatpush1.msra.mxu0 %v83
  %3207 = vmatprep.subr.mxu0 0.0
  %3208 = vmatpush1.msra.mxu0 %v82
  %3209 = vmatprep.subr.mxu0 0.0
  %3210 = vmatpush2.msra.mxu0 0.0
  %3211 = vmatprep.subr.mxu0 0.0
  %3212 = vmatpush2.msra.mxu0 0.0
  %3213 = vmatprep.subr.mxu0 0.0
  %3214 = vmatpush2.msra.mxu0 0.0
  %3215 = vmatprep.subr.mxu0 0.0
  %3216 = vmatpush2.msra.mxu0 0.0
  %3217 = vmatprep.subr.mxu0 0.0
  %3218 = vmatpush2.msra.mxu0 0.0
  %3219 = vmatprep.subr.mxu0 0.0
  %3220 = vmatpush2.msra.mxu0 0.0
  %3221 = vmatprep.subr.mxu0 0.0
  %3222 = vmatpush2.msra.mxu0 0.0
  %3223 = vmatprep.subr.mxu0 0.0
  %3224 = vmatpush2.msra.mxu0 0.0
  %3225 = vmatprep.subr.mxu0 0.0
  %3226 = vmatpush2.msra.mxu0 0.0
  %3227 = vmatprep.subr.mxu0 0.0
  %3228 = vmatpush2.msra.mxu0 0.0
  %3229 = vmatprep.subr.mxu0 0.0
  %3230 = vmatpush2.msra.mxu0 0.0
  %3231 = vmatprep.subr.mxu0 0.0
  %3232 = vmatpush2.msra.mxu0 0.0
  %3233 = vmatprep.subr.mxu0 0.0
  %3234 = vmatpush2.msra.mxu0 0.0
  %3235 = vmatprep.subr.mxu0 0.0
  %3236 = vmatpush2.msra.mxu0 0.0
  %3237 = vmatprep.subr.mxu0 0.0
  %3238 = vmatpush2.msra.mxu0 0.0
  %3239 = vmatprep.subr.mxu0 0.0
  %3240 = vmatpush2.msra.mxu0 0.0
  %3241 = vmatprep.mubr.f32.mxu0 0.0
  %3242 = vmatmul.mubr.f32.gmra.mxu0 %v3175
  %v3243 = vpop.f32.mrf.mxu0
  %v3244 = vadd.f32 0.0, %v3243
  %v3245 = vpop.f32.mrf.mxu0
  %3246 = vdwg.mxu0
  %v3247 = vadd.f32 %v3173, %v3244
  %v3248 = vmul.f32 %v3247, %v91
  %v3249 = vtanh.pop %v3248
  %v3250 = vmul.f32 %v3249, 0.5
  %v3251 = vadd.f32 %v3250, 0.5
  %v3252 = vmul.f32 %v3251, %v3170
  %3254 = vrot.lane.b32.xlu0 %v3249, 64
  %v3255 = vpop.permute.xlu0 %3254
  %v3257 = vmul.f32 %v3251, %v3255
  %3259 = vrot.lane.b32.xlu0 %v3257, 32
  %v3260 = vpop.permute.xlu0 %3259
  %v3262 = vadd.f32 %v3252, %v3260
  %v3263 = vtanh.pop %v3262
  %3265 = vrot.lane.b32.xlu0 %v3263, 64
  %v3266 = vpop.permute.xlu0 %3265
  %v3268 = vmul.f32 %v3251, %v3266
  %3270 = vrot.lane.b32.xlu0 %v3268, 32
  %v3271 = vpop.permute.xlu0 %3270
  %3273 = vst.msk [vmem:[#allocation3 + $0x80] sm:$0xff] %vm120, %v3271
  %v3274 = vld [vmem:[#allocation2 + $0x80] sm:$0xff]
  %v3275 = vadd.f32 %v3274, %v3099
  %v3276 = vsel %vm120, %v3271, 0
  %3278 = vmatprep.subr.mxu0 0.0
  %3279 = vmatpush1.msra.mxu0 0.0
  %3280 = vmatprep.subr.mxu0 0.0
  %3281 = vmatpush1.msra.mxu0 0.0
  %3282 = vmatprep.subr.mxu0 0.0
  %3283 = vmatpush1.msra.mxu0 0.0
  %3284 = vmatprep.subr.mxu0 0.0
  %3285 = vmatpush1.msra.mxu0 0.0
  %3286 = vmatprep.subr.mxu0 0.0
  %3287 = vmatpush1.msra.mxu0 0.0
  %3288 = vmatprep.subr.mxu0 0.0
  %3289 = vmatpush1.msra.mxu0 0.0
  %3290 = vmatprep.subr.mxu0 0.0
  %3291 = vmatpush1.msra.mxu0 0.0
  %3292 = vmatprep.subr.mxu0 0.0
  %3293 = vmatpush1.msra.mxu0 0.0
  %3294 = vmatprep.subr.mxu0 0.0
  %3295 = vmatpush1.msra.mxu0 0.0
  %3296 = vmatprep.subr.mxu0 0.0
  %3297 = vmatpush1.msra.mxu0 0.0
  %3298 = vmatprep.subr.mxu0 0.0
  %3299 = vmatpush1.msra.mxu0 0.0
  %3300 = vmatprep.subr.mxu0 0.0
  %3301 = vmatpush1.msra.mxu0 0.0
  %3302 = vmatprep.subr.mxu0 0.0
  %3303 = vmatpush1.msra.mxu0 %v85
  %3304 = vmatprep.subr.mxu0 0.0
  %3305 = vmatpush1.msra.mxu0 %v84
  %3306 = vmatprep.subr.mxu0 0.0
  %3307 = vmatpush1.msra.mxu0 %v83
  %3308 = vmatprep.subr.mxu0 0.0
  %3309 = vmatpush1.msra.mxu0 %v82
  %3310 = vmatprep.subr.mxu0 0.0
  %3311 = vmatpush2.msra.mxu0 0.0
  %3312 = vmatprep.subr.mxu0 0.0
  %3313 = vmatpush2.msra.mxu0 0.0
  %3314 = vmatprep.subr.mxu0 0.0
  %3315 = vmatpush2.msra.mxu0 0.0
  %3316 = vmatprep.subr.mxu0 0.0
  %3317 = vmatpush2.msra.mxu0 0.0
  %3318 = vmatprep.subr.mxu0 0.0
  %3319 = vmatpush2.msra.mxu0 0.0
  %3320 = vmatprep.subr.mxu0 0.0
  %3321 = vmatpush2.msra.mxu0 0.0
  %3322 = vmatprep.subr.mxu0 0.0
  %3323 = vmatpush2.msra.mxu0 0.0
  %3324 = vmatprep.subr.mxu0 0.0
  %3325 = vmatpush2.msra.mxu0 0.0
  %3326 = vmatprep.subr.mxu0 0.0
  %3327 = vmatpush2.msra.mxu0 0.0
  %3328 = vmatprep.subr.mxu0 0.0
  %3329 = vmatpush2.msra.mxu0 0.0
  %3330 = vmatprep.subr.mxu0 0.0
  %3331 = vmatpush2.msra.mxu0 0.0
  %3332 = vmatprep.subr.mxu0 0.0
  %3333 = vmatpush2.msra.mxu0 0.0
  %3334 = vmatprep.subr.mxu0 0.0
  %3335 = vmatpush2.msra.mxu0 0.0
  %3336 = vmatprep.subr.mxu0 0.0
  %3337 = vmatpush2.msra.mxu0 0.0
  %3338 = vmatprep.subr.mxu0 0.0
  %3339 = vmatpush2.msra.mxu0 0.0
  %3340 = vmatprep.subr.mxu0 0.0
  %3341 = vmatpush2.msra.mxu0 0.0
  %3342 = vmatprep.mubr.f32.mxu0 0.0
  %3343 = vmatmul.mubr.f32.gmra.mxu0 %v3276
  %v3344 = vpop.f32.mrf.mxu0
  %v3345 = vadd.f32 0.0, %v3344
  %v3346 = vpop.f32.mrf.mxu0
  %3347 = vdwg.mxu0
  %v3348 = vadd.f32 %v3275, %v3345
  %v3349 = vmul.f32 %v3348, %v91
  %v3350 = vtanh.pop %v3349
  %v3351 = vmul.f32 %v3350, 0.5
  %v3352 = vadd.f32 %v3351, 0.5
  %v3353 = vmul.f32 %v3352, %v3262
  %3355 = vrot.lane.b32.xlu0 %v3350, 64
  %v3356 = vpop.permute.xlu0 %3355
  %v3358 = vmul.f32 %v3352, %v3356
  %3360 = vrot.lane.b32.xlu0 %v3358, 32
  %v3361 = vpop.permute.xlu0 %3360
  %v3363 = vadd.f32 %v3353, %v3361
  %v3364 = vtanh.pop %v3363
  %3366 = vrot.lane.b32.xlu0 %v3364, 64
  %v3367 = vpop.permute.xlu0 %3366
  %v3369 = vmul.f32 %v3352, %v3367
  %3371 = vrot.lane.b32.xlu0 %v3369, 32
  %v3372 = vpop.permute.xlu0 %3371
  %3374 = vst.msk [vmem:[#allocation3 + $0x88] sm:$0xff] %vm120, %v3372
  %v3375 = vld [vmem:[#allocation2 + $0x88] sm:$0xff]
  %v3376 = vadd.f32 %v3375, %v3099
  %v3377 = vsel %vm120, %v3372, 0
  %3379 = vmatprep.subr.mxu0 0.0
  %3380 = vmatpush1.msra.mxu0 0.0
  %3381 = vmatprep.subr.mxu0 0.0
  %3382 = vmatpush1.msra.mxu0 0.0
  %3383 = vmatprep.subr.mxu0 0.0
  %3384 = vmatpush1.msra.mxu0 0.0
  %3385 = vmatprep.subr.mxu0 0.0
  %3386 = vmatpush1.msra.mxu0 0.0
  %3387 = vmatprep.subr.mxu0 0.0
  %3388 = vmatpush1.msra.mxu0 0.0
  %3389 = vmatprep.subr.mxu0 0.0
  %3390 = vmatpush1.msra.mxu0 0.0
  %3391 = vmatprep.subr.mxu0 0.0
  %3392 = vmatpush1.msra.mxu0 0.0
  %3393 = vmatprep.subr.mxu0 0.0
  %3394 = vmatpush1.msra.mxu0 0.0
  %3395 = vmatprep.subr.mxu0 0.0
  %3396 = vmatpush1.msra.mxu0 0.0
  %3397 = vmatprep.subr.mxu0 0.0
  %3398 = vmatpush1.msra.mxu0 0.0
  %3399 = vmatprep.subr.mxu0 0.0
  %3400 = vmatpush1.msra.mxu0 0.0
  %3401 = vmatprep.subr.mxu0 0.0
  %3402 = vmatpush1.msra.mxu0 0.0
  %3403 = vmatprep.subr.mxu0 0.0
  %3404 = vmatpush1.msra.mxu0 %v85
  %3405 = vmatprep.subr.mxu0 0.0
  %3406 = vmatpush1.msra.mxu0 %v84
  %3407 = vmatprep.subr.mxu0 0.0
  %3408 = vmatpush1.msra.mxu0 %v83
  %3409 = vmatprep.subr.mxu0 0.0
  %3410 = vmatpush1.msra.mxu0 %v82
  %3411 = vmatprep.subr.mxu0 0.0
  %3412 = vmatpush2.msra.mxu0 0.0
  %3413 = vmatprep.subr.mxu0 0.0
  %3414 = vmatpush2.msra.mxu0 0.0
  %3415 = vmatprep.subr.mxu0 0.0
  %3416 = vmatpush2.msra.mxu0 0.0
  %3417 = vmatprep.subr.mxu0 0.0
  %3418 = vmatpush2.msra.mxu0 0.0
  %3419 = vmatprep.subr.mxu0 0.0
  %3420 = vmatpush2.msra.mxu0 0.0
  %3421 = vmatprep.subr.mxu0 0.0
  %3422 = vmatpush2.msra.mxu0 0.0
  %3423 = vmatprep.subr.mxu0 0.0
  %3424 = vmatpush2.msra.mxu0 0.0
  %3425 = vmatprep.subr.mxu0 0.0
  %3426 = vmatpush2.msra.mxu0 0.0
  %3427 = vmatprep.subr.mxu0 0.0
  %3428 = vmatpush2.msra.mxu0 0.0
  %3429 = vmatprep.subr.mxu0 0.0
  %3430 = vmatpush2.msra.mxu0 0.0
  %3431 = vmatprep.subr.mxu0 0.0
  %3432 = vmatpush2.msra.mxu0 0.0
  %3433 = vmatprep.subr.mxu0 0.0
  %3434 = vmatpush2.msra.mxu0 0.0
  %3435 = vmatprep.subr.mxu0 0.0
  %3436 = vmatpush2.msra.mxu0 0.0
  %3437 = vmatprep.subr.mxu0 0.0
  %3438 = vmatpush2.msra.mxu0 0.0
  %3439 = vmatprep.subr.mxu0 0.0
  %3440 = vmatpush2.msra.mxu0 0.0
  %3441 = vmatprep.subr.mxu0 0.0
  %3442 = vmatpush2.msra.mxu0 0.0
  %3443 = vmatprep.mubr.f32.mxu0 0.0
  %3444 = vmatmul.mubr.f32.gmra.mxu0 %v3377
  %v3445 = vpop.f32.mrf.mxu0
  %v3446 = vadd.f32 0.0, %v3445
  %v3447 = vpop.f32.mrf.mxu0
  %3448 = vdwg.mxu0
  %v3449 = vadd.f32 %v3376, %v3446
  %v3450 = vmul.f32 %v3449, %v91
  %v3451 = vtanh.pop %v3450
  %v3452 = vmul.f32 %v3451, 0.5
  %v3453 = vadd.f32 %v3452, 0.5
  %v3454 = vmul.f32 %v3453, %v3363
  %3456 = vrot.lane.b32.xlu0 %v3451, 64
  %v3457 = vpop.permute.xlu0 %3456
  %v3459 = vmul.f32 %v3453, %v3457
  %3461 = vrot.lane.b32.xlu0 %v3459, 32
  %v3462 = vpop.permute.xlu0 %3461
  %v3464 = vadd.f32 %v3454, %v3462
  %v3465 = vtanh.pop %v3464
  %3467 = vrot.lane.b32.xlu0 %v3465, 64
  %v3468 = vpop.permute.xlu0 %3467
  %v3470 = vmul.f32 %v3453, %v3468
  %3472 = vrot.lane.b32.xlu0 %v3470, 32
  %v3473 = vpop.permute.xlu0 %3472
  %3475 = vst.msk [vmem:[#allocation3 + $0x90] sm:$0xff] %vm120, %v3473
  %v3476 = vld [vmem:[#allocation2 + $0x90] sm:$0xff]
  %v3477 = vadd.f32 %v3476, %v3099
  %v3478 = vsel %vm120, %v3473, 0
  %3480 = vmatprep.subr.mxu0 0.0
  %3481 = vmatpush1.msra.mxu0 0.0
  %3482 = vmatprep.subr.mxu0 0.0
  %3483 = vmatpush1.msra.mxu0 0.0
  %3484 = vmatprep.subr.mxu0 0.0
  %3485 = vmatpush1.msra.mxu0 0.0
  %3486 = vmatprep.subr.mxu0 0.0
  %3487 = vmatpush1.msra.mxu0 0.0
  %3488 = vmatprep.subr.mxu0 0.0
  %3489 = vmatpush1.msra.mxu0 0.0
  %3490 = vmatprep.subr.mxu0 0.0
  %3491 = vmatpush1.msra.mxu0 0.0
  %3492 = vmatprep.subr.mxu0 0.0
  %3493 = vmatpush1.msra.mxu0 0.0
  %3494 = vmatprep.subr.mxu0 0.0
  %3495 = vmatpush1.msra.mxu0 0.0
  %3496 = vmatprep.subr.mxu0 0.0
  %3497 = vmatpush1.msra.mxu0 0.0
  %3498 = vmatprep.subr.mxu0 0.0
  %3499 = vmatpush1.msra.mxu0 0.0
  %3500 = vmatprep.subr.mxu0 0.0
  %3501 = vmatpush1.msra.mxu0 0.0
  %3502 = vmatprep.subr.mxu0 0.0
  %3503 = vmatpush1.msra.mxu0 0.0
  %3504 = vmatprep.subr.mxu0 0.0
  %3505 = vmatpush1.msra.mxu0 %v85
  %3506 = vmatprep.subr.mxu0 0.0
  %3507 = vmatpush1.msra.mxu0 %v84
  %3508 = vmatprep.subr.mxu0 0.0
  %3509 = vmatpush1.msra.mxu0 %v83
  %3510 = vmatprep.subr.mxu0 0.0
  %3511 = vmatpush1.msra.mxu0 %v82
  %3512 = vmatprep.subr.mxu0 0.0
  %3513 = vmatpush2.msra.mxu0 0.0
  %3514 = vmatprep.subr.mxu0 0.0
  %3515 = vmatpush2.msra.mxu0 0.0
  %3516 = vmatprep.subr.mxu0 0.0
  %3517 = vmatpush2.msra.mxu0 0.0
  %3518 = vmatprep.subr.mxu0 0.0
  %3519 = vmatpush2.msra.mxu0 0.0
  %3520 = vmatprep.subr.mxu0 0.0
  %3521 = vmatpush2.msra.mxu0 0.0
  %3522 = vmatprep.subr.mxu0 0.0
  %3523 = vmatpush2.msra.mxu0 0.0
  %3524 = vmatprep.subr.mxu0 0.0
  %3525 = vmatpush2.msra.mxu0 0.0
  %3526 = vmatprep.subr.mxu0 0.0
  %3527 = vmatpush2.msra.mxu0 0.0
  %3528 = vmatprep.subr.mxu0 0.0
  %3529 = vmatpush2.msra.mxu0 0.0
  %3530 = vmatprep.subr.mxu0 0.0
  %3531 = vmatpush2.msra.mxu0 0.0
  %3532 = vmatprep.subr.mxu0 0.0
  %3533 = vmatpush2.msra.mxu0 0.0
  %3534 = vmatprep.subr.mxu0 0.0
  %3535 = vmatpush2.msra.mxu0 0.0
  %3536 = vmatprep.subr.mxu0 0.0
  %3537 = vmatpush2.msra.mxu0 0.0
  %3538 = vmatprep.subr.mxu0 0.0
  %3539 = vmatpush2.msra.mxu0 0.0
  %3540 = vmatprep.subr.mxu0 0.0
  %3541 = vmatpush2.msra.mxu0 0.0
  %3542 = vmatprep.subr.mxu0 0.0
  %3543 = vmatpush2.msra.mxu0 0.0
  %3544 = vmatprep.mubr.f32.mxu0 0.0
  %3545 = vmatmul.mubr.f32.gmra.mxu0 %v3478
  %v3546 = vpop.f32.mrf.mxu0
  %v3547 = vadd.f32 0.0, %v3546
  %v3548 = vpop.f32.mrf.mxu0
  %3549 = vdwg.mxu0
  %v3550 = vadd.f32 %v3477, %v3547
  %v3551 = vmul.f32 %v3550, %v91
  %v3552 = vtanh.pop %v3551
  %v3553 = vmul.f32 %v3552, 0.5
  %v3554 = vadd.f32 %v3553, 0.5
  %v3555 = vmul.f32 %v3554, %v3464
  %3557 = vrot.lane.b32.xlu0 %v3552, 64
  %v3558 = vpop.permute.xlu0 %3557
  %v3560 = vmul.f32 %v3554, %v3558
  %3562 = vrot.lane.b32.xlu0 %v3560, 32
  %v3563 = vpop.permute.xlu0 %3562
  %v3565 = vadd.f32 %v3555, %v3563
  %v3566 = vtanh.pop %v3565
  %3568 = vrot.lane.b32.xlu0 %v3566, 64
  %v3569 = vpop.permute.xlu0 %3568
  %v3571 = vmul.f32 %v3554, %v3569
  %3573 = vrot.lane.b32.xlu0 %v3571, 32
  %v3574 = vpop.permute.xlu0 %3573
  %3576 = vst.msk [vmem:[#allocation3 + $0x98] sm:$0xff] %vm120, %v3574
  %v3577 = vld [vmem:[#allocation2 + $0x98] sm:$0xff]
  %v3578 = vadd.f32 %v3577, %v3099
  %v3579 = vsel %vm120, %v3574, 0
  %3581 = vmatprep.subr.mxu0 0.0
  %3582 = vmatpush1.msra.mxu0 0.0
  %3583 = vmatprep.subr.mxu0 0.0
  %3584 = vmatpush1.msra.mxu0 0.0
  %3585 = vmatprep.subr.mxu0 0.0
  %3586 = vmatpush1.msra.mxu0 0.0
  %3587 = vmatprep.subr.mxu0 0.0
  %3588 = vmatpush1.msra.mxu0 0.0
  %3589 = vmatprep.subr.mxu0 0.0
  %3590 = vmatpush1.msra.mxu0 0.0
  %3591 = vmatprep.subr.mxu0 0.0
  %3592 = vmatpush1.msra.mxu0 0.0
  %3593 = vmatprep.subr.mxu0 0.0
  %3594 = vmatpush1.msra.mxu0 0.0
  %3595 = vmatprep.subr.mxu0 0.0
  %3596 = vmatpush1.msra.mxu0 0.0
  %3597 = vmatprep.subr.mxu0 0.0
  %3598 = vmatpush1.msra.mxu0 0.0
  %3599 = vmatprep.subr.mxu0 0.0
  %3600 = vmatpush1.msra.mxu0 0.0
  %3601 = vmatprep.subr.mxu0 0.0
  %3602 = vmatpush1.msra.mxu0 0.0
  %3603 = vmatprep.subr.mxu0 0.0
  %3604 = vmatpush1.msra.mxu0 0.0
  %3605 = vmatprep.subr.mxu0 0.0
  %3606 = vmatpush1.msra.mxu0 %v85
  %3607 = vmatprep.subr.mxu0 0.0
  %3608 = vmatpush1.msra.mxu0 %v84
  %3609 = vmatprep.subr.mxu0 0.0
  %3610 = vmatpush1.msra.mxu0 %v83
  %3611 = vmatprep.subr.mxu0 0.0
  %3612 = vmatpush1.msra.mxu0 %v82
  %3613 = vmatprep.subr.mxu0 0.0
  %3614 = vmatpush2.msra.mxu0 0.0
  %3615 = vmatprep.subr.mxu0 0.0
  %3616 = vmatpush2.msra.mxu0 0.0
  %3617 = vmatprep.subr.mxu0 0.0
  %3618 = vmatpush2.msra.mxu0 0.0
  %3619 = vmatprep.subr.mxu0 0.0
  %3620 = vmatpush2.msra.mxu0 0.0
  %3621 = vmatprep.subr.mxu0 0.0
  %3622 = vmatpush2.msra.mxu0 0.0
  %3623 = vmatprep.subr.mxu0 0.0
  %3624 = vmatpush2.msra.mxu0 0.0
  %3625 = vmatprep.subr.mxu0 0.0
  %3626 = vmatpush2.msra.mxu0 0.0
  %3627 = vmatprep.subr.mxu0 0.0
  %3628 = vmatpush2.msra.mxu0 0.0
  %3629 = vmatprep.subr.mxu0 0.0
  %3630 = vmatpush2.msra.mxu0 0.0
  %3631 = vmatprep.subr.mxu0 0.0
  %3632 = vmatpush2.msra.mxu0 0.0
  %3633 = vmatprep.subr.mxu0 0.0
  %3634 = vmatpush2.msra.mxu0 0.0
  %3635 = vmatprep.subr.mxu0 0.0
  %3636 = vmatpush2.msra.mxu0 0.0
  %3637 = vmatprep.subr.mxu0 0.0
  %3638 = vmatpush2.msra.mxu0 0.0
  %3639 = vmatprep.subr.mxu0 0.0
  %3640 = vmatpush2.msra.mxu0 0.0
  %3641 = vmatprep.subr.mxu0 0.0
  %3642 = vmatpush2.msra.mxu0 0.0
  %3643 = vmatprep.subr.mxu0 0.0
  %3644 = vmatpush2.msra.mxu0 0.0
  %3645 = vmatprep.mubr.f32.mxu0 0.0
  %3646 = vmatmul.mubr.f32.gmra.mxu0 %v3579
  %v3647 = vpop.f32.mrf.mxu0
  %v3648 = vadd.f32 0.0, %v3647
  %v3649 = vpop.f32.mrf.mxu0
  %3650 = vdwg.mxu0
  %v3651 = vadd.f32 %v3578, %v3648
  %v3652 = vmul.f32 %v3651, %v91
  %v3653 = vtanh.pop %v3652
  %v3654 = vmul.f32 %v3653, 0.5
  %v3655 = vadd.f32 %v3654, 0.5
  %v3656 = vmul.f32 %v3655, %v3565
  %3658 = vrot.lane.b32.xlu0 %v3653, 64
  %v3659 = vpop.permute.xlu0 %3658
  %v3661 = vmul.f32 %v3655, %v3659
  %3663 = vrot.lane.b32.xlu0 %v3661, 32
  %v3664 = vpop.permute.xlu0 %3663
  %v3666 = vadd.f32 %v3656, %v3664
  %v3667 = vtanh.pop %v3666
  %3669 = vrot.lane.b32.xlu0 %v3667, 64
  %v3670 = vpop.permute.xlu0 %3669
  %v3672 = vmul.f32 %v3655, %v3670
  %3674 = vrot.lane.b32.xlu0 %v3672, 32
  %v3675 = vpop.permute.xlu0 %3674
  %3677 = vst.msk [vmem:[#allocation3 + $0xa0] sm:$0xff] %vm120, %v3675
  %v3678 = vld [vmem:[#allocation2 + $0xa0] sm:$0xff]
  %v3679 = vadd.f32 %v3678, %v3099
  %v3680 = vsel %vm120, %v3675, 0
  %3682 = vmatprep.subr.mxu0 0.0
  %3683 = vmatpush1.msra.mxu0 0.0
  %3684 = vmatprep.subr.mxu0 0.0
  %3685 = vmatpush1.msra.mxu0 0.0
  %3686 = vmatprep.subr.mxu0 0.0
  %3687 = vmatpush1.msra.mxu0 0.0
  %3688 = vmatprep.subr.mxu0 0.0
  %3689 = vmatpush1.msra.mxu0 0.0
  %3690 = vmatprep.subr.mxu0 0.0
  %3691 = vmatpush1.msra.mxu0 0.0
  %3692 = vmatprep.subr.mxu0 0.0
  %3693 = vmatpush1.msra.mxu0 0.0
  %3694 = vmatprep.subr.mxu0 0.0
  %3695 = vmatpush1.msra.mxu0 0.0
  %3696 = vmatprep.subr.mxu0 0.0
  %3697 = vmatpush1.msra.mxu0 0.0
  %3698 = vmatprep.subr.mxu0 0.0
  %3699 = vmatpush1.msra.mxu0 0.0
  %3700 = vmatprep.subr.mxu0 0.0
  %3701 = vmatpush1.msra.mxu0 0.0
  %3702 = vmatprep.subr.mxu0 0.0
  %3703 = vmatpush1.msra.mxu0 0.0
  %3704 = vmatprep.subr.mxu0 0.0
  %3705 = vmatpush1.msra.mxu0 0.0
  %3706 = vmatprep.subr.mxu0 0.0
  %3707 = vmatpush1.msra.mxu0 %v85
  %3708 = vmatprep.subr.mxu0 0.0
  %3709 = vmatpush1.msra.mxu0 %v84
  %3710 = vmatprep.subr.mxu0 0.0
  %3711 = vmatpush1.msra.mxu0 %v83
  %3712 = vmatprep.subr.mxu0 0.0
  %3713 = vmatpush1.msra.mxu0 %v82
  %3714 = vmatprep.subr.mxu0 0.0
  %3715 = vmatpush2.msra.mxu0 0.0
  %3716 = vmatprep.subr.mxu0 0.0
  %3717 = vmatpush2.msra.mxu0 0.0
  %3718 = vmatprep.subr.mxu0 0.0
  %3719 = vmatpush2.msra.mxu0 0.0
  %3720 = vmatprep.subr.mxu0 0.0
  %3721 = vmatpush2.msra.mxu0 0.0
  %3722 = vmatprep.subr.mxu0 0.0
  %3723 = vmatpush2.msra.mxu0 0.0
  %3724 = vmatprep.subr.mxu0 0.0
  %3725 = vmatpush2.msra.mxu0 0.0
  %3726 = vmatprep.subr.mxu0 0.0
  %3727 = vmatpush2.msra.mxu0 0.0
  %3728 = vmatprep.subr.mxu0 0.0
  %3729 = vmatpush2.msra.mxu0 0.0
  %3730 = vmatprep.subr.mxu0 0.0
  %3731 = vmatpush2.msra.mxu0 0.0
  %3732 = vmatprep.subr.mxu0 0.0
  %3733 = vmatpush2.msra.mxu0 0.0
  %3734 = vmatprep.subr.mxu0 0.0
  %3735 = vmatpush2.msra.mxu0 0.0
  %3736 = vmatprep.subr.mxu0 0.0
  %3737 = vmatpush2.msra.mxu0 0.0
  %3738 = vmatprep.subr.mxu0 0.0
  %3739 = vmatpush2.msra.mxu0 0.0
  %3740 = vmatprep.subr.mxu0 0.0
  %3741 = vmatpush2.msra.mxu0 0.0
  %3742 = vmatprep.subr.mxu0 0.0
  %3743 = vmatpush2.msra.mxu0 0.0
  %3744 = vmatprep.subr.mxu0 0.0
  %3745 = vmatpush2.msra.mxu0 0.0
  %3746 = vmatprep.mubr.f32.mxu0 0.0
  %3747 = vmatmul.mubr.f32.gmra.mxu0 %v3680
  %v3748 = vpop.f32.mrf.mxu0
  %v3749 = vadd.f32 0.0, %v3748
  %v3750 = vpop.f32.mrf.mxu0
  %3751 = vdwg.mxu0
  %v3752 = vadd.f32 %v3679, %v3749
  %v3753 = vmul.f32 %v3752, %v91
  %v3754 = vtanh.pop %v3753
  %v3755 = vmul.f32 %v3754, 0.5
  %v3756 = vadd.f32 %v3755, 0.5
  %v3757 = vmul.f32 %v3756, %v3666
  %3759 = vrot.lane.b32.xlu0 %v3754, 64
  %v3760 = vpop.permute.xlu0 %3759
  %v3762 = vmul.f32 %v3756, %v3760
  %3764 = vrot.lane.b32.xlu0 %v3762, 32
  %v3765 = vpop.permute.xlu0 %3764
  %v3767 = vadd.f32 %v3757, %v3765
  %v3768 = vtanh.pop %v3767
  %3770 = vrot.lane.b32.xlu0 %v3768, 64
  %v3771 = vpop.permute.xlu0 %3770
  %v3773 = vmul.f32 %v3756, %v3771
  %3775 = vrot.lane.b32.xlu0 %v3773, 32
  %v3776 = vpop.permute.xlu0 %3775
  %3778 = vst.msk [vmem:[#allocation3 + $0xa8] sm:$0xff] %vm120, %v3776
  %v3779 = vld [vmem:[#allocation2 + $0xa8] sm:$0xff]
  %v3780 = vadd.f32 %v3779, %v3099
  %v3781 = vsel %vm120, %v3776, 0
  %3783 = vmatprep.subr.mxu0 0.0
  %3784 = vmatpush1.msra.mxu0 0.0
  %3785 = vmatprep.subr.mxu0 0.0
  %3786 = vmatpush1.msra.mxu0 0.0
  %3787 = vmatprep.subr.mxu0 0.0
  %3788 = vmatpush1.msra.mxu0 0.0
  %3789 = vmatprep.subr.mxu0 0.0
  %3790 = vmatpush1.msra.mxu0 0.0
  %3791 = vmatprep.subr.mxu0 0.0
  %3792 = vmatpush1.msra.mxu0 0.0
  %3793 = vmatprep.subr.mxu0 0.0
  %3794 = vmatpush1.msra.mxu0 0.0
  %3795 = vmatprep.subr.mxu0 0.0
  %3796 = vmatpush1.msra.mxu0 0.0
  %3797 = vmatprep.subr.mxu0 0.0
  %3798 = vmatpush1.msra.mxu0 0.0
  %3799 = vmatprep.subr.mxu0 0.0
  %3800 = vmatpush1.msra.mxu0 0.0
  %3801 = vmatprep.subr.mxu0 0.0
  %3802 = vmatpush1.msra.mxu0 0.0
  %3803 = vmatprep.subr.mxu0 0.0
  %3804 = vmatpush1.msra.mxu0 0.0
  %3805 = vmatprep.subr.mxu0 0.0
  %3806 = vmatpush1.msra.mxu0 0.0
  %3807 = vmatprep.subr.mxu0 0.0
  %3808 = vmatpush1.msra.mxu0 %v85
  %3809 = vmatprep.subr.mxu0 0.0
  %3810 = vmatpush1.msra.mxu0 %v84
  %3811 = vmatprep.subr.mxu0 0.0
  %3812 = vmatpush1.msra.mxu0 %v83
  %3813 = vmatprep.subr.mxu0 0.0
  %3814 = vmatpush1.msra.mxu0 %v82
  %3815 = vmatprep.subr.mxu0 0.0
  %3816 = vmatpush2.msra.mxu0 0.0
  %3817 = vmatprep.subr.mxu0 0.0
  %3818 = vmatpush2.msra.mxu0 0.0
  %3819 = vmatprep.subr.mxu0 0.0
  %3820 = vmatpush2.msra.mxu0 0.0
  %3821 = vmatprep.subr.mxu0 0.0
  %3822 = vmatpush2.msra.mxu0 0.0
  %3823 = vmatprep.subr.mxu0 0.0
  %3824 = vmatpush2.msra.mxu0 0.0
  %3825 = vmatprep.subr.mxu0 0.0
  %3826 = vmatpush2.msra.mxu0 0.0
  %3827 = vmatprep.subr.mxu0 0.0
  %3828 = vmatpush2.msra.mxu0 0.0
  %3829 = vmatprep.subr.mxu0 0.0
  %3830 = vmatpush2.msra.mxu0 0.0
  %3831 = vmatprep.subr.mxu0 0.0
  %3832 = vmatpush2.msra.mxu0 0.0
  %3833 = vmatprep.subr.mxu0 0.0
  %3834 = vmatpush2.msra.mxu0 0.0
  %3835 = vmatprep.subr.mxu0 0.0
  %3836 = vmatpush2.msra.mxu0 0.0
  %3837 = vmatprep.subr.mxu0 0.0
  %3838 = vmatpush2.msra.mxu0 0.0
  %3839 = vmatprep.subr.mxu0 0.0
  %3840 = vmatpush2.msra.mxu0 0.0
  %3841 = vmatprep.subr.mxu0 0.0
  %3842 = vmatpush2.msra.mxu0 0.0
  %3843 = vmatprep.subr.mxu0 0.0
  %3844 = vmatpush2.msra.mxu0 0.0
  %3845 = vmatprep.subr.mxu0 0.0
  %3846 = vmatpush2.msra.mxu0 0.0
  %3847 = vmatprep.mubr.f32.mxu0 0.0
  %3848 = vmatmul.mubr.f32.gmra.mxu0 %v3781
  %v3849 = vpop.f32.mrf.mxu0
  %v3850 = vadd.f32 0.0, %v3849
  %v3851 = vpop.f32.mrf.mxu0
  %3852 = vdwg.mxu0
  %v3853 = vadd.f32 %v3780, %v3850
  %v3854 = vmul.f32 %v3853, %v91
  %v3855 = vtanh.pop %v3854
  %v3856 = vmul.f32 %v3855, 0.5
  %v3857 = vadd.f32 %v3856, 0.5
  %v3858 = vmul.f32 %v3857, %v3767
  %3860 = vrot.lane.b32.xlu0 %v3855, 64
  %v3861 = vpop.permute.xlu0 %3860
  %v3863 = vmul.f32 %v3857, %v3861
  %3865 = vrot.lane.b32.xlu0 %v3863, 32
  %v3866 = vpop.permute.xlu0 %3865
  %v3868 = vadd.f32 %v3858, %v3866
  %v3869 = vtanh.pop %v3868
  %3871 = vrot.lane.b32.xlu0 %v3869, 64
  %v3872 = vpop.permute.xlu0 %3871
  %v3874 = vmul.f32 %v3857, %v3872
  %3876 = vrot.lane.b32.xlu0 %v3874, 32
  %v3877 = vpop.permute.xlu0 %3876
  %3879 = vst.msk [vmem:[#allocation3 + $0xb0] sm:$0xff] %vm120, %v3877
  %v3880 = vld [vmem:[#allocation2 + $0xb0] sm:$0xff]
  %v3881 = vadd.f32 %v3880, %v3099
  %v3882 = vsel %vm120, %v3877, 0
  %3884 = vmatprep.subr.mxu0 0.0
  %3885 = vmatpush1.msra.mxu0 0.0
  %3886 = vmatprep.subr.mxu0 0.0
  %3887 = vmatpush1.msra.mxu0 0.0
  %3888 = vmatprep.subr.mxu0 0.0
  %3889 = vmatpush1.msra.mxu0 0.0
  %3890 = vmatprep.subr.mxu0 0.0
  %3891 = vmatpush1.msra.mxu0 0.0
  %3892 = vmatprep.subr.mxu0 0.0
  %3893 = vmatpush1.msra.mxu0 0.0
  %3894 = vmatprep.subr.mxu0 0.0
  %3895 = vmatpush1.msra.mxu0 0.0
  %3896 = vmatprep.subr.mxu0 0.0
  %3897 = vmatpush1.msra.mxu0 0.0
  %3898 = vmatprep.subr.mxu0 0.0
  %3899 = vmatpush1.msra.mxu0 0.0
  %3900 = vmatprep.subr.mxu0 0.0
  %3901 = vmatpush1.msra.mxu0 0.0
  %3902 = vmatprep.subr.mxu0 0.0
  %3903 = vmatpush1.msra.mxu0 0.0
  %3904 = vmatprep.subr.mxu0 0.0
  %3905 = vmatpush1.msra.mxu0 0.0
  %3906 = vmatprep.subr.mxu0 0.0
  %3907 = vmatpush1.msra.mxu0 0.0
  %3908 = vmatprep.subr.mxu0 0.0
  %3909 = vmatpush1.msra.mxu0 %v85
  %3910 = vmatprep.subr.mxu0 0.0
  %3911 = vmatpush1.msra.mxu0 %v84
  %3912 = vmatprep.subr.mxu0 0.0
  %3913 = vmatpush1.msra.mxu0 %v83
  %3914 = vmatprep.subr.mxu0 0.0
  %3915 = vmatpush1.msra.mxu0 %v82
  %3916 = vmatprep.subr.mxu0 0.0
  %3917 = vmatpush2.msra.mxu0 0.0
  %3918 = vmatprep.subr.mxu0 0.0
  %3919 = vmatpush2.msra.mxu0 0.0
  %3920 = vmatprep.subr.mxu0 0.0
  %3921 = vmatpush2.msra.mxu0 0.0
  %3922 = vmatprep.subr.mxu0 0.0
  %3923 = vmatpush2.msra.mxu0 0.0
  %3924 = vmatprep.subr.mxu0 0.0
  %3925 = vmatpush2.msra.mxu0 0.0
  %3926 = vmatprep.subr.mxu0 0.0
  %3927 = vmatpush2.msra.mxu0 0.0
  %3928 = vmatprep.subr.mxu0 0.0
  %3929 = vmatpush2.msra.mxu0 0.0
  %3930 = vmatprep.subr.mxu0 0.0
  %3931 = vmatpush2.msra.mxu0 0.0
  %3932 = vmatprep.subr.mxu0 0.0
  %3933 = vmatpush2.msra.mxu0 0.0
  %3934 = vmatprep.subr.mxu0 0.0
  %3935 = vmatpush2.msra.mxu0 0.0
  %3936 = vmatprep.subr.mxu0 0.0
  %3937 = vmatpush2.msra.mxu0 0.0
  %3938 = vmatprep.subr.mxu0 0.0
  %3939 = vmatpush2.msra.mxu0 0.0
  %3940 = vmatprep.subr.mxu0 0.0
  %3941 = vmatpush2.msra.mxu0 0.0
  %3942 = vmatprep.subr.mxu0 0.0
  %3943 = vmatpush2.msra.mxu0 0.0
  %3944 = vmatprep.subr.mxu0 0.0
  %3945 = vmatpush2.msra.mxu0 0.0
  %3946 = vmatprep.subr.mxu0 0.0
  %3947 = vmatpush2.msra.mxu0 0.0
  %3948 = vmatprep.mubr.f32.mxu0 0.0
  %3949 = vmatmul.mubr.f32.gmra.mxu0 %v3882
  %v3950 = vpop.f32.mrf.mxu0
  %v3951 = vadd.f32 0.0, %v3950
  %v3952 = vpop.f32.mrf.mxu0
  %3953 = vdwg.mxu0
  %v3954 = vadd.f32 %v3881, %v3951
  %v3955 = vmul.f32 %v3954, %v91
  %v3956 = vtanh.pop %v3955
  %v3957 = vmul.f32 %v3956, 0.5
  %v3958 = vadd.f32 %v3957, 0.5
  %v3959 = vmul.f32 %v3958, %v3868
  %3961 = vrot.lane.b32.xlu0 %v3956, 64
  %v3962 = vpop.permute.xlu0 %3961
  %v3964 = vmul.f32 %v3958, %v3962
  %3966 = vrot.lane.b32.xlu0 %v3964, 32
  %v3967 = vpop.permute.xlu0 %3966
  %v3969 = vadd.f32 %v3959, %v3967
  %v3970 = vtanh.pop %v3969
  %3972 = vrot.lane.b32.xlu0 %v3970, 64
  %v3973 = vpop.permute.xlu0 %3972
  %v3975 = vmul.f32 %v3958, %v3973
  %3977 = vrot.lane.b32.xlu0 %v3975, 32
  %v3978 = vpop.permute.xlu0 %3977
  %3980 = vst.msk [vmem:[#allocation3 + $0xb8] sm:$0xff] %vm120, %v3978
  %v3981 = vld [vmem:[#allocation3] sm:$0xff]
  %v3982 = vld [vmem:[#allocation3 + $0x8] sm:$0xff]
  %v3983 = vld [vmem:[#allocation3 + $0x10] sm:$0xff]
  %v3984 = vld [vmem:[#allocation3 + $0x18] sm:$0xff]
  %v3985 = vld [vmem:[#allocation3 + $0x20] sm:$0xff]
  %v3986 = vld [vmem:[#allocation3 + $0x28] sm:$0xff]
  %v3987 = vld [vmem:[#allocation3 + $0x30] sm:$0xff]
  %v3988 = vld [vmem:[#allocation3 + $0x38] sm:$0xff]
  %v3989 = vld [vmem:[#allocation3 + $0x40] sm:$0xff]
  %v3990 = vld [vmem:[#allocation3 + $0x48] sm:$0xff]
  %v3991 = vld [vmem:[#allocation3 + $0x50] sm:$0xff]
  %v3992 = vld [vmem:[#allocation3 + $0x58] sm:$0xff]
  %v3993 = vld [vmem:[#allocation3 + $0x60] sm:$0xff]
  %v3994 = vld [vmem:[#allocation3 + $0x68] sm:$0xff]
  %v3995 = vld [vmem:[#allocation3 + $0x70] sm:$0xff]
  %v3996 = vld [vmem:[#allocation3 + $0x78] sm:$0xff]
  %v3997 = vld [vmem:[#allocation3 + $0x80] sm:$0xff]
  %v3998 = vld [vmem:[#allocation3 + $0x88] sm:$0xff]
  %v3999 = vld [vmem:[#allocation3 + $0x90] sm:$0xff]
  %v4000 = vld [vmem:[#allocation3 + $0x98] sm:$0xff]
  %v4001 = vld [vmem:[#allocation3 + $0xa0] sm:$0xff]
  %v4002 = vld [vmem:[#allocation3 + $0xa8] sm:$0xff]
  %v4003 = vld [vmem:[#allocation3 + $0xb0] sm:$0xff]
  %v4004 = vld [vmem:[#allocation3 + $0xb8] sm:$0xff]
  %v4005 = vld [vmem:[%s13] sm:$0xff]
  %v4006 = vld [vmem:[%s13 + $0x8] sm:$0xff]
  %v4007 = vld [vmem:[%s13 + $0x10] sm:$0xff]
  %v4008 = vld [vmem:[%s13 + $0x18] sm:$0xff]
  %v4009 = vld [vmem:[%s14] sm:$0x1]
  %v4011 = vlaneseq
  %v4012 = vshrl.u32 %v4011, 7
  %v4013 = vsub.s32 0, %v4012
  %v4014 = vrot.slane %v4009, %v4013
  %v4017 = vsel %vm120, %v3981, 0
  %v4020 = vsel %vm120, %v3982, 0
  %v4023 = vsel %vm120, %v3983, 0
  %v4026 = vsel %vm120, %v3984, 0
  %v4029 = vsel %vm120, %v3985, 0
  %v4032 = vsel %vm120, %v3986, 0
  %v4035 = vsel %vm120, %v3987, 0
  %v4038 = vsel %vm120, %v3988, 0
  %v4041 = vsel %vm120, %v3989, 0
  %v4044 = vsel %vm120, %v3990, 0
  %v4047 = vsel %vm120, %v3991, 0
  %v4050 = vsel %vm120, %v3992, 0
  %v4053 = vsel %vm120, %v3993, 0
  %v4056 = vsel %vm120, %v3994, 0
  %v4059 = vsel %vm120, %v3995, 0
  %v4062 = vsel %vm120, %v3996, 0
  %v4065 = vsel %vm120, %v3997, 0
  %v4068 = vsel %vm120, %v3998, 0
  %v4071 = vsel %vm120, %v3999, 0
  %v4074 = vsel %vm120, %v4000, 0
  %v4077 = vsel %vm120, %v4001, 0
  %v4080 = vsel %vm120, %v4002, 0
  %v4083 = vsel %vm120, %v4003, 0
  %v4086 = vsel %vm120, %v4004, 0
  %4088 = vmatprep.subr.mxu0 0.0
  %4089 = vmatpush1.msra.mxu0 0.0
  %4090 = vmatprep.subr.mxu0 0.0
  %4091 = vmatpush1.msra.mxu0 0.0
  %4092 = vmatprep.subr.mxu0 0.0
  %4093 = vmatpush1.msra.mxu0 0.0
  %4094 = vmatprep.subr.mxu0 0.0
  %4095 = vmatpush1.msra.mxu0 0.0
  %4096 = vmatprep.subr.mxu0 0.0
  %4097 = vmatpush1.msra.mxu0 0.0
  %4098 = vmatprep.subr.mxu0 0.0
  %4099 = vmatpush1.msra.mxu0 0.0
  %4100 = vmatprep.subr.mxu0 0.0
  %4101 = vmatpush1.msra.mxu0 0.0
  %4102 = vmatprep.subr.mxu0 0.0
  %4103 = vmatpush1.msra.mxu0 0.0
  %4104 = vmatprep.subr.mxu0 0.0
  %4105 = vmatpush1.msra.mxu0 0.0
  %4106 = vmatprep.subr.mxu0 0.0
  %4107 = vmatpush1.msra.mxu0 0.0
  %4108 = vmatprep.subr.mxu0 0.0
  %4109 = vmatpush1.msra.mxu0 0.0
  %4110 = vmatprep.subr.mxu0 0.0
  %4111 = vmatpush1.msra.mxu0 0.0
  %4112 = vmatprep.subr.mxu0 0.0
  %4113 = vmatpush1.msra.mxu0 %v4008
  %4114 = vmatprep.subr.mxu0 0.0
  %4115 = vmatpush1.msra.mxu0 %v4007
  %4116 = vmatprep.subr.mxu0 0.0
  %4117 = vmatpush1.msra.mxu0 %v4006
  %4118 = vmatprep.subr.mxu0 0.0
  %4119 = vmatpush1.msra.mxu0 %v4005
  %4120 = vmatprep.subr.mxu0 0.0
  %4121 = vmatpush2.msra.mxu0 0.0
  %4122 = vmatprep.subr.mxu0 0.0
  %4123 = vmatpush2.msra.mxu0 0.0
  %4124 = vmatprep.subr.mxu0 0.0
  %4125 = vmatpush2.msra.mxu0 0.0
  %4126 = vmatprep.subr.mxu0 0.0
  %4127 = vmatpush2.msra.mxu0 0.0
  %4128 = vmatprep.subr.mxu0 0.0
  %4129 = vmatpush2.msra.mxu0 0.0
  %4130 = vmatprep.subr.mxu0 0.0
  %4131 = vmatpush2.msra.mxu0 0.0
  %4132 = vmatprep.subr.mxu0 0.0
  %4133 = vmatpush2.msra.mxu0 0.0
  %4134 = vmatprep.subr.mxu0 0.0
  %4135 = vmatpush2.msra.mxu0 0.0
  %4136 = vmatprep.subr.mxu0 0.0
  %4137 = vmatpush2.msra.mxu0 0.0
  %4138 = vmatprep.subr.mxu0 0.0
  %4139 = vmatpush2.msra.mxu0 0.0
  %4140 = vmatprep.subr.mxu0 0.0
  %4141 = vmatpush2.msra.mxu0 0.0
  %4142 = vmatprep.subr.mxu0 0.0
  %4143 = vmatpush2.msra.mxu0 0.0
  %4144 = vmatprep.subr.mxu0 0.0
  %4145 = vmatpush2.msra.mxu0 0.0
  %4146 = vmatprep.subr.mxu0 0.0
  %4147 = vmatpush2.msra.mxu0 0.0
  %4148 = vmatprep.subr.mxu0 0.0
  %4149 = vmatpush2.msra.mxu0 0.0
  %4150 = vmatprep.subr.mxu0 0.0
  %4151 = vmatpush2.msra.mxu0 0.0
  %4152 = vmatprep.mubr.f32.mxu0 0.0
  %4153 = vmatmul.mubr.f32.gmra.mxu0 %v4017
  %v4154 = vpop.f32.mrf.mxu0
  %v4155 = vadd.f32 %v4014, %v4154
  %v4156 = vpop.f32.mrf.mxu0
  %4157 = vmatprep.mubr.f32.mxu0 0.0
  %4158 = vmatmul.mubr.f32.gmra.mxu0 %v4020
  %v4159 = vpop.f32.mrf.mxu0
  %v4160 = vadd.f32 %v4014, %v4159
  %v4161 = vpop.f32.mrf.mxu0
  %4162 = vmatprep.mubr.f32.mxu0 0.0
  %4163 = vmatmul.mubr.f32.gmra.mxu0 %v4023
  %v4164 = vpop.f32.mrf.mxu0
  %v4165 = vadd.f32 %v4014, %v4164
  %v4166 = vpop.f32.mrf.mxu0
  %4167 = vmatprep.mubr.f32.mxu0 0.0
  %4168 = vmatmul.mubr.f32.gmra.mxu0 %v4026
  %v4169 = vpop.f32.mrf.mxu0
  %v4170 = vadd.f32 %v4014, %v4169
  %v4171 = vpop.f32.mrf.mxu0
  %4172 = vmatprep.mubr.f32.mxu0 0.0
  %4173 = vmatmul.mubr.f32.gmra.mxu0 %v4029
  %v4174 = vpop.f32.mrf.mxu0
  %v4175 = vadd.f32 %v4014, %v4174
  %v4176 = vpop.f32.mrf.mxu0
  %4177 = vmatprep.mubr.f32.mxu0 0.0
  %4178 = vmatmul.mubr.f32.gmra.mxu0 %v4032
  %v4179 = vpop.f32.mrf.mxu0
  %v4180 = vadd.f32 %v4014, %v4179
  %v4181 = vpop.f32.mrf.mxu0
  %4182 = vmatprep.mubr.f32.mxu0 0.0
  %4183 = vmatmul.mubr.f32.gmra.mxu0 %v4035
  %v4184 = vpop.f32.mrf.mxu0
  %v4185 = vadd.f32 %v4014, %v4184
  %v4186 = vpop.f32.mrf.mxu0
  %4187 = vmatprep.mubr.f32.mxu0 0.0
  %4188 = vmatmul.mubr.f32.gmra.mxu0 %v4038
  %v4189 = vpop.f32.mrf.mxu0
  %v4190 = vadd.f32 %v4014, %v4189
  %v4191 = vpop.f32.mrf.mxu0
  %4192 = vmatprep.mubr.f32.mxu0 0.0
  %4193 = vmatmul.mubr.f32.gmra.mxu0 %v4041
  %v4194 = vpop.f32.mrf.mxu0
  %v4195 = vadd.f32 %v4014, %v4194
  %v4196 = vpop.f32.mrf.mxu0
  %4197 = vmatprep.mubr.f32.mxu0 0.0
  %4198 = vmatmul.mubr.f32.gmra.mxu0 %v4044
  %v4199 = vpop.f32.mrf.mxu0
  %v4200 = vadd.f32 %v4014, %v4199
  %v4201 = vpop.f32.mrf.mxu0
  %4202 = vmatprep.mubr.f32.mxu0 0.0
  %4203 = vmatmul.mubr.f32.gmra.mxu0 %v4047
  %v4204 = vpop.f32.mrf.mxu0
  %v4205 = vadd.f32 %v4014, %v4204
  %v4206 = vpop.f32.mrf.mxu0
  %4207 = vmatprep.mubr.f32.mxu0 0.0
  %4208 = vmatmul.mubr.f32.gmra.mxu0 %v4050
  %v4209 = vpop.f32.mrf.mxu0
  %v4210 = vadd.f32 %v4014, %v4209
  %v4211 = vpop.f32.mrf.mxu0
  %4212 = vmatprep.mubr.f32.mxu0 0.0
  %4213 = vmatmul.mubr.f32.gmra.mxu0 %v4053
  %v4214 = vpop.f32.mrf.mxu0
  %v4215 = vadd.f32 %v4014, %v4214
  %v4216 = vpop.f32.mrf.mxu0
  %4217 = vmatprep.mubr.f32.mxu0 0.0
  %4218 = vmatmul.mubr.f32.gmra.mxu0 %v4056
  %v4219 = vpop.f32.mrf.mxu0
  %v4220 = vadd.f32 %v4014, %v4219
  %v4221 = vpop.f32.mrf.mxu0
  %4222 = vmatprep.mubr.f32.mxu0 0.0
  %4223 = vmatmul.mubr.f32.gmra.mxu0 %v4059
  %v4224 = vpop.f32.mrf.mxu0
  %v4225 = vadd.f32 %v4014, %v4224
  %v4226 = vpop.f32.mrf.mxu0
  %4227 = vmatprep.mubr.f32.mxu0 0.0
  %4228 = vmatmul.mubr.f32.gmra.mxu0 %v4062
  %v4229 = vpop.f32.mrf.mxu0
  %v4230 = vadd.f32 %v4014, %v4229
  %v4231 = vpop.f32.mrf.mxu0
  %4232 = vmatprep.mubr.f32.mxu0 0.0
  %4233 = vmatmul.mubr.f32.gmra.mxu0 %v4065
  %v4234 = vpop.f32.mrf.mxu0
  %v4235 = vadd.f32 %v4014, %v4234
  %v4236 = vpop.f32.mrf.mxu0
  %4237 = vmatprep.mubr.f32.mxu0 0.0
  %4238 = vmatmul.mubr.f32.gmra.mxu0 %v4068
  %v4239 = vpop.f32.mrf.mxu0
  %v4240 = vadd.f32 %v4014, %v4239
  %v4241 = vpop.f32.mrf.mxu0
  %4242 = vmatprep.mubr.f32.mxu0 0.0
  %4243 = vmatmul.mubr.f32.gmra.mxu0 %v4071
  %v4244 = vpop.f32.mrf.mxu0
  %v4245 = vadd.f32 %v4014, %v4244
  %v4246 = vpop.f32.mrf.mxu0
  %4247 = vmatprep.mubr.f32.mxu0 0.0
  %4248 = vmatmul.mubr.f32.gmra.mxu0 %v4074
  %v4249 = vpop.f32.mrf.mxu0
  %v4250 = vadd.f32 %v4014, %v4249
  %v4251 = vpop.f32.mrf.mxu0
  %4252 = vmatprep.mubr.f32.mxu0 0.0
  %4253 = vmatmul.mubr.f32.gmra.mxu0 %v4077
  %v4254 = vpop.f32.mrf.mxu0
  %v4255 = vadd.f32 %v4014, %v4254
  %v4256 = vpop.f32.mrf.mxu0
  %4257 = vmatprep.mubr.f32.mxu0 0.0
  %4258 = vmatmul.mubr.f32.gmra.mxu0 %v4080
  %v4259 = vpop.f32.mrf.mxu0
  %v4260 = vadd.f32 %v4014, %v4259
  %v4261 = vpop.f32.mrf.mxu0
  %4262 = vmatprep.mubr.f32.mxu0 0.0
  %4263 = vmatmul.mubr.f32.gmra.mxu0 %v4083
  %v4264 = vpop.f32.mrf.mxu0
  %v4265 = vadd.f32 %v4014, %v4264
  %v4266 = vpop.f32.mrf.mxu0
  %4267 = vmatprep.mubr.f32.mxu0 0.0
  %4268 = vmatmul.mubr.f32.gmra.mxu0 %v4086
  %v4269 = vpop.f32.mrf.mxu0
  %v4270 = vadd.f32 %v4014, %v4269
  %v4271 = vpop.f32.mrf.mxu0
  %4272 = vdwg.mxu0
  %4273 = vst.msk [vmem:[%s15] sm:$0xff] %vm120, %v4155
  %4274 = vst.msk [vmem:[%s15 + $0x8] sm:$0xff] %vm120, %v4160
  %4275 = vst.msk [vmem:[%s15 + $0x10] sm:$0xff] %vm120, %v4165
  %4276 = vst.msk [vmem:[%s15 + $0x18] sm:$0xff] %vm120, %v4170
  %4277 = vst.msk [vmem:[%s15 + $0x20] sm:$0xff] %vm120, %v4175
  %4278 = vst.msk [vmem:[%s15 + $0x28] sm:$0xff] %vm120, %v4180
  %4279 = vst.msk [vmem:[%s15 + $0x30] sm:$0xff] %vm120, %v4185
  %4280 = vst.msk [vmem:[%s15 + $0x38] sm:$0xff] %vm120, %v4190
  %4281 = vst.msk [vmem:[%s15 + $0x40] sm:$0xff] %vm120, %v4195
  %4282 = vst.msk [vmem:[%s15 + $0x48] sm:$0xff] %vm120, %v4200
  %4283 = vst.msk [vmem:[%s15 + $0x50] sm:$0xff] %vm120, %v4205
  %4284 = vst.msk [vmem:[%s15 + $0x58] sm:$0xff] %vm120, %v4210
  %4285 = vst.msk [vmem:[%s15 + $0x60] sm:$0xff] %vm120, %v4215
  %4286 = vst.msk [vmem:[%s15 + $0x68] sm:$0xff] %vm120, %v4220
  %4287 = vst.msk [vmem:[%s15 + $0x70] sm:$0xff] %vm120, %v4225
  %4288 = vst.msk [vmem:[%s15 + $0x78] sm:$0xff] %vm120, %v4230
  %4289 = vst.msk [vmem:[%s15 + $0x80] sm:$0xff] %vm120, %v4235
  %4290 = vst.msk [vmem:[%s15 + $0x88] sm:$0xff] %vm120, %v4240
  %4291 = vst.msk [vmem:[%s15 + $0x90] sm:$0xff] %vm120, %v4245
  %4292 = vst.msk [vmem:[%s15 + $0x98] sm:$0xff] %vm120, %v4250
  %4293 = vst.msk [vmem:[%s15 + $0xa0] sm:$0xff] %vm120, %v4255
  %4294 = vst.msk [vmem:[%s15 + $0xa8] sm:$0xff] %vm120, %v4260
  %4295 = vst.msk [vmem:[%s15 + $0xb0] sm:$0xff] %vm120, %v4265
  %4296 = vst.msk [vmem:[%s15 + $0xb8] sm:$0xff] %vm120, %v4270
  // Predicated region
  $region62: #{tpu_custom_call.1} parent=0 // pred_check
    _
  $region63: #{tpu_custom_call.1} parent=0 // pred_check_branch
    %4298 = sbr.rel (0) target = $region65
  $region64: #{tpu_custom_call.1} parent=0 // pred_region
    _
  $region65: #{tpu_custom_call.1} parent=0 // pred_fallthru
    _
  // Predicated region
  $region66: #{tpu_custom_call.1} parent=0 // pred_check
    _
  $region67: #{tpu_custom_call.1} parent=0 // pred_check_branch
    %4300 = sbr.rel (0) target = $region69
  $region68: #{tpu_custom_call.1} parent=0 // pred_region
    _
  $region69: #{tpu_custom_call.1} parent=0 // pred_fallthru
    _

</llo_original>
